<compile_context>
chip_gen: v6e
topology: v6e:2x2x1
jax: 0.10.0
libtpu: 0.0.40
codegen_flags: <defaults>
</compile_context>

<pallas_src>
import functools

import jax
import jax.numpy as jnp
from jax.experimental import pallas as pl
from jax.experimental.pallas import tpu as pltpu

BN_EPS = 1e-5
_LANE = 128


# ----------------------------- kernels ---------------------------------------


def _prep_kernel(x_ref, wT_ref, dis_ref, cvec_ref, hs_ref, msum_ref):
    # H = X @ W^T (MXU, f32 acc); fold the column-side D^-1/2 of A_hat into Hs.
    h = jnp.dot(x_ref[...], wT_ref[...], preferred_element_type=jnp.float32)
    hs = dis_ref[...] * h                                   # (tm, cpad) f32
    hs_bf = hs.astype(jnp.bfloat16)
    hs_ref[...] = hs_bf
    # Partial contribution to the analytic column mean of agg:
    #   mean_c = (1/N) * sum_j cvec_j * Hs[j, c]
    # VPU multiply + sublane reduce (no M=1 MXU matmul).
    part = jnp.sum(cvec_ref[...] * hs_bf.astype(jnp.float32),
                   axis=0, keepdims=True)                   # (1, cpad)
    msum_ref[...] = part[None]


def _agg_kernel(adj_ref, hs_ref, dis_ref, mean_ref, agg_ref, ssq_ref, acc_ref,
                *, tm, true_n, need_mask):
    # K-tiled row stripe of the propagation: acc += adj(tm,tk) @ Hs(tk,cpad).
    k = pl.program_id(1)

    @pl.when(k == 0)
    def _():
        acc_ref[...] = jnp.zeros_like(acc_ref)

    a_bf = adj_ref[...].astype(jnp.bfloat16)                # int8 -> bf16 (VPU filler)
    acc_ref[...] += jnp.dot(a_bf, hs_ref[...], preferred_element_type=jnp.float32)

    @pl.when(k == pl.num_programs(1) - 1)
    def _():
        agg = dis_ref[...] * acc_ref[...]                   # (tm, cpad) f32
        agg_ref[...] = agg.astype(agg_ref.dtype)            # bf16 writeback
        d = agg - mean_ref[...]
        if need_mask:  # exclude zero-padded rows from the batch statistics
            row = (pl.program_id(0) * tm
                   + jax.lax.broadcasted_iota(jnp.int32, (tm, 1), 0))
            d = jnp.where(row < true_n, d, 0.0)
        ssq_ref[...] = jnp.sum(d * d, axis=0, keepdims=True)[None]


def _bn_relu_kernel(agg_ref, scale_ref, shift_ref, out_ref, *, cout):
    # y = relu((agg - mean) * inv_std * gamma + beta), gamma/mean folded into scale/shift.
    y = agg_ref[...].astype(jnp.float32) * scale_ref[...] + shift_ref[...]
    y = jnp.maximum(y, 0.0)
    out_ref[...] = y[:, :cout].astype(out_ref.dtype)        # narrow channels in-kernel


# ----------------------------- helpers ----------------------------------------


def _round_up(v, m):
    return ((v + m - 1) // m) * m


def _largest_tile(npad, cap):
    """Largest multiple-of-128 divisor of npad that is <= cap."""
    t = min(cap, npad)
    t = (t // _LANE) * _LANE
    while npad % t:
        t -= _LANE
    return t


def _vmem_limit_bytes():
    # Per-generation scoped-VMEM budget (v5e/v6e: 128 MiB, v7x: 64 MiB physical).
    # Kernels here need only a few MiB, so this is headroom, not a requirement.
    try:
        cap = pltpu.get_tpu_info().vmem_capacity_bytes
        return int(min(cap // 2, 64 << 20))
    except Exception:  # conservative fallback, safe on every generation
        return 32 << 20


# ----------------------------- wrapper ----------------------------------------


@functools.partial(jax.jit, static_argnames=("num_nodes",))
def gcn_layer_forward(x, edge_index, weight, bias, gamma, beta, *, num_nodes):
    """x: [N, Cin] f32, edge_index: [2, E] i32, weight: [Cout, Cin] f32."""
    del bias  # cancelled exactly by train-mode BN mean subtraction (dead work)
    n = num_nodes
    cin = x.shape[1]
    cout = weight.shape[0]
    cpad = _round_up(cout, _LANE)            # lane-dense channel pad for passes 1/2

    npad = _round_up(n, _LANE)               # pad nodes; stats use true n
    tm = _largest_tile(npad, 512)            # row tile (keeps megacore row sharding)
    tk = _largest_tile(npad, 2048)           # contraction tile (long DMA bursts)
    nt = npad // tm
    nk = npad // tk

    src = edge_index[0]
    dst = edge_index[1]

    # --- glue: O(E)/O(N) vectors + single dense int8 adjacency (A + I), no f32 temp ---
    diag = jnp.arange(n, dtype=edge_index.dtype)
    adj_i8 = (jnp.zeros((npad, npad), jnp.int8)
              .at[dst, src].add(jnp.ones(src.shape, jnp.int8))
              .at[diag, diag].add(jnp.ones((n,), jnp.int8)))   # duplicate edges sum
    deg = 1.0 + jnp.zeros((n,), jnp.float32).at[dst].add(1.0)  # >= 1 (self loop)
    d_inv_sqrt = jax.lax.rsqrt(deg)
    # Column sums of A_hat (for the analytic BN mean), O(E):
    #   cvec_j = d_j^-1/2 + sum_{e: src_e = j} d_{dst_e}^-1/2
    cvec = d_inv_sqrt + jnp.zeros((n,), jnp.float32).at[src].add(d_inv_sqrt[dst])

    dis_p = jnp.ones((npad,), jnp.float32).at[:n].set(d_inv_sqrt).reshape(npad, 1)
    cvec_p = jnp.zeros((npad,), jnp.float32).at[:n].set(cvec).reshape(npad, 1)
    x_p = jnp.zeros((npad, cin), x.dtype).at[:n, :].set(x)
    wT_p = jnp.zeros((cin, cpad), jnp.float32).at[:, :cout].set(weight.T)
    g_pad = jnp.zeros((1, cpad), jnp.float32).at[0, :cout].set(gamma)
    b_pad = jnp.zeros((1, cpad), jnp.float32).at[0, :cout].set(beta)

    vlim = _vmem_limit_bytes()
    cp_row = pltpu.CompilerParams(dimension_semantics=("parallel",),
                                  vmem_limit_bytes=vlim)
    cp_agg = pltpu.CompilerParams(dimension_semantics=("parallel", "arbitrary"),
                                  vmem_limit_bytes=vlim)

    # ---- pass 1: Hs = D^-1/2 (X @ W^T) in bf16, + partial analytic-mean sums ----
    hs, msum = pl.pallas_call(
        _prep_kernel,
        out_shape=(jax.ShapeDtypeStruct((npad, cpad), jnp.bfloat16),
                   jax.ShapeDtypeStruct((nt, 1, cpad), jnp.float32)),
        grid=(nt,),
        in_specs=[
            pl.BlockSpec((tm, cin), lambda i: (i, 0)),      # X row tile
            pl.BlockSpec((cin, cpad), lambda i: (0, 0)),    # W^T (tiny, resident)
            pl.BlockSpec((tm, 1), lambda i: (i, 0)),        # D^-1/2 rows
            pl.BlockSpec((tm, 1), lambda i: (i, 0)),        # cvec chunk
        ],
        out_specs=(pl.BlockSpec((tm, cpad), lambda i: (i, 0)),
                   pl.BlockSpec((1, 1, cpad), lambda i: (i, 0, 0))),
        compiler_params=cp_row,
    )(x_p, wT_p, dis_p, cvec_p)
    mean = jnp.sum(msum, axis=0) / n                         # (1, cpad), true-N norm

    # ---- pass 2: K-tiled aggregation (int8 adj stream) + centered ssq partials ----
    agg, ssq = pl.pallas_call(
        functools.partial(_agg_kernel, tm=tm, true_n=n, need_mask=(npad != n)),
        out_shape=(jax.ShapeDtypeStruct((npad, cpad), jnp.bfloat16),
                   jax.ShapeDtypeStruct((nt, 1, cpad), jnp.float32)),
        grid=(nt, nk),
        in_specs=[
            pl.BlockSpec((tm, tk), lambda i, k: (i, k)),    # int8 adjacency block
            pl.BlockSpec((tk, cpad), lambda i, k: (k, 0)),  # bf16 Hs block
            pl.BlockSpec((tm, 1), lambda i, k: (i, 0)),     # D^-1/2 rows
            pl.BlockSpec((1, cpad), lambda i, k: (0, 0)),   # analytic mean
        ],
        out_specs=(pl.BlockSpec((tm, cpad), lambda i, k: (i, 0)),
                   pl.BlockSpec((1, 1, cpad), lambda i, k: (i, 0, 0))),
        scratch_shapes=[pltpu.VMEM((tm, cpad), jnp.float32)],   # f32 accumulator
        compiler_params=cp_agg,
    )(adj_i8, hs, dis_p, mean)

    var = jnp.sum(ssq, axis=0) / n                           # biased batch variance
    inv_std = jax.lax.rsqrt(var + BN_EPS)
    scale = g_pad * inv_std                                  # gamma folded once
    shift = b_pad - mean * scale

    # ---- pass 3: normalize + ReLU, writes (N, Cout) directly (no trailing slice) ----
    y = pl.pallas_call(
        functools.partial(_bn_relu_kernel, cout=cout),
        out_shape=jax.ShapeDtypeStruct((npad, cout), jnp.float32),
        grid=(nt,),
        in_specs=[
            pl.BlockSpec((tm, cpad), lambda i: (i, 0)),     # bf16 agg tile
            pl.BlockSpec((1, cpad), lambda i: (0, 0)),
            pl.BlockSpec((1, cpad), lambda i: (0, 0)),
        ],
        out_specs=pl.BlockSpec((tm, cout), lambda i: (i, 0)),
        compiler_params=cp_row,
    )(agg, scale, shift)

    return y if npad == n else y[:n]


# ----------------------------- demo / self-check -------------------------------

if __name__ == "__main__":
    N, CIN, COUT, E = 1024, 32, 64, 4096

    key = jax.random.PRNGKey(0)
    k_x, k_e, k_w = jax.random.split(key, 3)

    x = jax.random.normal(k_x, (N, CIN), dtype=jnp.float32)
    edge_index = jax.random.randint(k_e, (2, E), 0, N, dtype=jnp.int32)

    limit = (6.0 / (CIN + COUT)) ** 0.5
    weight = jax.random.uniform(k_w, (COUT, CIN), jnp.float32, -limit, limit)
    bias = jnp.zeros((COUT,), jnp.float32)
    gamma = jnp.ones((COUT,), jnp.float32)
    beta = jnp.zeros((COUT,), jnp.float32)

    out = gcn_layer_forward(x, edge_index, weight, bias, gamma, beta, num_nodes=N)
    out = jax.block_until_ready(out)

    # Pure-JAX f32 reference (PyG GCNConv defaults + train-mode BN + ReLU).
    hp = jax.lax.Precision.HIGHEST
    adj_f = (jnp.zeros((N, N), jnp.float32)
             .at[edge_index[1], edge_index[0]].add(1.0)) + jnp.eye(N, dtype=jnp.float32)
    dis = jax.lax.rsqrt(adj_f.sum(axis=1))
    a_hat = dis[:, None] * adj_f * dis[None, :]
    agg_ref = jnp.dot(a_hat, jnp.dot(x, weight.T, precision=hp), precision=hp) + bias
    mu = jnp.mean(agg_ref, axis=0, keepdims=True)
    va = jnp.mean((agg_ref - mu) ** 2, axis=0, keepdims=True)
    ref = jnp.maximum((agg_ref - mu) * jax.lax.rsqrt(va + BN_EPS) * gamma + beta, 0.0)

    assert out.shape == (N, COUT) and out.dtype == jnp.float32
    assert bool(jnp.all(out >= 0.0))                      # ReLU post-condition
    max_err = float(jnp.max(jnp.abs(out - ref)))
    assert max_err < 0.1, f"max abs err vs f32 reference too large: {max_err}"
    print("KERNEL_OK")
</pallas_src>

<mosaic_0001>
module attributes {stable_mosaic.version = 11 : i64} {
  func.func private @main(%arg0: i32) attributes {dimension_semantics = [#tpu.dimension_semantics<core_parallel>], iteration_bounds = array<i64: 2>, tpu.core_type = #tpu.core_type<sc_scalar_subcore>, window_params = []} {
    return
  }
}

module attributes {stable_mosaic.version = 11 : i64} {
  func.func private @main(%arg0: i32) attributes {dimension_semantics = [#tpu.dimension_semantics<core_parallel>], iteration_bounds = array<i64: 2>, tpu.core_type = #tpu.core_type<sc_scalar_subcore>, window_params = []} {
    return
  }
}

module attributes {stable_mosaic.version = 11 : i64} {
  func.func @_prep_kernel(%arg0: i32, %arg1: memref<512x32xf32, #tpu.memory_space<vmem>>, %arg2: memref<32x128xf32, #tpu.memory_space<vmem>>, %arg3: memref<512x1xf32, #tpu.memory_space<vmem>>, %arg4: memref<512x1xf32, #tpu.memory_space<vmem>>, %arg5: memref<512x128xbf16, #tpu.memory_space<vmem>>, %arg6: memref<1x1x128xf32, #tpu.memory_space<vmem>>) attributes {dimension_semantics = [#tpu.dimension_semantics<parallel>], iteration_bounds = array<i64: 2>, scalar_prefetch = 0 : i64, scratch_operands = 0 : i64, tpu.core_type = #tpu.core_type<tc>, window_params = [{transform_indices = @transform_0, window_bounds = array<i64: 512, 32>}, {pipeline_mode = #tpu.pipeline_mode<synchronous>, transform_indices = @transform_1, window_bounds = array<i64: 32, 128>}, {transform_indices = @transform_2, window_bounds = array<i64: 512, 1>}, {transform_indices = @transform_3, window_bounds = array<i64: 512, 1>}, {transform_indices = @transform_4, window_bounds = array<i64: 512, 128>}, {transform_indices = @transform_5, window_bounds = array<i64: 1, 1, 128>}]} {
    %c0 = arith.constant 0 : index
    %c0_0 = arith.constant 0 : index
    %0 = vector.load %arg1[%c0, %c0_0] : memref<512x32xf32, #tpu.memory_space<vmem>>, vector<512x32xf32>
    %c0_1 = arith.constant 0 : index
    %c0_2 = arith.constant 0 : index
    %1 = vector.load %arg2[%c0_1, %c0_2] : memref<32x128xf32, #tpu.memory_space<vmem>>, vector<32x128xf32>
    %cst = arith.constant dense<0.000000e+00> : vector<512x128xf32>
    %2 = tpu.matmul %0, %1, %cst {dimension_numbers = #tpu.dot_dimension_numbers<[1], [0], [0], [1], [0, 0, 1, 1], [], []>} : vector<512x32xf32>, vector<32x128xf32>, vector<512x128xf32> -> vector<512x128xf32>
    %c0_3 = arith.constant 0 : index
    %c0_4 = arith.constant 0 : index
    %3 = vector.load %arg3[%c0_3, %c0_4] : memref<512x1xf32, #tpu.memory_space<vmem>>, vector<512x1xf32>
    %4 = vector.broadcast %3 : vector<512x1xf32> to vector<512x128xf32>
    %5 = arith.mulf %4, %2 : vector<512x128xf32>
    %6 = arith.truncf %5 : vector<512x128xf32> to vector<512x128xbf16>
    %c0_5 = arith.constant 0 : index
    %c0_6 = arith.constant 0 : index
    %7 = vector.load %arg5[%c0_5, %c0_6] : memref<512x128xbf16, #tpu.memory_space<vmem>>, vector<512x128xbf16>
    tpu.vector_store %arg5[%c0_5, %c0_6], %6 {strides = array<i32>} : memref<512x128xbf16, #tpu.memory_space<vmem>>, vector<512x128xbf16>,
    %c0_7 = arith.constant 0 : index
    %c0_8 = arith.constant 0 : index
    %8 = vector.load %arg4[%c0_7, %c0_8] : memref<512x1xf32, #tpu.memory_space<vmem>>, vector<512x1xf32>
    %9 = arith.extf %6 : vector<512x128xbf16> to vector<512x128xf32>
    %10 = vector.broadcast %8 : vector<512x1xf32> to vector<512x128xf32>
    %11 = arith.mulf %10, %9 : vector<512x128xf32>
    %cst_9 = arith.constant dense<0.000000e+00> : vector<128xf32>
    %12 = vector.multi_reduction <add>, %11, %cst_9 [0] : vector<512x128xf32> to vector<128xf32>
    %13 = vector.shape_cast %12 : vector<128xf32> to vector<1x128xf32>
    %14 = vector.shape_cast %13 : vector<1x128xf32> to vector<1x1x128xf32>
    %c0_10 = arith.constant 0 : index
    %c0_11 = arith.constant 0 : index
    %c0_12 = arith.constant 0 : index
    %15 = vector.load %arg6[%c0_10, %c0_11, %c0_12] : memref<1x1x128xf32, #tpu.memory_space<vmem>>, vector<1x1x128xf32>
    tpu.vector_store %arg6[%c0_10, %c0_11, %c0_12], %14 {strides = array<i32>} : memref<1x1x128xf32, #tpu.memory_space<vmem>>, vector<1x1x128xf32>,
    return
  }
  func.func @transform_0(%arg0: i32) -> (i32, i32) {
    %c0_i32 = arith.constant 0 : i32
    %c0_i32_0 = arith.constant 0 : i32
    return %arg0, %c0_i32 : i32, i32
  }
  func.func @transform_1(%arg0: i32) -> (i32, i32) {
    %c0_i32 = arith.constant 0 : i32
    %c0_i32_0 = arith.constant 0 : i32
    %c0_i32_1 = arith.constant 0 : i32
    return %c0_i32, %c0_i32_0 : i32, i32
  }
  func.func @transform_2(%arg0: i32) -> (i32, i32) {
    %c0_i32 = arith.constant 0 : i32
    %c0_i32_0 = arith.constant 0 : i32
    return %arg0, %c0_i32 : i32, i32
  }
  func.func @transform_3(%arg0: i32) -> (i32, i32) {
    %c0_i32 = arith.constant 0 : i32
    %c0_i32_0 = arith.constant 0 : i32
    return %arg0, %c0_i32 : i32, i32
  }
  func.func @transform_4(%arg0: i32) -> (i32, i32) {
    %c0_i32 = arith.constant 0 : i32
    %c0_i32_0 = arith.constant 0 : i32
    return %arg0, %c0_i32 : i32, i32
  }
  func.func @transform_5(%arg0: i32) -> (i32, i32, i32) {
    %c0_i32 = arith.constant 0 : i32
    %c0_i32_0 = arith.constant 0 : i32
    %c0_i32_1 = arith.constant 0 : i32
    return %arg0, %c0_i32, %c0_i32_0 : i32, i32, i32
  }
}

module attributes {stable_mosaic.version = 11 : i64} {
  func.func @_agg_kernel(%arg0: i32, %arg1: i32, %arg2: memref<512x1024xi8, #tpu.memory_space<vmem>>, %arg3: memref<1024x128xbf16, #tpu.memory_space<vmem>>, %arg4: memref<512x1xf32, #tpu.memory_space<vmem>>, %arg5: memref<1x128xf32, #tpu.memory_space<vmem>>, %arg6: memref<512x128xbf16, #tpu.memory_space<vmem>>, %arg7: memref<1x1x128xf32, #tpu.memory_space<vmem>>, %arg8: memref<512x128xf32, #tpu.memory_space<vmem>>) attributes {dimension_semantics = [#tpu.dimension_semantics<parallel>, #tpu.dimension_semantics<arbitrary>], iteration_bounds = array<i64: 2, 1>, scalar_prefetch = 0 : i64, scratch_operands = 1 : i64, tpu.core_type = #tpu.core_type<tc>, window_params = [{transform_indices = @transform_0, window_bounds = array<i64: 512, 1024>}, {transform_indices = @transform_1, window_bounds = array<i64: 1024, 128>}, {transform_indices = @transform_2, window_bounds = array<i64: 512, 1>}, {pipeline_mode = #tpu.pipeline_mode<synchronous>, transform_indices = @transform_3, window_bounds = array<i64: 1, 128>}, {transform_indices = @transform_4, window_bounds = array<i64: 512, 128>}, {transform_indices = @transform_5, window_bounds = array<i64: 1, 1, 128>}]} {
    %c0_i32 = arith.constant 0 : i32
    %0 = arith.cmpi eq, %arg1, %c0_i32 : i32
    %1 = arith.extui %0 : i1 to i32
    %c0_i32_0 = arith.constant 0 : i32
    %2 = arith.cmpi ne, %1, %c0_i32_0 : i32
    scf.if %2 {
      %cst_10 = arith.constant 0.000000e+00 : f32
      %13 = vector.broadcast %cst_10 : f32 to vector<512x128xf32>
      %c0_11 = arith.constant 0 : index
      %c0_12 = arith.constant 0 : index
      %14 = vector.load %arg8[%c0_11, %c0_12] : memref<512x128xf32, #tpu.memory_space<vmem>>, vector<512x128xf32>
      tpu.vector_store %arg8[%c0_11, %c0_12], %13 {strides = array<i32>} : memref<512x128xf32, #tpu.memory_space<vmem>>, vector<512x128xf32>,
    } else {
    }
    %c0 = arith.constant 0 : index
    %c0_1 = arith.constant 0 : index
    %3 = vector.load %arg2[%c0, %c0_1] : memref<512x1024xi8, #tpu.memory_space<vmem>>, vector<512x1024xi8>
    %4 = arith.sitofp %3 : vector<512x1024xi8> to vector<512x1024xbf16>
    %c0_2 = arith.constant 0 : index
    %c0_3 = arith.constant 0 : index
    %5 = vector.load %arg8[%c0_2, %c0_3] : memref<512x128xf32, #tpu.memory_space<vmem>>, vector<512x128xf32>
    %c0_4 = arith.constant 0 : index
    %c0_5 = arith.constant 0 : index
    %6 = vector.load %arg3[%c0_4, %c0_5] : memref<1024x128xbf16, #tpu.memory_space<vmem>>, vector<1024x128xbf16>
    %cst = arith.constant dense<0.000000e+00> : vector<512x128xf32>
    %7 = tpu.matmul %4, %6, %cst {dimension_numbers = #tpu.dot_dimension_numbers<[1], [0], [0], [1], [0, 0, 1, 1], [], []>} : vector<512x1024xbf16>, vector<1024x128xbf16>, vector<512x128xf32> -> vector<512x128xf32>
    %8 = arith.addf %5, %7 : vector<512x128xf32>
    %c0_6 = arith.constant 0 : index
    %c0_7 = arith.constant 0 : index
    %9 = vector.load %arg8[%c0_6, %c0_7] : memref<512x128xf32, #tpu.memory_space<vmem>>, vector<512x128xf32>
    tpu.vector_store %arg8[%c0_6, %c0_7], %8 {strides = array<i32>} : memref<512x128xf32, #tpu.memory_space<vmem>>, vector<512x128xf32>,
    %c0_i32_8 = arith.constant 0 : i32
    %10 = arith.cmpi eq, %arg1, %c0_i32_8 : i32
    %11 = arith.extui %10 : i1 to i32
    %c0_i32_9 = arith.constant 0 : i32
    %12 = arith.cmpi ne, %11, %c0_i32_9 : i32
    scf.if %12 {
      %c0_10 = arith.constant 0 : index
      %c0_11 = arith.constant 0 : index
      %13 = vector.load %arg4[%c0_10, %c0_11] : memref<512x1xf32, #tpu.memory_space<vmem>>, vector<512x1xf32>
      %c0_12 = arith.constant 0 : index
      %c0_13 = arith.constant 0 : index
      %14 = vector.load %arg8[%c0_12, %c0_13] : memref<512x128xf32, #tpu.memory_space<vmem>>, vector<512x128xf32>
      %15 = vector.broadcast %13 : vector<512x1xf32> to vector<512x128xf32>
      %16 = arith.mulf %15, %14 : vector<512x128xf32>
      %17 = arith.truncf %16 : vector<512x128xf32> to vector<512x128xbf16>
      %c0_14 = arith.constant 0 : index
      %c0_15 = arith.constant 0 : index
      %18 = vector.load %arg6[%c0_14, %c0_15] : memref<512x128xbf16, #tpu.memory_space<vmem>>, vector<512x128xbf16>
      tpu.vector_store %arg6[%c0_14, %c0_15], %17 {strides = array<i32>} : memref<512x128xbf16, #tpu.memory_space<vmem>>, vector<512x128xbf16>,
      %c0_16 = arith.constant 0 : index
      %c0_17 = arith.constant 0 : index
      %19 = vector.load %arg5[%c0_16, %c0_17] : memref<1x128xf32, #tpu.memory_space<vmem>>, vector<1x128xf32>
      %20 = vector.broadcast %19 : vector<1x128xf32> to vector<512x128xf32>
      %21 = arith.subf %16, %20 : vector<512x128xf32>
      %22 = arith.mulf %21, %21 : vector<512x128xf32>
      %cst_18 = arith.constant dense<0.000000e+00> : vector<128xf32>
      %23 = vector.multi_reduction <add>, %22, %cst_18 [0] : vector<512x128xf32> to vector<128xf32>
      %24 = vector.shape_cast %23 : vector<128xf32> to vector<1x128xf32>
      %25 = vector.shape_cast %24 : vector<1x128xf32> to vector<1x1x128xf32>
      %c0_19 = arith.constant 0 : index
      %c0_20 = arith.constant 0 : index
      %c0_21 = arith.constant 0 : index
      %26 = vector.load %arg7[%c0_19, %c0_20, %c0_21] : memref<1x1x128xf32, #tpu.memory_space<vmem>>, vector<1x1x128xf32>
      tpu.vector_store %arg7[%c0_19, %c0_20, %c0_21], %25 {strides = array<i32>} : memref<1x1x128xf32, #tpu.memory_space<vmem>>, vector<1x1x128xf32>,
    } else {
    }
    return
  }
  func.func @transform_0(%arg0: i32, %arg1: i32) -> (i32, i32) {
    %c0_i32 = arith.constant 0 : i32
    return %arg0, %arg1 : i32, i32
  }
  func.func @transform_1(%arg0: i32, %arg1: i32) -> (i32, i32) {
    %c0_i32 = arith.constant 0 : i32
    %c0_i32_0 = arith.constant 0 : i32
    return %arg1, %c0_i32 : i32, i32
  }
  func.func @transform_2(%arg0: i32, %arg1: i32) -> (i32, i32) {
    %c0_i32 = arith.constant 0 : i32
    %c0_i32_0 = arith.constant 0 : i32
    return %arg0, %c0_i32 : i32, i32
  }
  func.func @transform_3(%arg0: i32, %arg1: i32) -> (i32, i32) {
    %c0_i32 = arith.constant 0 : i32
    %c0_i32_0 = arith.constant 0 : i32
    %c0_i32_1 = arith.constant 0 : i32
    return %c0_i32, %c0_i32_0 : i32, i32
  }
  func.func @transform_4(%arg0: i32, %arg1: i32) -> (i32, i32) {
    %c0_i32 = arith.constant 0 : i32
    %c0_i32_0 = arith.constant 0 : i32
    return %arg0, %c0_i32 : i32, i32
  }
  func.func @transform_5(%arg0: i32, %arg1: i32) -> (i32, i32, i32) {
    %c0_i32 = arith.constant 0 : i32
    %c0_i32_0 = arith.constant 0 : i32
    %c0_i32_1 = arith.constant 0 : i32
    return %arg0, %c0_i32, %c0_i32_0 : i32, i32, i32
  }
}

module attributes {stable_mosaic.version = 11 : i64} {
  func.func @_bn_relu_kernel(%arg0: i32, %arg1: memref<512x128xbf16, #tpu.memory_space<vmem>>, %arg2: memref<1x128xf32, #tpu.memory_space<vmem>>, %arg3: memref<1x128xf32, #tpu.memory_space<vmem>>, %arg4: memref<512x64xf32, #tpu.memory_space<vmem>>) attributes {dimension_semantics = [#tpu.dimension_semantics<parallel>], iteration_bounds = array<i64: 2>, scalar_prefetch = 0 : i64, scratch_operands = 0 : i64, tpu.core_type = #tpu.core_type<tc>, window_params = [{transform_indices = @transform_0, window_bounds = array<i64: 512, 128>}, {pipeline_mode = #tpu.pipeline_mode<synchronous>, transform_indices = @transform_1, window_bounds = array<i64: 1, 128>}, {pipeline_mode = #tpu.pipeline_mode<synchronous>, transform_indices = @transform_2, window_bounds = array<i64: 1, 128>}, {transform_indices = @transform_3, window_bounds = array<i64: 512, 64>}]} {
    %c0 = arith.constant 0 : index
    %c0_0 = arith.constant 0 : index
    %0 = vector.load %arg1[%c0, %c0_0] : memref<512x128xbf16, #tpu.memory_space<vmem>>, vector<512x128xbf16>
    %1 = arith.extf %0 : vector<512x128xbf16> to vector<512x128xf32>
    %c0_1 = arith.constant 0 : index
    %c0_2 = arith.constant 0 : index
    %2 = vector.load %arg2[%c0_1, %c0_2] : memref<1x128xf32, #tpu.memory_space<vmem>>, vector<1x128xf32>
    %3 = vector.broadcast %2 : vector<1x128xf32> to vector<512x128xf32>
    %4 = arith.mulf %1, %3 : vector<512x128xf32>
    %c0_3 = arith.constant 0 : index
    %c0_4 = arith.constant 0 : index
    %5 = vector.load %arg3[%c0_3, %c0_4] : memref<1x128xf32, #tpu.memory_space<vmem>>, vector<1x128xf32>
    %6 = vector.broadcast %5 : vector<1x128xf32> to vector<512x128xf32>
    %7 = arith.addf %4, %6 : vector<512x128xf32>
    %cst = arith.constant 0.000000e+00 : f32
    %8 = vector.broadcast %cst : f32 to vector<512x128xf32>
    %9 = arith.maximumf %7, %8 : vector<512x128xf32>
    %10 = vector.extract_strided_slice %9 {offsets = [0, 0], sizes = [512, 64], strides = [1, 1]} : vector<512x128xf32> to vector<512x64xf32>
    %c0_5 = arith.constant 0 : index
    %c0_6 = arith.constant 0 : index
    %11 = vector.load %arg4[%c0_5, %c0_6] : memref<512x64xf32, #tpu.memory_space<vmem>>, vector<512x64xf32>
    tpu.vector_store %arg4[%c0_5, %c0_6], %10 {strides = array<i32>} : memref<512x64xf32, #tpu.memory_space<vmem>>, vector<512x64xf32>,
    return
  }
  func.func @transform_0(%arg0: i32) -> (i32, i32) {
    %c0_i32 = arith.constant 0 : i32
    %c0_i32_0 = arith.constant 0 : i32
    return %arg0, %c0_i32 : i32, i32
  }
  func.func @transform_1(%arg0: i32) -> (i32, i32) {
    %c0_i32 = arith.constant 0 : i32
    %c0_i32_0 = arith.constant 0 : i32
    %c0_i32_1 = arith.constant 0 : i32
    return %c0_i32, %c0_i32_0 : i32, i32
  }
  func.func @transform_2(%arg0: i32) -> (i32, i32) {
    %c0_i32 = arith.constant 0 : i32
    %c0_i32_0 = arith.constant 0 : i32
    %c0_i32_1 = arith.constant 0 : i32
    return %c0_i32, %c0_i32_0 : i32, i32
  }
  func.func @transform_3(%arg0: i32) -> (i32, i32) {
    %c0_i32 = arith.constant 0 : i32
    %c0_i32_0 = arith.constant 0 : i32
    return %arg0, %c0_i32 : i32, i32
  }
}

</mosaic_0001>

<llo_original>
// kernel: gcn_layer_forward.3
$region0: #{gcn_layer_forward.3}
  #allocation0 [shape = 'u32[]', space=smem, size = 0x4, offset = 0x4, fixed_abs, tag = 'smem constant byte address 0x4 - core index']
  #allocation1 [shape = 'u32[144,128]{1,0:T(1,128)}', space=vmem, size = 0x12000, scoped, tag = 'internal scratch']
  %s0 = inlined_call_operand.vmem [shape: f32[1024,32], index: 0, kind: input, shape index: {}]
  %s1 = inlined_call_operand.vmem [shape: f32[32,128], index: 1, kind: input, shape index: {}]
  %s2 = inlined_call_operand.vmem [shape: f32[1024,1], index: 2, kind: input, shape index: {}]
  %s3 = inlined_call_operand.vmem [shape: f32[1024,1], index: 3, kind: input, shape index: {}]
  %s4 = inlined_call_operand.vmem [shape: bf16[1024,128], index: 4, kind: output, shape index: {0}]
  %s5 = inlined_call_operand.vmem [shape: f32[2,1,128], index: 5, kind: output, shape index: {1}]
  %6 = xla_tuple %s4, %s5
  %s7 = sld [smem:[#allocation0]]
  $region57: #{gcn_layer_forward.3} parent=0
    _
  %s9 = ssub.s32 1, %s7
  %s10 = scalar_select 0, %s9, %s7
  loop: start=0, step=1, limit=4
  $region2: #{gcn_layer_forward.3} parent=0 // loop_pre_header
    _
  $region3: #{gcn_layer_forward.3} parent=0 // loop_header
    %s12 = sphi 0, %s16
    %p13 = scmp.ge.s32.totalorder %s12, 4
    %s22 = sphi 0, %s24
    %s25 = sphi 0, %s22
    %s26 = sphi 0, %s25
    %s42 = sphi 0, %s26
    %s46 = sphi 0, %s46
    %s48 = sphi 0, %s46
    %s49 = sphi 0, %s48
    %s63 = sphi 0, %s49
    %s69 = sphi 0, %s71
    %s72 = sphi 0, %s69
    %s73 = sphi 0, %s72
    %s89 = sphi 0, %s73
    %s95 = sphi 0, %s97
    %s98 = sphi 0, %s95
    %s99 = sphi 0, %s98
    %s115 = sphi 0, %s99
    %s121 = sphi 0, %s123
    %s124 = sphi 0, %s121
    %s125 = sphi 0, %s124
    %s141 = sphi 0, %s125
    %s147 = sphi 0, %s149
    %s150 = sphi 0, %s147
    %s151 = sphi 0, %s150
    %s167 = sphi 0, %s151
  $region4: #{gcn_layer_forward.3} parent=0 // loop_header_branch
    %15 = sbr.rel (%p13) target = $region8
  $region5: #{gcn_layer_forward.3} parent=0 // loop_body
    %s17 = ssub.s32 %s12, 1
    %s18 = ssub.s32 %s12, 2
    %s19 = sadd.s32 %s12, 1
    %s20 = ssub.s32 %s12, %s19
    %p21 = scmp.eq.s32.totalorder %s20, 0
    %s23 = sadd.s32 %s22, 1
    %s24 = scalar_select %p21, %s22, %s23
    %p27 = pneg %p21
    %p28 = scmp.eq.s32.totalorder %s12, 1
    %p29 = por %p27, %p28
    %p30 = scmp.ne.s32.totalorder %s22, %s25
    %p31 = scmp.eq.s32.totalorder %s12, 0
    %p32 = por %p30, %p31
    %p33 = scmp.ne.s32.totalorder %s22, %s25
    %p34 = scmp.eq.s32.totalorder %s17, 1
    %p35 = por %p33, %p34
    %p36 = scmp.ne.s32.totalorder %s25, %s26
    %p37 = scmp.eq.s32.totalorder %s17, 0
    %p38 = por %p36, %p37
    %p39 = scmp.ne.s32.totalorder %s25, %s26
    %p40 = scmp.eq.s32.totalorder %s18, 1
    %p41 = por %p39, %p40
    %p43 = scmp.ne.s32.totalorder %s26, %s42
    %p44 = scmp.eq.s32.totalorder %s18, 0
    %p45 = por %p43, %p44
    %s47 = sadd.s32 %s46, 1
    %p50 = scmp.eq.s32.totalorder %s12, 1
    %p51 = scmp.ne.s32.totalorder %s46, %s48
    %p52 = scmp.eq.s32.totalorder %s12, 0
    %p53 = por %p51, %p52
    %p54 = scmp.ne.s32.totalorder %s46, %s48
    %p55 = scmp.eq.s32.totalorder %s17, 1
    %p56 = por %p54, %p55
    %p57 = scmp.ne.s32.totalorder %s48, %s49
    %p58 = scmp.eq.s32.totalorder %s17, 0
    %p59 = por %p57, %p58
    %p60 = scmp.ne.s32.totalorder %s48, %s49
    %p61 = scmp.eq.s32.totalorder %s18, 1
    %p62 = por %p60, %p61
    %p64 = scmp.ne.s32.totalorder %s49, %s63
    %p65 = scmp.eq.s32.totalorder %s18, 0
    %p66 = por %p64, %p65
    %s67 = ssub.s32 %s12, %s19
    %p68 = scmp.eq.s32.totalorder %s67, 0
    %s70 = sadd.s32 %s69, 1
    %s71 = scalar_select %p68, %s69, %s70
    %p74 = pneg %p68
    %p75 = scmp.eq.s32.totalorder %s12, 1
    %p76 = por %p74, %p75
    %p77 = scmp.ne.s32.totalorder %s69, %s72
    %p78 = scmp.eq.s32.totalorder %s12, 0
    %p79 = por %p77, %p78
    %p80 = scmp.ne.s32.totalorder %s69, %s72
    %p81 = scmp.eq.s32.totalorder %s17, 1
    %p82 = por %p80, %p81
    %p83 = scmp.ne.s32.totalorder %s72, %s73
    %p84 = scmp.eq.s32.totalorder %s17, 0
    %p85 = por %p83, %p84
    %p86 = scmp.ne.s32.totalorder %s72, %s73
    %p87 = scmp.eq.s32.totalorder %s18, 1
    %p88 = por %p86, %p87
    %p90 = scmp.ne.s32.totalorder %s73, %s89
    %p91 = scmp.eq.s32.totalorder %s18, 0
    %p92 = por %p90, %p91
    %s93 = ssub.s32 %s12, %s19
    %p94 = scmp.eq.s32.totalorder %s93, 0
    %s96 = sadd.s32 %s95, 1
    %s97 = scalar_select %p94, %s95, %s96
    %p100 = pneg %p94
    %p101 = scmp.eq.s32.totalorder %s12, 1
    %p102 = por %p100, %p101
    %p103 = scmp.ne.s32.totalorder %s95, %s98
    %p104 = scmp.eq.s32.totalorder %s12, 0
    %p105 = por %p103, %p104
    %p106 = scmp.ne.s32.totalorder %s95, %s98
    %p107 = scmp.eq.s32.totalorder %s17, 1
    %p108 = por %p106, %p107
    %p109 = scmp.ne.s32.totalorder %s98, %s99
    %p110 = scmp.eq.s32.totalorder %s17, 0
    %p111 = por %p109, %p110
    %p112 = scmp.ne.s32.totalorder %s98, %s99
    %p113 = scmp.eq.s32.totalorder %s18, 1
    %p114 = por %p112, %p113
    %p116 = scmp.ne.s32.totalorder %s99, %s115
    %p117 = scmp.eq.s32.totalorder %s18, 0
    %p118 = por %p116, %p117
    %s119 = ssub.s32 %s12, %s19
    %p120 = scmp.eq.s32.totalorder %s119, 0
    %s122 = sadd.s32 %s121, 1
    %s123 = scalar_select %p120, %s121, %s122
    %p126 = pneg %p120
    %p127 = scmp.eq.s32.totalorder %s12, 1
    %p128 = por %p126, %p127
    %p129 = scmp.ne.s32.totalorder %s121, %s124
    %p130 = scmp.eq.s32.totalorder %s12, 0
    %p131 = por %p129, %p130
    %p132 = scmp.ne.s32.totalorder %s121, %s124
    %p133 = scmp.eq.s32.totalorder %s17, 1
    %p134 = por %p132, %p133
    %p135 = scmp.ne.s32.totalorder %s124, %s125
    %p136 = scmp.eq.s32.totalorder %s17, 0
    %p137 = por %p135, %p136
    %p138 = scmp.ne.s32.totalorder %s124, %s125
    %p139 = scmp.eq.s32.totalorder %s18, 1
    %p140 = por %p138, %p139
    %p142 = scmp.ne.s32.totalorder %s125, %s141
    %p143 = scmp.eq.s32.totalorder %s18, 0
    %p144 = por %p142, %p143
    %s145 = ssub.s32 %s12, %s19
    %p146 = scmp.eq.s32.totalorder %s145, 0
    %s148 = sadd.s32 %s147, 1
    %s149 = scalar_select %p146, %s147, %s148
    %p152 = pneg %p146
    %p153 = scmp.eq.s32.totalorder %s12, 1
    %p154 = por %p152, %p153
    %p155 = scmp.ne.s32.totalorder %s147, %s150
    %p156 = scmp.eq.s32.totalorder %s12, 0
    %p157 = por %p155, %p156
    %p158 = scmp.ne.s32.totalorder %s147, %s150
    %p159 = scmp.eq.s32.totalorder %s17, 1
    %p160 = por %p158, %p159
    %p161 = scmp.ne.s32.totalorder %s150, %s151
    %p162 = scmp.eq.s32.totalorder %s17, 0
    %p163 = por %p161, %p162
    %p164 = scmp.ne.s32.totalorder %s150, %s151
    %p165 = scmp.eq.s32.totalorder %s18, 1
    %p166 = por %p164, %p165
    %p168 = scmp.ne.s32.totalorder %s151, %s167
    %p169 = scmp.eq.s32.totalorder %s18, 0
    %p170 = por %p168, %p169
    %p171 = scmp.le.s32.totalorder 1, %s12
    %p172 = scmp.lt.s32.totalorder %s12, 3
    %p173 = pnand %p171, %p172
    %p174 = pneg %p173
    // Predicated region
    $region9: #{gcn_layer_forward.3} parent=5 // pred_check
      _
    $region10: #{gcn_layer_forward.3} parent=5 // pred_check_branch
      %176 = sbr.rel (%p173) target = $region12
    $region11: #{gcn_layer_forward.3} parent=5 // pred_region
      %s177 = ssub.s32 %s12, 1
      // Predicated region
      $region13: #{gcn_layer_forward.3} parent=11 // pred_check
        %p178 = pneg %p59
      $region14: #{gcn_layer_forward.3} parent=11 // pred_check_branch
        %180 = sbr.rel (%p178) target = $region16
      $region15: #{gcn_layer_forward.3} parent=11 // pred_region
        _
      $region16: #{gcn_layer_forward.3} parent=11 // pred_fallthru
        _
    $region12: #{gcn_layer_forward.3} parent=5 // pred_fallthru
      _
    %p181 = scmp.lt.s32.totalorder %s12, 2
    // Predicated region
    $region17: #{gcn_layer_forward.3} parent=5 // pred_check
      %p182 = pneg %p181
    $region18: #{gcn_layer_forward.3} parent=5 // pred_check_branch
      %184 = sbr.rel (%p182) target = $region20
    $region19: #{gcn_layer_forward.3} parent=5 // pred_region
      // Predicated region
      $region21: #{gcn_layer_forward.3} parent=19 // pred_check
        %p185 = pneg %p32
      $region22: #{gcn_layer_forward.3} parent=19 // pred_check_branch
        %187 = sbr.rel (%p185) target = $region24
      $region23: #{gcn_layer_forward.3} parent=19 // pred_region
        %s188 = smul.u32 64, %s12
        %p189 = scmp.lt.s32.totalorder %s188, 127
        %s190 = scalar_select %p189, %s188, 127
        %s191 = smul.addr %s190, 8
        %s192 = scalar_lea.vmem %s0, %s191
        %s193 = smul.u32 64, %s12
      $region24: #{gcn_layer_forward.3} parent=19 // pred_fallthru
        _
      // Predicated region
      $region25: #{gcn_layer_forward.3} parent=19 // pred_check
        %p194 = pneg %p79
      $region26: #{gcn_layer_forward.3} parent=19 // pred_check_branch
        %196 = sbr.rel (%p194) target = $region28
      $region27: #{gcn_layer_forward.3} parent=19 // pred_region
        %s197 = smul.u32 64, %s12
        %p198 = scmp.lt.s32.totalorder %s197, 127
        %s199 = scalar_select %p198, %s197, 127
        %s200 = smul.addr %s199, 8
        %s201 = scalar_lea.vmem %s2, %s200
        %s202 = smul.u32 64, %s12
      $region28: #{gcn_layer_forward.3} parent=19 // pred_fallthru
        _
      // Predicated region
      $region29: #{gcn_layer_forward.3} parent=19 // pred_check
        %p203 = pneg %p105
      $region30: #{gcn_layer_forward.3} parent=19 // pred_check_branch
        %205 = sbr.rel (%p203) target = $region32
      $region31: #{gcn_layer_forward.3} parent=19 // pred_region
        %s206 = smul.u32 64, %s12
        %p207 = scmp.lt.s32.totalorder %s206, 127
        %s208 = scalar_select %p207, %s206, 127
        %s209 = smul.addr %s208, 8
        %s210 = scalar_lea.vmem %s3, %s209
        %s211 = smul.u32 64, %s12
      $region32: #{gcn_layer_forward.3} parent=19 // pred_fallthru
        _
    $region20: #{gcn_layer_forward.3} parent=5 // pred_fallthru
      _
    %p212 = scmp.le.s32.totalorder 1, %s12
    %p213 = scmp.lt.s32.totalorder %s12, 3
    %p214 = pnand %p212, %p213
    %p215 = pneg %p214
    // Predicated region
    $region33: #{gcn_layer_forward.3} parent=5 // pred_check
      _
    $region34: #{gcn_layer_forward.3} parent=5 // pred_check_branch
      %217 = sbr.rel (%p214) target = $region36
    $region35: #{gcn_layer_forward.3} parent=5 // pred_region
      %s218 = ssub.s32 %s12, 1
      %s219 = smul.u32 64, %s17
      %p220 = scmp.lt.s32.totalorder %s219, 127
      %s221 = scalar_select %p220, %s219, 127
      %s222 = smul.addr %s221, 8
      %s223 = scalar_lea.vmem %s0, %s222
      %p224 = pneg %p38
      %p225 = pneg %p35
      %p226 = pneg %p59
      %p227 = pneg %p56
      %s228 = smul.u32 64, %s17
      %p229 = scmp.lt.s32.totalorder %s228, 127
      %s230 = scalar_select %p229, %s228, 127
      %s231 = smul.addr %s230, 8
      %s232 = scalar_lea.vmem %s2, %s231
      %p233 = pneg %p85
      %p234 = pneg %p82
      %s235 = smul.u32 64, %s17
      %p236 = scmp.lt.s32.totalorder %s235, 127
      %s237 = scalar_select %p236, %s235, 127
      %s238 = smul.addr %s237, 8
      %s239 = scalar_lea.vmem %s3, %s238
      %p240 = pneg %p111
      %p241 = pneg %p108
      %p242 = pneg %p137
      %p243 = pneg %p134
      %s244 = smul.u32 64, %s17
      %p245 = scmp.lt.s32.totalorder %s244, 127
      %s246 = scalar_select %p245, %s244, 127
      %s247 = smul.addr %s246, 4
      %s248 = scalar_lea.vmem %s4, %s247
      %p249 = pneg %p163
      %p250 = pneg %p160
      %p251 = scmp.lt.s32.totalorder %s17, 1
      %s252 = scalar_select %p251, %s17, 1
      %s253 = scalar_lea.vmem %s5, %s252
      %s254 = smul.u32 64, %s17
      %p255 = scmp.lt.s32.totalorder %s254, 127
      %s256 = scalar_select %p255, %s254, 127
      %s257 = smul.addr %s256, 8
      %s258 = scalar_lea.vmem %s0, %s257
      %s259 = smul.u32 64, %s17
      %s260 = smul.u32 64, %s17
      %p261 = scmp.lt.s32.totalorder %s260, 127
      %s262 = scalar_select %p261, %s260, 127
      %s263 = smul.addr %s262, 8
      %s264 = scalar_lea.vmem %s2, %s263
      %s265 = smul.u32 64, %s17
      %s266 = smul.u32 64, %s17
      %p267 = scmp.lt.s32.totalorder %s266, 127
      %s268 = scalar_select %p267, %s266, 127
      %s269 = smul.addr %s268, 8
      %s270 = scalar_lea.vmem %s3, %s269
      %s271 = smul.u32 64, %s17
      %s272 = smul.u32 64, %s17
      %p273 = scmp.lt.s32.totalorder %s272, 127
      %s274 = scalar_select %p273, %s272, 127
      %s275 = smul.addr %s274, 4
      %s276 = scalar_lea.vmem %s4, %s275
      %s277 = smul.u32 64, %s17
      %p278 = scmp.lt.s32.totalorder %s17, 1
      %s279 = scalar_select %p278, %s17, 1
      %s280 = scalar_lea.vmem %s5, %s279
      %v281 = vld [vmem:[%s258] sm:$0xff]
      %v282 = vld [vmem:[%s258 + $0x8] sm:$0xff]
      %v283 = vld [vmem:[%s258 + $0x10] sm:$0xff]
      %v284 = vld [vmem:[%s258 + $0x18] sm:$0xff]
      %v285 = vld [vmem:[%s258 + $0x20] sm:$0xff]
      %v286 = vld [vmem:[%s258 + $0x28] sm:$0xff]
      %v287 = vld [vmem:[%s258 + $0x30] sm:$0xff]
      %v288 = vld [vmem:[%s258 + $0x38] sm:$0xff]
      %v289 = vld [vmem:[%s258 + $0x40] sm:$0xff]
      %v290 = vld [vmem:[%s258 + $0x48] sm:$0xff]
      %v291 = vld [vmem:[%s258 + $0x50] sm:$0xff]
      %v292 = vld [vmem:[%s258 + $0x58] sm:$0xff]
      %v293 = vld [vmem:[%s258 + $0x60] sm:$0xff]
      %v294 = vld [vmem:[%s258 + $0x68] sm:$0xff]
      %v295 = vld [vmem:[%s258 + $0x70] sm:$0xff]
      %v296 = vld [vmem:[%s258 + $0x78] sm:$0xff]
      %v297 = vld [vmem:[%s258 + $0x80] sm:$0xff]
      %v298 = vld [vmem:[%s258 + $0x88] sm:$0xff]
      %v299 = vld [vmem:[%s258 + $0x90] sm:$0xff]
      %v300 = vld [vmem:[%s258 + $0x98] sm:$0xff]
      %v301 = vld [vmem:[%s258 + $0xa0] sm:$0xff]
      %v302 = vld [vmem:[%s258 + $0xa8] sm:$0xff]
      %v303 = vld [vmem:[%s258 + $0xb0] sm:$0xff]
      %v304 = vld [vmem:[%s258 + $0xb8] sm:$0xff]
      %v305 = vld [vmem:[%s258 + $0xc0] sm:$0xff]
      %v306 = vld [vmem:[%s258 + $0xc8] sm:$0xff]
      %v307 = vld [vmem:[%s258 + $0xd0] sm:$0xff]
      %v308 = vld [vmem:[%s258 + $0xd8] sm:$0xff]
      %v309 = vld [vmem:[%s258 + $0xe0] sm:$0xff]
      %v310 = vld [vmem:[%s258 + $0xe8] sm:$0xff]
      %v311 = vld [vmem:[%s258 + $0xf0] sm:$0xff]
      %v312 = vld [vmem:[%s258 + $0xf8] sm:$0xff]
      %v313 = vld [vmem:[%s258 + $0x100] sm:$0xff]
      %v314 = vld [vmem:[%s258 + $0x108] sm:$0xff]
      %v315 = vld [vmem:[%s258 + $0x110] sm:$0xff]
      %v316 = vld [vmem:[%s258 + $0x118] sm:$0xff]
      %v317 = vld [vmem:[%s258 + $0x120] sm:$0xff]
      %v318 = vld [vmem:[%s258 + $0x128] sm:$0xff]
      %v319 = vld [vmem:[%s258 + $0x130] sm:$0xff]
      %v320 = vld [vmem:[%s258 + $0x138] sm:$0xff]
      %v321 = vld [vmem:[%s258 + $0x140] sm:$0xff]
      %v322 = vld [vmem:[%s258 + $0x148] sm:$0xff]
      %v323 = vld [vmem:[%s258 + $0x150] sm:$0xff]
      %v324 = vld [vmem:[%s258 + $0x158] sm:$0xff]
      %v325 = vld [vmem:[%s258 + $0x160] sm:$0xff]
      %v326 = vld [vmem:[%s258 + $0x168] sm:$0xff]
      %v327 = vld [vmem:[%s258 + $0x170] sm:$0xff]
      %v328 = vld [vmem:[%s258 + $0x178] sm:$0xff]
      %v329 = vld [vmem:[%s258 + $0x180] sm:$0xff]
      %v330 = vld [vmem:[%s258 + $0x188] sm:$0xff]
      %v331 = vld [vmem:[%s258 + $0x190] sm:$0xff]
      %v332 = vld [vmem:[%s258 + $0x198] sm:$0xff]
      %v333 = vld [vmem:[%s258 + $0x1a0] sm:$0xff]
      %v334 = vld [vmem:[%s258 + $0x1a8] sm:$0xff]
      %v335 = vld [vmem:[%s258 + $0x1b0] sm:$0xff]
      %v336 = vld [vmem:[%s258 + $0x1b8] sm:$0xff]
      %v337 = vld [vmem:[%s258 + $0x1c0] sm:$0xff]
      %v338 = vld [vmem:[%s258 + $0x1c8] sm:$0xff]
      %v339 = vld [vmem:[%s258 + $0x1d0] sm:$0xff]
      %v340 = vld [vmem:[%s258 + $0x1d8] sm:$0xff]
      %v341 = vld [vmem:[%s258 + $0x1e0] sm:$0xff]
      %v342 = vld [vmem:[%s258 + $0x1e8] sm:$0xff]
      %v343 = vld [vmem:[%s258 + $0x1f0] sm:$0xff]
      %v344 = vld [vmem:[%s258 + $0x1f8] sm:$0xff]
      %v345 = vld [vmem:[%s1] sm:$0xff]
      %v346 = vld [vmem:[%s1 + $0x8] sm:$0xff]
      %v347 = vld [vmem:[%s1 + $0x10] sm:$0xff]
      %v348 = vld [vmem:[%s1 + $0x18] sm:$0xff]
      %vm349 = vcmask 261120
      %v351 = vsel %vm349, %v281, 0
      %v354 = vsel %vm349, %v282, 0
      %v357 = vsel %vm349, %v283, 0
      %v360 = vsel %vm349, %v284, 0
      %v363 = vsel %vm349, %v285, 0
      %v366 = vsel %vm349, %v286, 0
      %v369 = vsel %vm349, %v287, 0
      %v372 = vsel %vm349, %v288, 0
      %v375 = vsel %vm349, %v289, 0
      %v378 = vsel %vm349, %v290, 0
      %v381 = vsel %vm349, %v291, 0
      %v384 = vsel %vm349, %v292, 0
      %v387 = vsel %vm349, %v293, 0
      %v390 = vsel %vm349, %v294, 0
      %v393 = vsel %vm349, %v295, 0
      %v396 = vsel %vm349, %v296, 0
      %v399 = vsel %vm349, %v297, 0
      %v402 = vsel %vm349, %v298, 0
      %v405 = vsel %vm349, %v299, 0
      %v408 = vsel %vm349, %v300, 0
      %v411 = vsel %vm349, %v301, 0
      %v414 = vsel %vm349, %v302, 0
      %v417 = vsel %vm349, %v303, 0
      %v420 = vsel %vm349, %v304, 0
      %v423 = vsel %vm349, %v305, 0
      %v426 = vsel %vm349, %v306, 0
      %v429 = vsel %vm349, %v307, 0
      %v432 = vsel %vm349, %v308, 0
      %v435 = vsel %vm349, %v309, 0
      %v438 = vsel %vm349, %v310, 0
      %v441 = vsel %vm349, %v311, 0
      %v444 = vsel %vm349, %v312, 0
      %v447 = vsel %vm349, %v313, 0
      %v450 = vsel %vm349, %v314, 0
      %v453 = vsel %vm349, %v315, 0
      %v456 = vsel %vm349, %v316, 0
      %v459 = vsel %vm349, %v317, 0
      %v462 = vsel %vm349, %v318, 0
      %v465 = vsel %vm349, %v319, 0
      %v468 = vsel %vm349, %v320, 0
      %v471 = vsel %vm349, %v321, 0
      %v474 = vsel %vm349, %v322, 0
      %v477 = vsel %vm349, %v323, 0
      %v480 = vsel %vm349, %v324, 0
      %v483 = vsel %vm349, %v325, 0
      %v486 = vsel %vm349, %v326, 0
      %v489 = vsel %vm349, %v327, 0
      %v492 = vsel %vm349, %v328, 0
      %v495 = vsel %vm349, %v329, 0
      %v498 = vsel %vm349, %v330, 0
      %v501 = vsel %vm349, %v331, 0
      %v504 = vsel %vm349, %v332, 0
      %v507 = vsel %vm349, %v333, 0
      %v510 = vsel %vm349, %v334, 0
      %v513 = vsel %vm349, %v335, 0
      %v516 = vsel %vm349, %v336, 0
      %v519 = vsel %vm349, %v337, 0
      %v522 = vsel %vm349, %v338, 0
      %v525 = vsel %vm349, %v339, 0
      %v528 = vsel %vm349, %v340, 0
      %v531 = vsel %vm349, %v341, 0
      %v534 = vsel %vm349, %v342, 0
      %v537 = vsel %vm349, %v343, 0
      %v540 = vsel %vm349, %v344, 0
      %542 = vmatprep.subr.mxu0 0.0
      %543 = vmatpush1.msra.mxu0 0.0
      %544 = vmatprep.subr.mxu0 0.0
      %545 = vmatpush1.msra.mxu0 0.0
      %546 = vmatprep.subr.mxu0 0.0
      %547 = vmatpush1.msra.mxu0 0.0
      %548 = vmatprep.subr.mxu0 0.0
      %549 = vmatpush1.msra.mxu0 0.0
      %550 = vmatprep.subr.mxu0 0.0
      %551 = vmatpush1.msra.mxu0 0.0
      %552 = vmatprep.subr.mxu0 0.0
      %553 = vmatpush1.msra.mxu0 0.0
      %554 = vmatprep.subr.mxu0 0.0
      %555 = vmatpush1.msra.mxu0 0.0
      %556 = vmatprep.subr.mxu0 0.0
      %557 = vmatpush1.msra.mxu0 0.0
      %558 = vmatprep.subr.mxu0 0.0
      %559 = vmatpush1.msra.mxu0 0.0
      %560 = vmatprep.subr.mxu0 0.0
      %561 = vmatpush1.msra.mxu0 0.0
      %562 = vmatprep.subr.mxu0 0.0
      %563 = vmatpush1.msra.mxu0 0.0
      %564 = vmatprep.subr.mxu0 0.0
      %565 = vmatpush1.msra.mxu0 0.0
      %566 = vmatprep.subr.mxu0 0.0
      %567 = vmatpush1.msra.mxu0 %v348
      %568 = vmatprep.subr.mxu0 0.0
      %569 = vmatpush1.msra.mxu0 %v347
      %570 = vmatprep.subr.mxu0 0.0
      %571 = vmatpush1.msra.mxu0 %v346
      %572 = vmatprep.subr.mxu0 0.0
      %573 = vmatpush1.msra.mxu0 %v345
      %574 = vmatprep.subr.mxu0 0.0
      %575 = vmatpush2.msra.mxu0 0.0
      %576 = vmatprep.subr.mxu0 0.0
      %577 = vmatpush2.msra.mxu0 0.0
      %578 = vmatprep.subr.mxu0 0.0
      %579 = vmatpush2.msra.mxu0 0.0
      %580 = vmatprep.subr.mxu0 0.0
      %581 = vmatpush2.msra.mxu0 0.0
      %582 = vmatprep.subr.mxu0 0.0
      %583 = vmatpush2.msra.mxu0 0.0
      %584 = vmatprep.subr.mxu0 0.0
      %585 = vmatpush2.msra.mxu0 0.0
      %586 = vmatprep.subr.mxu0 0.0
      %587 = vmatpush2.msra.mxu0 0.0
      %588 = vmatprep.subr.mxu0 0.0
      %589 = vmatpush2.msra.mxu0 0.0
      %590 = vmatprep.subr.mxu0 0.0
      %591 = vmatpush2.msra.mxu0 0.0
      %592 = vmatprep.subr.mxu0 0.0
      %593 = vmatpush2.msra.mxu0 0.0
      %594 = vmatprep.subr.mxu0 0.0
      %595 = vmatpush2.msra.mxu0 0.0
      %596 = vmatprep.subr.mxu0 0.0
      %597 = vmatpush2.msra.mxu0 0.0
      %598 = vmatprep.subr.mxu0 0.0
      %599 = vmatpush2.msra.mxu0 0.0
      %600 = vmatprep.subr.mxu0 0.0
      %601 = vmatpush2.msra.mxu0 0.0
      %602 = vmatprep.subr.mxu0 0.0
      %603 = vmatpush2.msra.mxu0 0.0
      %604 = vmatprep.subr.mxu0 0.0
      %605 = vmatpush2.msra.mxu0 0.0
      %606 = vmatprep.mubr.f32.mxu0 0.0
      %607 = vmatmul.mubr.f32.gmra.mxu0 %v351
      %v608 = vpop.f32.mrf.mxu0
      %v609 = vadd.f32 0.0, %v608
      %v610 = vpop.f32.mrf.mxu0
      %611 = vmatprep.mubr.f32.mxu0 0.0
      %612 = vmatmul.mubr.f32.gmra.mxu0 %v354
      %v613 = vpop.f32.mrf.mxu0
      %v614 = vadd.f32 0.0, %v613
      %v615 = vpop.f32.mrf.mxu0
      %616 = vmatprep.mubr.f32.mxu0 0.0
      %617 = vmatmul.mubr.f32.gmra.mxu0 %v357
      %v618 = vpop.f32.mrf.mxu0
      %v619 = vadd.f32 0.0, %v618
      %v620 = vpop.f32.mrf.mxu0
      %621 = vmatprep.mubr.f32.mxu0 0.0
      %622 = vmatmul.mubr.f32.gmra.mxu0 %v360
      %v623 = vpop.f32.mrf.mxu0
      %v624 = vadd.f32 0.0, %v623
      %v625 = vpop.f32.mrf.mxu0
      %626 = vmatprep.mubr.f32.mxu0 0.0
      %627 = vmatmul.mubr.f32.gmra.mxu0 %v363
      %v628 = vpop.f32.mrf.mxu0
      %v629 = vadd.f32 0.0, %v628
      %v630 = vpop.f32.mrf.mxu0
      %631 = vmatprep.mubr.f32.mxu0 0.0
      %632 = vmatmul.mubr.f32.gmra.mxu0 %v366
      %v633 = vpop.f32.mrf.mxu0
      %v634 = vadd.f32 0.0, %v633
      %v635 = vpop.f32.mrf.mxu0
      %636 = vmatprep.mubr.f32.mxu0 0.0
      %637 = vmatmul.mubr.f32.gmra.mxu0 %v369
      %v638 = vpop.f32.mrf.mxu0
      %v639 = vadd.f32 0.0, %v638
      %v640 = vpop.f32.mrf.mxu0
      %641 = vmatprep.mubr.f32.mxu0 0.0
      %642 = vmatmul.mubr.f32.gmra.mxu0 %v372
      %v643 = vpop.f32.mrf.mxu0
      %v644 = vadd.f32 0.0, %v643
      %v645 = vpop.f32.mrf.mxu0
      %646 = vmatprep.mubr.f32.mxu0 0.0
      %647 = vmatmul.mubr.f32.gmra.mxu0 %v375
      %v648 = vpop.f32.mrf.mxu0
      %v649 = vadd.f32 0.0, %v648
      %v650 = vpop.f32.mrf.mxu0
      %651 = vmatprep.mubr.f32.mxu0 0.0
      %652 = vmatmul.mubr.f32.gmra.mxu0 %v378
      %v653 = vpop.f32.mrf.mxu0
      %v654 = vadd.f32 0.0, %v653
      %v655 = vpop.f32.mrf.mxu0
      %656 = vmatprep.mubr.f32.mxu0 0.0
      %657 = vmatmul.mubr.f32.gmra.mxu0 %v381
      %v658 = vpop.f32.mrf.mxu0
      %v659 = vadd.f32 0.0, %v658
      %v660 = vpop.f32.mrf.mxu0
      %661 = vmatprep.mubr.f32.mxu0 0.0
      %662 = vmatmul.mubr.f32.gmra.mxu0 %v384
      %v663 = vpop.f32.mrf.mxu0
      %v664 = vadd.f32 0.0, %v663
      %v665 = vpop.f32.mrf.mxu0
      %666 = vmatprep.mubr.f32.mxu0 0.0
      %667 = vmatmul.mubr.f32.gmra.mxu0 %v387
      %v668 = vpop.f32.mrf.mxu0
      %v669 = vadd.f32 0.0, %v668
      %v670 = vpop.f32.mrf.mxu0
      %671 = vmatprep.mubr.f32.mxu0 0.0
      %672 = vmatmul.mubr.f32.gmra.mxu0 %v390
      %v673 = vpop.f32.mrf.mxu0
      %v674 = vadd.f32 0.0, %v673
      %v675 = vpop.f32.mrf.mxu0
      %676 = vmatprep.mubr.f32.mxu0 0.0
      %677 = vmatmul.mubr.f32.gmra.mxu0 %v393
      %v678 = vpop.f32.mrf.mxu0
      %v679 = vadd.f32 0.0, %v678
      %v680 = vpop.f32.mrf.mxu0
      %681 = vmatprep.mubr.f32.mxu0 0.0
      %682 = vmatmul.mubr.f32.gmra.mxu0 %v396
      %v683 = vpop.f32.mrf.mxu0
      %v684 = vadd.f32 0.0, %v683
      %v685 = vpop.f32.mrf.mxu0
      %686 = vmatprep.mubr.f32.mxu0 0.0
      %687 = vmatmul.mubr.f32.gmra.mxu0 %v399
      %v688 = vpop.f32.mrf.mxu0
      %v689 = vadd.f32 0.0, %v688
      %v690 = vpop.f32.mrf.mxu0
      %691 = vmatprep.mubr.f32.mxu0 0.0
      %692 = vmatmul.mubr.f32.gmra.mxu0 %v402
      %v693 = vpop.f32.mrf.mxu0
      %v694 = vadd.f32 0.0, %v693
      %v695 = vpop.f32.mrf.mxu0
      %696 = vmatprep.mubr.f32.mxu0 0.0
      %697 = vmatmul.mubr.f32.gmra.mxu0 %v405
      %v698 = vpop.f32.mrf.mxu0
      %v699 = vadd.f32 0.0, %v698
      %v700 = vpop.f32.mrf.mxu0
      %701 = vmatprep.mubr.f32.mxu0 0.0
      %702 = vmatmul.mubr.f32.gmra.mxu0 %v408
      %v703 = vpop.f32.mrf.mxu0
      %v704 = vadd.f32 0.0, %v703
      %v705 = vpop.f32.mrf.mxu0
      %706 = vmatprep.mubr.f32.mxu0 0.0
      %707 = vmatmul.mubr.f32.gmra.mxu0 %v411
      %v708 = vpop.f32.mrf.mxu0
      %v709 = vadd.f32 0.0, %v708
      %v710 = vpop.f32.mrf.mxu0
      %711 = vmatprep.mubr.f32.mxu0 0.0
      %712 = vmatmul.mubr.f32.gmra.mxu0 %v414
      %v713 = vpop.f32.mrf.mxu0
      %v714 = vadd.f32 0.0, %v713
      %v715 = vpop.f32.mrf.mxu0
      %716 = vmatprep.mubr.f32.mxu0 0.0
      %717 = vmatmul.mubr.f32.gmra.mxu0 %v417
      %v718 = vpop.f32.mrf.mxu0
      %v719 = vadd.f32 0.0, %v718
      %v720 = vpop.f32.mrf.mxu0
      %721 = vmatprep.mubr.f32.mxu0 0.0
      %722 = vmatmul.mubr.f32.gmra.mxu0 %v420
      %v723 = vpop.f32.mrf.mxu0
      %v724 = vadd.f32 0.0, %v723
      %v725 = vpop.f32.mrf.mxu0
      %726 = vmatprep.mubr.f32.mxu0 0.0
      %727 = vmatmul.mubr.f32.gmra.mxu0 %v423
      %v728 = vpop.f32.mrf.mxu0
      %v729 = vadd.f32 0.0, %v728
      %v730 = vpop.f32.mrf.mxu0
      %731 = vmatprep.mubr.f32.mxu0 0.0
      %732 = vmatmul.mubr.f32.gmra.mxu0 %v426
      %v733 = vpop.f32.mrf.mxu0
      %v734 = vadd.f32 0.0, %v733
      %v735 = vpop.f32.mrf.mxu0
      %736 = vmatprep.mubr.f32.mxu0 0.0
      %737 = vmatmul.mubr.f32.gmra.mxu0 %v429
      %v738 = vpop.f32.mrf.mxu0
      %v739 = vadd.f32 0.0, %v738
      %v740 = vpop.f32.mrf.mxu0
      %741 = vmatprep.mubr.f32.mxu0 0.0
      %742 = vmatmul.mubr.f32.gmra.mxu0 %v432
      %v743 = vpop.f32.mrf.mxu0
      %v744 = vadd.f32 0.0, %v743
      %v745 = vpop.f32.mrf.mxu0
      %746 = vmatprep.mubr.f32.mxu0 0.0
      %747 = vmatmul.mubr.f32.gmra.mxu0 %v435
      %v748 = vpop.f32.mrf.mxu0
      %v749 = vadd.f32 0.0, %v748
      %v750 = vpop.f32.mrf.mxu0
      %751 = vmatprep.mubr.f32.mxu0 0.0
      %752 = vmatmul.mubr.f32.gmra.mxu0 %v438
      %v753 = vpop.f32.mrf.mxu0
      %v754 = vadd.f32 0.0, %v753
      %v755 = vpop.f32.mrf.mxu0
      %756 = vmatprep.mubr.f32.mxu0 0.0
      %757 = vmatmul.mubr.f32.gmra.mxu0 %v441
      %v758 = vpop.f32.mrf.mxu0
      %v759 = vadd.f32 0.0, %v758
      %v760 = vpop.f32.mrf.mxu0
      %761 = vmatprep.mubr.f32.mxu0 0.0
      %762 = vmatmul.mubr.f32.gmra.mxu0 %v444
      %v763 = vpop.f32.mrf.mxu0
      %v764 = vadd.f32 0.0, %v763
      %v765 = vpop.f32.mrf.mxu0
      %766 = vmatprep.mubr.f32.mxu0 0.0
      %767 = vmatmul.mubr.f32.gmra.mxu0 %v447
      %v768 = vpop.f32.mrf.mxu0
      %v769 = vadd.f32 0.0, %v768
      %v770 = vpop.f32.mrf.mxu0
      %771 = vmatprep.mubr.f32.mxu0 0.0
      %772 = vmatmul.mubr.f32.gmra.mxu0 %v450
      %v773 = vpop.f32.mrf.mxu0
      %v774 = vadd.f32 0.0, %v773
      %v775 = vpop.f32.mrf.mxu0
      %776 = vmatprep.mubr.f32.mxu0 0.0
      %777 = vmatmul.mubr.f32.gmra.mxu0 %v453
      %v778 = vpop.f32.mrf.mxu0
      %v779 = vadd.f32 0.0, %v778
      %v780 = vpop.f32.mrf.mxu0
      %781 = vmatprep.mubr.f32.mxu0 0.0
      %782 = vmatmul.mubr.f32.gmra.mxu0 %v456
      %v783 = vpop.f32.mrf.mxu0
      %v784 = vadd.f32 0.0, %v783
      %v785 = vpop.f32.mrf.mxu0
      %786 = vmatprep.mubr.f32.mxu0 0.0
      %787 = vmatmul.mubr.f32.gmra.mxu0 %v459
      %v788 = vpop.f32.mrf.mxu0
      %v789 = vadd.f32 0.0, %v788
      %v790 = vpop.f32.mrf.mxu0
      %791 = vmatprep.mubr.f32.mxu0 0.0
      %792 = vmatmul.mubr.f32.gmra.mxu0 %v462
      %v793 = vpop.f32.mrf.mxu0
      %v794 = vadd.f32 0.0, %v793
      %v795 = vpop.f32.mrf.mxu0
      %796 = vmatprep.mubr.f32.mxu0 0.0
      %797 = vmatmul.mubr.f32.gmra.mxu0 %v465
      %v798 = vpop.f32.mrf.mxu0
      %v799 = vadd.f32 0.0, %v798
      %v800 = vpop.f32.mrf.mxu0
      %801 = vmatprep.mubr.f32.mxu0 0.0
      %802 = vmatmul.mubr.f32.gmra.mxu0 %v468
      %v803 = vpop.f32.mrf.mxu0
      %v804 = vadd.f32 0.0, %v803
      %v805 = vpop.f32.mrf.mxu0
      %806 = vmatprep.mubr.f32.mxu0 0.0
      %807 = vmatmul.mubr.f32.gmra.mxu0 %v471
      %v808 = vpop.f32.mrf.mxu0
      %v809 = vadd.f32 0.0, %v808
      %v810 = vpop.f32.mrf.mxu0
      %811 = vmatprep.mubr.f32.mxu0 0.0
      %812 = vmatmul.mubr.f32.gmra.mxu0 %v474
      %v813 = vpop.f32.mrf.mxu0
      %v814 = vadd.f32 0.0, %v813
      %v815 = vpop.f32.mrf.mxu0
      %816 = vmatprep.mubr.f32.mxu0 0.0
      %817 = vmatmul.mubr.f32.gmra.mxu0 %v477
      %v818 = vpop.f32.mrf.mxu0
      %v819 = vadd.f32 0.0, %v818
      %v820 = vpop.f32.mrf.mxu0
      %821 = vmatprep.mubr.f32.mxu0 0.0
      %822 = vmatmul.mubr.f32.gmra.mxu0 %v480
      %v823 = vpop.f32.mrf.mxu0
      %v824 = vadd.f32 0.0, %v823
      %v825 = vpop.f32.mrf.mxu0
      %826 = vmatprep.mubr.f32.mxu0 0.0
      %827 = vmatmul.mubr.f32.gmra.mxu0 %v483
      %v828 = vpop.f32.mrf.mxu0
      %v829 = vadd.f32 0.0, %v828
      %v830 = vpop.f32.mrf.mxu0
      %831 = vmatprep.mubr.f32.mxu0 0.0
      %832 = vmatmul.mubr.f32.gmra.mxu0 %v486
      %v833 = vpop.f32.mrf.mxu0
      %v834 = vadd.f32 0.0, %v833
      %v835 = vpop.f32.mrf.mxu0
      %836 = vmatprep.mubr.f32.mxu0 0.0
      %837 = vmatmul.mubr.f32.gmra.mxu0 %v489
      %v838 = vpop.f32.mrf.mxu0
      %v839 = vadd.f32 0.0, %v838
      %v840 = vpop.f32.mrf.mxu0
      %841 = vmatprep.mubr.f32.mxu0 0.0
      %842 = vmatmul.mubr.f32.gmra.mxu0 %v492
      %v843 = vpop.f32.mrf.mxu0
      %v844 = vadd.f32 0.0, %v843
      %v845 = vpop.f32.mrf.mxu0
      %846 = vmatprep.mubr.f32.mxu0 0.0
      %847 = vmatmul.mubr.f32.gmra.mxu0 %v495
      %v848 = vpop.f32.mrf.mxu0
      %v849 = vadd.f32 0.0, %v848
      %v850 = vpop.f32.mrf.mxu0
      %851 = vmatprep.mubr.f32.mxu0 0.0
      %852 = vmatmul.mubr.f32.gmra.mxu0 %v498
      %v853 = vpop.f32.mrf.mxu0
      %v854 = vadd.f32 0.0, %v853
      %v855 = vpop.f32.mrf.mxu0
      %856 = vmatprep.mubr.f32.mxu0 0.0
      %857 = vmatmul.mubr.f32.gmra.mxu0 %v501
      %v858 = vpop.f32.mrf.mxu0
      %v859 = vadd.f32 0.0, %v858
      %v860 = vpop.f32.mrf.mxu0
      %861 = vmatprep.mubr.f32.mxu0 0.0
      %862 = vmatmul.mubr.f32.gmra.mxu0 %v504
      %v863 = vpop.f32.mrf.mxu0
      %v864 = vadd.f32 0.0, %v863
      %v865 = vpop.f32.mrf.mxu0
      %866 = vmatprep.mubr.f32.mxu0 0.0
      %867 = vmatmul.mubr.f32.gmra.mxu0 %v507
      %v868 = vpop.f32.mrf.mxu0
      %v869 = vadd.f32 0.0, %v868
      %v870 = vpop.f32.mrf.mxu0
      %871 = vmatprep.mubr.f32.mxu0 0.0
      %872 = vmatmul.mubr.f32.gmra.mxu0 %v510
      %v873 = vpop.f32.mrf.mxu0
      %v874 = vadd.f32 0.0, %v873
      %v875 = vpop.f32.mrf.mxu0
      %876 = vmatprep.mubr.f32.mxu0 0.0
      %877 = vmatmul.mubr.f32.gmra.mxu0 %v513
      %v878 = vpop.f32.mrf.mxu0
      %v879 = vadd.f32 0.0, %v878
      %v880 = vpop.f32.mrf.mxu0
      %881 = vmatprep.mubr.f32.mxu0 0.0
      %882 = vmatmul.mubr.f32.gmra.mxu0 %v516
      %v883 = vpop.f32.mrf.mxu0
      %v884 = vadd.f32 0.0, %v883
      %v885 = vpop.f32.mrf.mxu0
      %886 = vmatprep.mubr.f32.mxu0 0.0
      %887 = vmatmul.mubr.f32.gmra.mxu0 %v519
      %v888 = vpop.f32.mrf.mxu0
      %v889 = vadd.f32 0.0, %v888
      %v890 = vpop.f32.mrf.mxu0
      %891 = vmatprep.mubr.f32.mxu0 0.0
      %892 = vmatmul.mubr.f32.gmra.mxu0 %v522
      %v893 = vpop.f32.mrf.mxu0
      %v894 = vadd.f32 0.0, %v893
      %v895 = vpop.f32.mrf.mxu0
      %896 = vmatprep.mubr.f32.mxu0 0.0
      %897 = vmatmul.mubr.f32.gmra.mxu0 %v525
      %v898 = vpop.f32.mrf.mxu0
      %v899 = vadd.f32 0.0, %v898
      %v900 = vpop.f32.mrf.mxu0
      %901 = vmatprep.mubr.f32.mxu0 0.0
      %902 = vmatmul.mubr.f32.gmra.mxu0 %v528
      %v903 = vpop.f32.mrf.mxu0
      %v904 = vadd.f32 0.0, %v903
      %v905 = vpop.f32.mrf.mxu0
      %906 = vmatprep.mubr.f32.mxu0 0.0
      %907 = vmatmul.mubr.f32.gmra.mxu0 %v531
      %v908 = vpop.f32.mrf.mxu0
      %v909 = vadd.f32 0.0, %v908
      %v910 = vpop.f32.mrf.mxu0
      %911 = vmatprep.mubr.f32.mxu0 0.0
      %912 = vmatmul.mubr.f32.gmra.mxu0 %v534
      %v913 = vpop.f32.mrf.mxu0
      %v914 = vadd.f32 0.0, %v913
      %v915 = vpop.f32.mrf.mxu0
      %916 = vmatprep.mubr.f32.mxu0 0.0
      %917 = vmatmul.mubr.f32.gmra.mxu0 %v537
      %v918 = vpop.f32.mrf.mxu0
      %v919 = vadd.f32 0.0, %v918
      %v920 = vpop.f32.mrf.mxu0
      %921 = vmatprep.mubr.f32.mxu0 0.0
      %922 = vmatmul.mubr.f32.gmra.mxu0 %v540
      %v923 = vpop.f32.mrf.mxu0
      %v924 = vadd.f32 0.0, %v923
      %v925 = vpop.f32.mrf.mxu0
      %926 = vdwg.mxu0
      %v927 = vld [vmem:[%s264] sm:$0xff]
      %v928 = vld [vmem:[%s264 + $0x8] sm:$0xff]
      %v929 = vld [vmem:[%s264 + $0x10] sm:$0xff]
      %v930 = vld [vmem:[%s264 + $0x18] sm:$0xff]
      %v931 = vld [vmem:[%s264 + $0x20] sm:$0xff]
      %v932 = vld [vmem:[%s264 + $0x28] sm:$0xff]
      %v933 = vld [vmem:[%s264 + $0x30] sm:$0xff]
      %v934 = vld [vmem:[%s264 + $0x38] sm:$0xff]
      %v935 = vld [vmem:[%s264 + $0x40] sm:$0xff]
      %v936 = vld [vmem:[%s264 + $0x48] sm:$0xff]
      %v937 = vld [vmem:[%s264 + $0x50] sm:$0xff]
      %v938 = vld [vmem:[%s264 + $0x58] sm:$0xff]
      %v939 = vld [vmem:[%s264 + $0x60] sm:$0xff]
      %v940 = vld [vmem:[%s264 + $0x68] sm:$0xff]
      %v941 = vld [vmem:[%s264 + $0x70] sm:$0xff]
      %v942 = vld [vmem:[%s264 + $0x78] sm:$0xff]
      %v943 = vld [vmem:[%s264 + $0x80] sm:$0xff]
      %v944 = vld [vmem:[%s264 + $0x88] sm:$0xff]
      %v945 = vld [vmem:[%s264 + $0x90] sm:$0xff]
      %v946 = vld [vmem:[%s264 + $0x98] sm:$0xff]
      %v947 = vld [vmem:[%s264 + $0xa0] sm:$0xff]
      %v948 = vld [vmem:[%s264 + $0xa8] sm:$0xff]
      %v949 = vld [vmem:[%s264 + $0xb0] sm:$0xff]
      %v950 = vld [vmem:[%s264 + $0xb8] sm:$0xff]
      %v951 = vld [vmem:[%s264 + $0xc0] sm:$0xff]
      %v952 = vld [vmem:[%s264 + $0xc8] sm:$0xff]
      %v953 = vld [vmem:[%s264 + $0xd0] sm:$0xff]
      %v954 = vld [vmem:[%s264 + $0xd8] sm:$0xff]
      %v955 = vld [vmem:[%s264 + $0xe0] sm:$0xff]
      %v956 = vld [vmem:[%s264 + $0xe8] sm:$0xff]
      %v957 = vld [vmem:[%s264 + $0xf0] sm:$0xff]
      %v958 = vld [vmem:[%s264 + $0xf8] sm:$0xff]
      %v959 = vld [vmem:[%s264 + $0x100] sm:$0xff]
      %v960 = vld [vmem:[%s264 + $0x108] sm:$0xff]
      %v961 = vld [vmem:[%s264 + $0x110] sm:$0xff]
      %v962 = vld [vmem:[%s264 + $0x118] sm:$0xff]
      %v963 = vld [vmem:[%s264 + $0x120] sm:$0xff]
      %v964 = vld [vmem:[%s264 + $0x128] sm:$0xff]
      %v965 = vld [vmem:[%s264 + $0x130] sm:$0xff]
      %v966 = vld [vmem:[%s264 + $0x138] sm:$0xff]
      %v967 = vld [vmem:[%s264 + $0x140] sm:$0xff]
      %v968 = vld [vmem:[%s264 + $0x148] sm:$0xff]
      %v969 = vld [vmem:[%s264 + $0x150] sm:$0xff]
      %v970 = vld [vmem:[%s264 + $0x158] sm:$0xff]
      %v971 = vld [vmem:[%s264 + $0x160] sm:$0xff]
      %v972 = vld [vmem:[%s264 + $0x168] sm:$0xff]
      %v973 = vld [vmem:[%s264 + $0x170] sm:$0xff]
      %v974 = vld [vmem:[%s264 + $0x178] sm:$0xff]
      %v975 = vld [vmem:[%s264 + $0x180] sm:$0xff]
      %v976 = vld [vmem:[%s264 + $0x188] sm:$0xff]
      %v977 = vld [vmem:[%s264 + $0x190] sm:$0xff]
      %v978 = vld [vmem:[%s264 + $0x198] sm:$0xff]
      %v979 = vld [vmem:[%s264 + $0x1a0] sm:$0xff]
      %v980 = vld [vmem:[%s264 + $0x1a8] sm:$0xff]
      %v981 = vld [vmem:[%s264 + $0x1b0] sm:$0xff]
      %v982 = vld [vmem:[%s264 + $0x1b8] sm:$0xff]
      %v983 = vld [vmem:[%s264 + $0x1c0] sm:$0xff]
      %v984 = vld [vmem:[%s264 + $0x1c8] sm:$0xff]
      %v985 = vld [vmem:[%s264 + $0x1d0] sm:$0xff]
      %v986 = vld [vmem:[%s264 + $0x1d8] sm:$0xff]
      %v987 = vld [vmem:[%s264 + $0x1e0] sm:$0xff]
      %v988 = vld [vmem:[%s264 + $0x1e8] sm:$0xff]
      %v989 = vld [vmem:[%s264 + $0x1f0] sm:$0xff]
      %v990 = vld [vmem:[%s264 + $0x1f8] sm:$0xff]
      %992 = vset.pattern.permute.xlu0 0
      %993 = vperm.xlu0 %992, %v927
      %v994 = vpop.permute.xlu0 %993
      %997 = vset.pattern.permute.xlu0 0
      %998 = vperm.xlu0 %997, %v928
      %v999 = vpop.permute.xlu0 %998
      %1002 = vset.pattern.permute.xlu0 0
      %1003 = vperm.xlu0 %1002, %v929
      %v1004 = vpop.permute.xlu0 %1003
      %1007 = vset.pattern.permute.xlu0 0
      %1008 = vperm.xlu0 %1007, %v930
      %v1009 = vpop.permute.xlu0 %1008
      %1012 = vset.pattern.permute.xlu0 0
      %1013 = vperm.xlu0 %1012, %v931
      %v1014 = vpop.permute.xlu0 %1013
      %1017 = vset.pattern.permute.xlu0 0
      %1018 = vperm.xlu0 %1017, %v932
      %v1019 = vpop.permute.xlu0 %1018
      %1022 = vset.pattern.permute.xlu0 0
      %1023 = vperm.xlu0 %1022, %v933
      %v1024 = vpop.permute.xlu0 %1023
      %1027 = vset.pattern.permute.xlu0 0
      %1028 = vperm.xlu0 %1027, %v934
      %v1029 = vpop.permute.xlu0 %1028
      %1032 = vset.pattern.permute.xlu0 0
      %1033 = vperm.xlu0 %1032, %v935
      %v1034 = vpop.permute.xlu0 %1033
      %1037 = vset.pattern.permute.xlu0 0
      %1038 = vperm.xlu0 %1037, %v936
      %v1039 = vpop.permute.xlu0 %1038
      %1042 = vset.pattern.permute.xlu0 0
      %1043 = vperm.xlu0 %1042, %v937
      %v1044 = vpop.permute.xlu0 %1043
      %1047 = vset.pattern.permute.xlu0 0
      %1048 = vperm.xlu0 %1047, %v938
      %v1049 = vpop.permute.xlu0 %1048
      %1052 = vset.pattern.permute.xlu0 0
      %1053 = vperm.xlu0 %1052, %v939
      %v1054 = vpop.permute.xlu0 %1053
      %1057 = vset.pattern.permute.xlu0 0
      %1058 = vperm.xlu0 %1057, %v940
      %v1059 = vpop.permute.xlu0 %1058
      %1062 = vset.pattern.permute.xlu0 0
      %1063 = vperm.xlu0 %1062, %v941
      %v1064 = vpop.permute.xlu0 %1063
      %1067 = vset.pattern.permute.xlu0 0
      %1068 = vperm.xlu0 %1067, %v942
      %v1069 = vpop.permute.xlu0 %1068
      %1072 = vset.pattern.permute.xlu0 0
      %1073 = vperm.xlu0 %1072, %v943
      %v1074 = vpop.permute.xlu0 %1073
      %1077 = vset.pattern.permute.xlu0 0
      %1078 = vperm.xlu0 %1077, %v944
      %v1079 = vpop.permute.xlu0 %1078
      %1082 = vset.pattern.permute.xlu0 0
      %1083 = vperm.xlu0 %1082, %v945
      %v1084 = vpop.permute.xlu0 %1083
      %1087 = vset.pattern.permute.xlu0 0
      %1088 = vperm.xlu0 %1087, %v946
      %v1089 = vpop.permute.xlu0 %1088
      %1092 = vset.pattern.permute.xlu0 0
      %1093 = vperm.xlu0 %1092, %v947
      %v1094 = vpop.permute.xlu0 %1093
      %1097 = vset.pattern.permute.xlu0 0
      %1098 = vperm.xlu0 %1097, %v948
      %v1099 = vpop.permute.xlu0 %1098
      %1102 = vset.pattern.permute.xlu0 0
      %1103 = vperm.xlu0 %1102, %v949
      %v1104 = vpop.permute.xlu0 %1103
      %1107 = vset.pattern.permute.xlu0 0
      %1108 = vperm.xlu0 %1107, %v950
      %v1109 = vpop.permute.xlu0 %1108
      %1112 = vset.pattern.permute.xlu0 0
      %1113 = vperm.xlu0 %1112, %v951
      %v1114 = vpop.permute.xlu0 %1113
      %1117 = vset.pattern.permute.xlu0 0
      %1118 = vperm.xlu0 %1117, %v952
      %v1119 = vpop.permute.xlu0 %1118
      %1122 = vset.pattern.permute.xlu0 0
      %1123 = vperm.xlu0 %1122, %v953
      %v1124 = vpop.permute.xlu0 %1123
      %1127 = vset.pattern.permute.xlu0 0
      %1128 = vperm.xlu0 %1127, %v954
      %v1129 = vpop.permute.xlu0 %1128
      %1132 = vset.pattern.permute.xlu0 0
      %1133 = vperm.xlu0 %1132, %v955
      %v1134 = vpop.permute.xlu0 %1133
      %1137 = vset.pattern.permute.xlu0 0
      %1138 = vperm.xlu0 %1137, %v956
      %v1139 = vpop.permute.xlu0 %1138
      %1142 = vset.pattern.permute.xlu0 0
      %1143 = vperm.xlu0 %1142, %v957
      %v1144 = vpop.permute.xlu0 %1143
      %1147 = vset.pattern.permute.xlu0 0
      %1148 = vperm.xlu0 %1147, %v958
      %v1149 = vpop.permute.xlu0 %1148
      %1152 = vset.pattern.permute.xlu0 0
      %1153 = vperm.xlu0 %1152, %v959
      %v1154 = vpop.permute.xlu0 %1153
      %1157 = vset.pattern.permute.xlu0 0
      %1158 = vperm.xlu0 %1157, %v960
      %v1159 = vpop.permute.xlu0 %1158
      %1162 = vset.pattern.permute.xlu0 0
      %1163 = vperm.xlu0 %1162, %v961
      %v1164 = vpop.permute.xlu0 %1163
      %1167 = vset.pattern.permute.xlu0 0
      %1168 = vperm.xlu0 %1167, %v962
      %v1169 = vpop.permute.xlu0 %1168
      %1172 = vset.pattern.permute.xlu0 0
      %1173 = vperm.xlu0 %1172, %v963
      %v1174 = vpop.permute.xlu0 %1173
      %1177 = vset.pattern.permute.xlu0 0
      %1178 = vperm.xlu0 %1177, %v964
      %v1179 = vpop.permute.xlu0 %1178
      %1182 = vset.pattern.permute.xlu0 0
      %1183 = vperm.xlu0 %1182, %v965
      %v1184 = vpop.permute.xlu0 %1183
      %1187 = vset.pattern.permute.xlu0 0
      %1188 = vperm.xlu0 %1187, %v966
      %v1189 = vpop.permute.xlu0 %1188
      %1192 = vset.pattern.permute.xlu0 0
      %1193 = vperm.xlu0 %1192, %v967
      %v1194 = vpop.permute.xlu0 %1193
      %1197 = vset.pattern.permute.xlu0 0
      %1198 = vperm.xlu0 %1197, %v968
      %v1199 = vpop.permute.xlu0 %1198
      %1202 = vset.pattern.permute.xlu0 0
      %1203 = vperm.xlu0 %1202, %v969
      %v1204 = vpop.permute.xlu0 %1203
      %1207 = vset.pattern.permute.xlu0 0
      %1208 = vperm.xlu0 %1207, %v970
      %v1209 = vpop.permute.xlu0 %1208
      %1212 = vset.pattern.permute.xlu0 0
      %1213 = vperm.xlu0 %1212, %v971
      %v1214 = vpop.permute.xlu0 %1213
      %1217 = vset.pattern.permute.xlu0 0
      %1218 = vperm.xlu0 %1217, %v972
      %v1219 = vpop.permute.xlu0 %1218
      %1222 = vset.pattern.permute.xlu0 0
      %1223 = vperm.xlu0 %1222, %v973
      %v1224 = vpop.permute.xlu0 %1223
      %1227 = vset.pattern.permute.xlu0 0
      %1228 = vperm.xlu0 %1227, %v974
      %v1229 = vpop.permute.xlu0 %1228
      %1232 = vset.pattern.permute.xlu0 0
      %1233 = vperm.xlu0 %1232, %v975
      %v1234 = vpop.permute.xlu0 %1233
      %1237 = vset.pattern.permute.xlu0 0
      %1238 = vperm.xlu0 %1237, %v976
      %v1239 = vpop.permute.xlu0 %1238
      %1242 = vset.pattern.permute.xlu0 0
      %1243 = vperm.xlu0 %1242, %v977
      %v1244 = vpop.permute.xlu0 %1243
      %1247 = vset.pattern.permute.xlu0 0
      %1248 = vperm.xlu0 %1247, %v978
      %v1249 = vpop.permute.xlu0 %1248
      %1252 = vset.pattern.permute.xlu0 0
      %1253 = vperm.xlu0 %1252, %v979
      %v1254 = vpop.permute.xlu0 %1253
      %1257 = vset.pattern.permute.xlu0 0
      %1258 = vperm.xlu0 %1257, %v980
      %v1259 = vpop.permute.xlu0 %1258
      %1262 = vset.pattern.permute.xlu0 0
      %1263 = vperm.xlu0 %1262, %v981
      %v1264 = vpop.permute.xlu0 %1263
      %1267 = vset.pattern.permute.xlu0 0
      %1268 = vperm.xlu0 %1267, %v982
      %v1269 = vpop.permute.xlu0 %1268
      %1272 = vset.pattern.permute.xlu0 0
      %1273 = vperm.xlu0 %1272, %v983
      %v1274 = vpop.permute.xlu0 %1273
      %1277 = vset.pattern.permute.xlu0 0
      %1278 = vperm.xlu0 %1277, %v984
      %v1279 = vpop.permute.xlu0 %1278
      %1282 = vset.pattern.permute.xlu0 0
      %1283 = vperm.xlu0 %1282, %v985
      %v1284 = vpop.permute.xlu0 %1283
      %1287 = vset.pattern.permute.xlu0 0
      %1288 = vperm.xlu0 %1287, %v986
      %v1289 = vpop.permute.xlu0 %1288
      %1292 = vset.pattern.permute.xlu0 0
      %1293 = vperm.xlu0 %1292, %v987
      %v1294 = vpop.permute.xlu0 %1293
      %1297 = vset.pattern.permute.xlu0 0
      %1298 = vperm.xlu0 %1297, %v988
      %v1299 = vpop.permute.xlu0 %1298
      %1302 = vset.pattern.permute.xlu0 0
      %1303 = vperm.xlu0 %1302, %v989
      %v1304 = vpop.permute.xlu0 %1303
      %1307 = vset.pattern.permute.xlu0 0
      %1308 = vperm.xlu0 %1307, %v990
      %v1309 = vpop.permute.xlu0 %1308
      %v1311 = vmul.f32 %v994, %v609
      %v1312 = vmul.f32 %v999, %v614
      %v1313 = vmul.f32 %v1004, %v619
      %v1314 = vmul.f32 %v1009, %v624
      %v1315 = vmul.f32 %v1014, %v629
      %v1316 = vmul.f32 %v1019, %v634
      %v1317 = vmul.f32 %v1024, %v639
      %v1318 = vmul.f32 %v1029, %v644
      %v1319 = vmul.f32 %v1034, %v649
      %v1320 = vmul.f32 %v1039, %v654
      %v1321 = vmul.f32 %v1044, %v659
      %v1322 = vmul.f32 %v1049, %v664
      %v1323 = vmul.f32 %v1054, %v669
      %v1324 = vmul.f32 %v1059, %v674
      %v1325 = vmul.f32 %v1064, %v679
      %v1326 = vmul.f32 %v1069, %v684
      %v1327 = vmul.f32 %v1074, %v689
      %v1328 = vmul.f32 %v1079, %v694
      %v1329 = vmul.f32 %v1084, %v699
      %v1330 = vmul.f32 %v1089, %v704
      %v1331 = vmul.f32 %v1094, %v709
      %v1332 = vmul.f32 %v1099, %v714
      %v1333 = vmul.f32 %v1104, %v719
      %v1334 = vmul.f32 %v1109, %v724
      %v1335 = vmul.f32 %v1114, %v729
      %v1336 = vmul.f32 %v1119, %v734
      %v1337 = vmul.f32 %v1124, %v739
      %v1338 = vmul.f32 %v1129, %v744
      %v1339 = vmul.f32 %v1134, %v749
      %v1340 = vmul.f32 %v1139, %v754
      %v1341 = vmul.f32 %v1144, %v759
      %v1342 = vmul.f32 %v1149, %v764
      %v1343 = vmul.f32 %v1154, %v769
      %v1344 = vmul.f32 %v1159, %v774
      %v1345 = vmul.f32 %v1164, %v779
      %v1346 = vmul.f32 %v1169, %v784
      %v1347 = vmul.f32 %v1174, %v789
      %v1348 = vmul.f32 %v1179, %v794
      %v1349 = vmul.f32 %v1184, %v799
      %v1350 = vmul.f32 %v1189, %v804
      %v1351 = vmul.f32 %v1194, %v809
      %v1352 = vmul.f32 %v1199, %v814
      %v1353 = vmul.f32 %v1204, %v819
      %v1354 = vmul.f32 %v1209, %v824
      %v1355 = vmul.f32 %v1214, %v829
      %v1356 = vmul.f32 %v1219, %v834
      %v1357 = vmul.f32 %v1224, %v839
      %v1358 = vmul.f32 %v1229, %v844
      %v1359 = vmul.f32 %v1234, %v849
      %v1360 = vmul.f32 %v1239, %v854
      %v1361 = vmul.f32 %v1244, %v859
      %v1362 = vmul.f32 %v1249, %v864
      %v1363 = vmul.f32 %v1254, %v869
      %v1364 = vmul.f32 %v1259, %v874
      %v1365 = vmul.f32 %v1264, %v879
      %v1366 = vmul.f32 %v1269, %v884
      %v1367 = vmul.f32 %v1274, %v889
      %v1368 = vmul.f32 %v1279, %v894
      %v1369 = vmul.f32 %v1284, %v899
      %v1370 = vmul.f32 %v1289, %v904
      %v1371 = vmul.f32 %v1294, %v909
      %v1372 = vmul.f32 %v1299, %v914
      %v1373 = vmul.f32 %v1304, %v919
      %v1374 = vmul.f32 %v1309, %v924
      %v1375 = vpack.c.bf16 %v1312, %v1311
      %v1376 = vpack.c.bf16 %v1314, %v1313
      %v1377 = vpack.c.bf16 %v1316, %v1315
      %v1378 = vpack.c.bf16 %v1318, %v1317
      %v1379 = vpack.c.bf16 %v1320, %v1319
      %v1380 = vpack.c.bf16 %v1322, %v1321
      %v1381 = vpack.c.bf16 %v1324, %v1323
      %v1382 = vpack.c.bf16 %v1326, %v1325
      %v1383 = vpack.c.bf16 %v1328, %v1327
      %v1384 = vpack.c.bf16 %v1330, %v1329
      %v1385 = vpack.c.bf16 %v1332, %v1331
      %v1386 = vpack.c.bf16 %v1334, %v1333
      %v1387 = vpack.c.bf16 %v1336, %v1335
      %v1388 = vpack.c.bf16 %v1338, %v1337
      %v1389 = vpack.c.bf16 %v1340, %v1339
      %v1390 = vpack.c.bf16 %v1342, %v1341
      %v1391 = vpack.c.bf16 %v1344, %v1343
      %v1392 = vpack.c.bf16 %v1346, %v1345
      %v1393 = vpack.c.bf16 %v1348, %v1347
      %v1394 = vpack.c.bf16 %v1350, %v1349
      %v1395 = vpack.c.bf16 %v1352, %v1351
      %v1396 = vpack.c.bf16 %v1354, %v1353
      %v1397 = vpack.c.bf16 %v1356, %v1355
      %v1398 = vpack.c.bf16 %v1358, %v1357
      %v1399 = vpack.c.bf16 %v1360, %v1359
      %v1400 = vpack.c.bf16 %v1362, %v1361
      %v1401 = vpack.c.bf16 %v1364, %v1363
      %v1402 = vpack.c.bf16 %v1366, %v1365
      %v1403 = vpack.c.bf16 %v1368, %v1367
      %v1404 = vpack.c.bf16 %v1370, %v1369
      %v1405 = vpack.c.bf16 %v1372, %v1371
      %v1406 = vpack.c.bf16 %v1374, %v1373
      %v1439 = vunpack.c.l.b16 %v1375
      %v1440 = vunpack.c.h.b16 %v1375
      %v1441 = vunpack.c.l.b16 %v1376
      %v1442 = vunpack.c.h.b16 %v1376
      %v1443 = vunpack.c.l.b16 %v1377
      %v1444 = vunpack.c.h.b16 %v1377
      %v1445 = vunpack.c.l.b16 %v1378
      %v1446 = vunpack.c.h.b16 %v1378
      %v1447 = vunpack.c.l.b16 %v1379
      %v1448 = vunpack.c.h.b16 %v1379
      %v1449 = vunpack.c.l.b16 %v1380
      %v1450 = vunpack.c.h.b16 %v1380
      %v1451 = vunpack.c.l.b16 %v1381
      %v1452 = vunpack.c.h.b16 %v1381
      %v1453 = vunpack.c.l.b16 %v1382
      %v1454 = vunpack.c.h.b16 %v1382
      %v1455 = vunpack.c.l.b16 %v1383
      %v1456 = vunpack.c.h.b16 %v1383
      %v1457 = vunpack.c.l.b16 %v1384
      %v1458 = vunpack.c.h.b16 %v1384
      %v1459 = vunpack.c.l.b16 %v1385
      %v1460 = vunpack.c.h.b16 %v1385
      %v1461 = vunpack.c.l.b16 %v1386
      %v1462 = vunpack.c.h.b16 %v1386
      %v1463 = vunpack.c.l.b16 %v1387
      %v1464 = vunpack.c.h.b16 %v1387
      %v1465 = vunpack.c.l.b16 %v1388
      %v1466 = vunpack.c.h.b16 %v1388
      %v1467 = vunpack.c.l.b16 %v1389
      %v1468 = vunpack.c.h.b16 %v1389
      %v1469 = vunpack.c.l.b16 %v1390
      %v1470 = vunpack.c.h.b16 %v1390
      %v1471 = vunpack.c.l.b16 %v1391
      %v1472 = vunpack.c.h.b16 %v1391
      %v1473 = vunpack.c.l.b16 %v1392
      %v1474 = vunpack.c.h.b16 %v1392
      %v1475 = vunpack.c.l.b16 %v1393
      %v1476 = vunpack.c.h.b16 %v1393
      %v1477 = vunpack.c.l.b16 %v1394
      %v1478 = vunpack.c.h.b16 %v1394
      %v1479 = vunpack.c.l.b16 %v1395
      %v1480 = vunpack.c.h.b16 %v1395
      %v1481 = vunpack.c.l.b16 %v1396
      %v1482 = vunpack.c.h.b16 %v1396
      %v1483 = vunpack.c.l.b16 %v1397
      %v1484 = vunpack.c.h.b16 %v1397
      %v1485 = vunpack.c.l.b16 %v1398
      %v1486 = vunpack.c.h.b16 %v1398
      %v1487 = vunpack.c.l.b16 %v1399
      %v1488 = vunpack.c.h.b16 %v1399
      %v1489 = vunpack.c.l.b16 %v1400
      %v1490 = vunpack.c.h.b16 %v1400
      %v1491 = vunpack.c.l.b16 %v1401
      %v1492 = vunpack.c.h.b16 %v1401
      %v1493 = vunpack.c.l.b16 %v1402
      %v1494 = vunpack.c.h.b16 %v1402
      %v1495 = vunpack.c.l.b16 %v1403
      %v1496 = vunpack.c.h.b16 %v1403
      %v1497 = vunpack.c.l.b16 %v1404
      %v1498 = vunpack.c.h.b16 %v1404
      %v1499 = vunpack.c.l.b16 %v1405
      %v1500 = vunpack.c.h.b16 %v1405
      %v1501 = vunpack.c.l.b16 %v1406
      %v1502 = vunpack.c.h.b16 %v1406
      %v1503 = vpack.c.b16 %v1439, %v1439
      %v1504 = vpack.c.b16 %v1440, %v1440
      %v1505 = vpack.c.b16 %v1441, %v1441
      %v1506 = vpack.c.b16 %v1442, %v1442
      %v1507 = vpack.c.b16 %v1443, %v1443
      %v1508 = vpack.c.b16 %v1444, %v1444
      %v1509 = vpack.c.b16 %v1445, %v1445
      %v1510 = vpack.c.b16 %v1446, %v1446
      %v1511 = vpack.c.b16 %v1447, %v1447
      %v1512 = vpack.c.b16 %v1448, %v1448
      %v1513 = vpack.c.b16 %v1449, %v1449
      %v1514 = vpack.c.b16 %v1450, %v1450
      %v1515 = vpack.c.b16 %v1451, %v1451
      %v1516 = vpack.c.b16 %v1452, %v1452
      %v1517 = vpack.c.b16 %v1453, %v1453
      %v1518 = vpack.c.b16 %v1454, %v1454
      %v1519 = vpack.c.b16 %v1455, %v1455
      %v1520 = vpack.c.b16 %v1456, %v1456
      %v1521 = vpack.c.b16 %v1457, %v1457
      %v1522 = vpack.c.b16 %v1458, %v1458
      %v1523 = vpack.c.b16 %v1459, %v1459
      %v1524 = vpack.c.b16 %v1460, %v1460
      %v1525 = vpack.c.b16 %v1461, %v1461
      %v1526 = vpack.c.b16 %v1462, %v1462
      %v1527 = vpack.c.b16 %v1463, %v1463
      %v1528 = vpack.c.b16 %v1464, %v1464
      %v1529 = vpack.c.b16 %v1465, %v1465
      %v1530 = vpack.c.b16 %v1466, %v1466
      %v1531 = vpack.c.b16 %v1467, %v1467
      %v1532 = vpack.c.b16 %v1468, %v1468
      %v1533 = vpack.c.b16 %v1469, %v1469
      %v1534 = vpack.c.b16 %v1470, %v1470
      %v1535 = vpack.c.b16 %v1471, %v1471
      %v1536 = vpack.c.b16 %v1472, %v1472
      %v1537 = vpack.c.b16 %v1473, %v1473
      %v1538 = vpack.c.b16 %v1474, %v1474
      %v1539 = vpack.c.b16 %v1475, %v1475
      %v1540 = vpack.c.b16 %v1476, %v1476
      %v1541 = vpack.c.b16 %v1477, %v1477
      %v1542 = vpack.c.b16 %v1478, %v1478
      %v1543 = vpack.c.b16 %v1479, %v1479
      %v1544 = vpack.c.b16 %v1480, %v1480
      %v1545 = vpack.c.b16 %v1481, %v1481
      %v1546 = vpack.c.b16 %v1482, %v1482
      %v1547 = vpack.c.b16 %v1483, %v1483
      %v1548 = vpack.c.b16 %v1484, %v1484
      %v1549 = vpack.c.b16 %v1485, %v1485
      %v1550 = vpack.c.b16 %v1486, %v1486
      %v1551 = vpack.c.b16 %v1487, %v1487
      %v1552 = vpack.c.b16 %v1488, %v1488
      %v1553 = vpack.c.b16 %v1489, %v1489
      %v1554 = vpack.c.b16 %v1490, %v1490
      %v1555 = vpack.c.b16 %v1491, %v1491
      %v1556 = vpack.c.b16 %v1492, %v1492
      %v1557 = vpack.c.b16 %v1493, %v1493
      %v1558 = vpack.c.b16 %v1494, %v1494
      %v1559 = vpack.c.b16 %v1495, %v1495
      %v1560 = vpack.c.b16 %v1496, %v1496
      %v1561 = vpack.c.b16 %v1497, %v1497
      %v1562 = vpack.c.b16 %v1498, %v1498
      %v1563 = vpack.c.b16 %v1499, %v1499
      %v1564 = vpack.c.b16 %v1500, %v1500
      %v1565 = vpack.c.b16 %v1501, %v1501
      %v1566 = vpack.c.b16 %v1502, %v1502
      %1631 = vst [vmem:[%s276] sm:$0xf] %v1503
      %1632 = vst [vmem:[%s276 + $0x4] sm:$0xf] %v1504
      %1633 = vst [vmem:[%s276 + $0x8] sm:$0xf] %v1505
      %1634 = vst [vmem:[%s276 + $0xc] sm:$0xf] %v1506
      %1635 = vst [vmem:[%s276 + $0x10] sm:$0xf] %v1507
      %1636 = vst [vmem:[%s276 + $0x14] sm:$0xf] %v1508
      %1637 = vst [vmem:[%s276 + $0x18] sm:$0xf] %v1509
      %1638 = vst [vmem:[%s276 + $0x1c] sm:$0xf] %v1510
      %1639 = vst [vmem:[%s276 + $0x20] sm:$0xf] %v1511
      %1640 = vst [vmem:[%s276 + $0x24] sm:$0xf] %v1512
      %1641 = vst [vmem:[%s276 + $0x28] sm:$0xf] %v1513
      %1642 = vst [vmem:[%s276 + $0x2c] sm:$0xf] %v1514
      %1643 = vst [vmem:[%s276 + $0x30] sm:$0xf] %v1515
      %1644 = vst [vmem:[%s276 + $0x34] sm:$0xf] %v1516
      %1645 = vst [vmem:[%s276 + $0x38] sm:$0xf] %v1517
      %1646 = vst [vmem:[%s276 + $0x3c] sm:$0xf] %v1518
      %1647 = vst [vmem:[%s276 + $0x40] sm:$0xf] %v1519
      %1648 = vst [vmem:[%s276 + $0x44] sm:$0xf] %v1520
      %1649 = vst [vmem:[%s276 + $0x48] sm:$0xf] %v1521
      %1650 = vst [vmem:[%s276 + $0x4c] sm:$0xf] %v1522
      %1651 = vst [vmem:[%s276 + $0x50] sm:$0xf] %v1523
      %1652 = vst [vmem:[%s276 + $0x54] sm:$0xf] %v1524
      %1653 = vst [vmem:[%s276 + $0x58] sm:$0xf] %v1525
      %1654 = vst [vmem:[%s276 + $0x5c] sm:$0xf] %v1526
      %1655 = vst [vmem:[%s276 + $0x60] sm:$0xf] %v1527
      %1656 = vst [vmem:[%s276 + $0x64] sm:$0xf] %v1528
      %1657 = vst [vmem:[%s276 + $0x68] sm:$0xf] %v1529
      %1658 = vst [vmem:[%s276 + $0x6c] sm:$0xf] %v1530
      %1659 = vst [vmem:[%s276 + $0x70] sm:$0xf] %v1531
      %1660 = vst [vmem:[%s276 + $0x74] sm:$0xf] %v1532
      %1661 = vst [vmem:[%s276 + $0x78] sm:$0xf] %v1533
      %1662 = vst [vmem:[%s276 + $0x7c] sm:$0xf] %v1534
      %1663 = vst [vmem:[%s276 + $0x80] sm:$0xf] %v1535
      %1664 = vst [vmem:[%s276 + $0x84] sm:$0xf] %v1536
      %1665 = vst [vmem:[%s276 + $0x88] sm:$0xf] %v1537
      %1666 = vst [vmem:[%s276 + $0x8c] sm:$0xf] %v1538
      %1667 = vst [vmem:[%s276 + $0x90] sm:$0xf] %v1539
      %1668 = vst [vmem:[%s276 + $0x94] sm:$0xf] %v1540
      %1669 = vst [vmem:[%s276 + $0x98] sm:$0xf] %v1541
      %1670 = vst [vmem:[%s276 + $0x9c] sm:$0xf] %v1542
      %1671 = vst [vmem:[%s276 + $0xa0] sm:$0xf] %v1543
      %1672 = vst [vmem:[%s276 + $0xa4] sm:$0xf] %v1544
      %1673 = vst [vmem:[%s276 + $0xa8] sm:$0xf] %v1545
      %1674 = vst [vmem:[%s276 + $0xac] sm:$0xf] %v1546
      %1675 = vst [vmem:[%s276 + $0xb0] sm:$0xf] %v1547
      %1676 = vst [vmem:[%s276 + $0xb4] sm:$0xf] %v1548
      %1677 = vst [vmem:[%s276 + $0xb8] sm:$0xf] %v1549
      %1678 = vst [vmem:[%s276 + $0xbc] sm:$0xf] %v1550
      %1679 = vst [vmem:[%s276 + $0xc0] sm:$0xf] %v1551
      %1680 = vst [vmem:[%s276 + $0xc4] sm:$0xf] %v1552
      %1681 = vst [vmem:[%s276 + $0xc8] sm:$0xf] %v1553
      %1682 = vst [vmem:[%s276 + $0xcc] sm:$0xf] %v1554
      %1683 = vst [vmem:[%s276 + $0xd0] sm:$0xf] %v1555
      %1684 = vst [vmem:[%s276 + $0xd4] sm:$0xf] %v1556
      %1685 = vst [vmem:[%s276 + $0xd8] sm:$0xf] %v1557
      %1686 = vst [vmem:[%s276 + $0xdc] sm:$0xf] %v1558
      %1687 = vst [vmem:[%s276 + $0xe0] sm:$0xf] %v1559
      %1688 = vst [vmem:[%s276 + $0xe4] sm:$0xf] %v1560
      %1689 = vst [vmem:[%s276 + $0xe8] sm:$0xf] %v1561
      %1690 = vst [vmem:[%s276 + $0xec] sm:$0xf] %v1562
      %1691 = vst [vmem:[%s276 + $0xf0] sm:$0xf] %v1563
      %1692 = vst [vmem:[%s276 + $0xf4] sm:$0xf] %v1564
      %1693 = vst [vmem:[%s276 + $0xf8] sm:$0xf] %v1565
      %1694 = vst [vmem:[%s276 + $0xfc] sm:$0xf] %v1566
      %v1695 = vld [vmem:[%s270] sm:$0xff]
      %v1696 = vld [vmem:[%s270 + $0x8] sm:$0xff]
      %v1697 = vld [vmem:[%s270 + $0x10] sm:$0xff]
      %v1698 = vld [vmem:[%s270 + $0x18] sm:$0xff]
      %v1699 = vld [vmem:[%s270 + $0x20] sm:$0xff]
      %v1700 = vld [vmem:[%s270 + $0x28] sm:$0xff]
      %v1701 = vld [vmem:[%s270 + $0x30] sm:$0xff]
      %v1702 = vld [vmem:[%s270 + $0x38] sm:$0xff]
      %v1703 = vld [vmem:[%s270 + $0x40] sm:$0xff]
      %v1704 = vld [vmem:[%s270 + $0x48] sm:$0xff]
      %v1705 = vld [vmem:[%s270 + $0x50] sm:$0xff]
      %v1706 = vld [vmem:[%s270 + $0x58] sm:$0xff]
      %v1707 = vld [vmem:[%s270 + $0x60] sm:$0xff]
      %v1708 = vld [vmem:[%s270 + $0x68] sm:$0xff]
      %v1709 = vld [vmem:[%s270 + $0x70] sm:$0xff]
      %v1710 = vld [vmem:[%s270 + $0x78] sm:$0xff]
      %v1711 = vld [vmem:[%s270 + $0x80] sm:$0xff]
      %v1712 = vld [vmem:[%s270 + $0x88] sm:$0xff]
      %v1713 = vld [vmem:[%s270 + $0x90] sm:$0xff]
      %v1714 = vld [vmem:[%s270 + $0x98] sm:$0xff]
      %v1715 = vld [vmem:[%s270 + $0xa0] sm:$0xff]
      %v1716 = vld [vmem:[%s270 + $0xa8] sm:$0xff]
      %v1717 = vld [vmem:[%s270 + $0xb0] sm:$0xff]
      %v1718 = vld [vmem:[%s270 + $0xb8] sm:$0xff]
      %v1719 = vld [vmem:[%s270 + $0xc0] sm:$0xff]
      %v1720 = vld [vmem:[%s270 + $0xc8] sm:$0xff]
      %v1721 = vld [vmem:[%s270 + $0xd0] sm:$0xff]
      %v1722 = vld [vmem:[%s270 + $0xd8] sm:$0xff]
      %v1723 = vld [vmem:[%s270 + $0xe0] sm:$0xff]
      %v1724 = vld [vmem:[%s270 + $0xe8] sm:$0xff]
      %v1725 = vld [vmem:[%s270 + $0xf0] sm:$0xff]
      %v1726 = vld [vmem:[%s270 + $0xf8] sm:$0xff]
      %v1727 = vld [vmem:[%s270 + $0x100] sm:$0xff]
      %v1728 = vld [vmem:[%s270 + $0x108] sm:$0xff]
      %v1729 = vld [vmem:[%s270 + $0x110] sm:$0xff]
      %v1730 = vld [vmem:[%s270 + $0x118] sm:$0xff]
      %v1731 = vld [vmem:[%s270 + $0x120] sm:$0xff]
      %v1732 = vld [vmem:[%s270 + $0x128] sm:$0xff]
      %v1733 = vld [vmem:[%s270 + $0x130] sm:$0xff]
      %v1734 = vld [vmem:[%s270 + $0x138] sm:$0xff]
      %v1735 = vld [vmem:[%s270 + $0x140] sm:$0xff]
      %v1736 = vld [vmem:[%s270 + $0x148] sm:$0xff]
      %v1737 = vld [vmem:[%s270 + $0x150] sm:$0xff]
      %v1738 = vld [vmem:[%s270 + $0x158] sm:$0xff]
      %v1739 = vld [vmem:[%s270 + $0x160] sm:$0xff]
      %v1740 = vld [vmem:[%s270 + $0x168] sm:$0xff]
      %v1741 = vld [vmem:[%s270 + $0x170] sm:$0xff]
      %v1742 = vld [vmem:[%s270 + $0x178] sm:$0xff]
      %v1743 = vld [vmem:[%s270 + $0x180] sm:$0xff]
      %v1744 = vld [vmem:[%s270 + $0x188] sm:$0xff]
      %v1745 = vld [vmem:[%s270 + $0x190] sm:$0xff]
      %v1746 = vld [vmem:[%s270 + $0x198] sm:$0xff]
      %v1747 = vld [vmem:[%s270 + $0x1a0] sm:$0xff]
      %v1748 = vld [vmem:[%s270 + $0x1a8] sm:$0xff]
      %v1749 = vld [vmem:[%s270 + $0x1b0] sm:$0xff]
      %v1750 = vld [vmem:[%s270 + $0x1b8] sm:$0xff]
      %v1751 = vld [vmem:[%s270 + $0x1c0] sm:$0xff]
      %v1752 = vld [vmem:[%s270 + $0x1c8] sm:$0xff]
      %v1753 = vld [vmem:[%s270 + $0x1d0] sm:$0xff]
      %v1754 = vld [vmem:[%s270 + $0x1d8] sm:$0xff]
      %v1755 = vld [vmem:[%s270 + $0x1e0] sm:$0xff]
      %v1756 = vld [vmem:[%s270 + $0x1e8] sm:$0xff]
      %v1757 = vld [vmem:[%s270 + $0x1f0] sm:$0xff]
      %v1758 = vld [vmem:[%s270 + $0x1f8] sm:$0xff]
      %v1759 = vunpack.c.l.bf16 %v1375
      %v1760 = vunpack.c.h.bf16 %v1375
      %v1761 = vunpack.c.l.bf16 %v1376
      %v1762 = vunpack.c.h.bf16 %v1376
      %v1763 = vunpack.c.l.bf16 %v1377
      %v1764 = vunpack.c.h.bf16 %v1377
      %v1765 = vunpack.c.l.bf16 %v1378
      %v1766 = vunpack.c.h.bf16 %v1378
      %v1767 = vunpack.c.l.bf16 %v1379
      %v1768 = vunpack.c.h.bf16 %v1379
      %v1769 = vunpack.c.l.bf16 %v1380
      %v1770 = vunpack.c.h.bf16 %v1380
      %v1771 = vunpack.c.l.bf16 %v1381
      %v1772 = vunpack.c.h.bf16 %v1381
      %v1773 = vunpack.c.l.bf16 %v1382
      %v1774 = vunpack.c.h.bf16 %v1382
      %v1775 = vunpack.c.l.bf16 %v1383
      %v1776 = vunpack.c.h.bf16 %v1383
      %v1777 = vunpack.c.l.bf16 %v1384
      %v1778 = vunpack.c.h.bf16 %v1384
      %v1779 = vunpack.c.l.bf16 %v1385
      %v1780 = vunpack.c.h.bf16 %v1385
      %v1781 = vunpack.c.l.bf16 %v1386
      %v1782 = vunpack.c.h.bf16 %v1386
      %v1783 = vunpack.c.l.bf16 %v1387
      %v1784 = vunpack.c.h.bf16 %v1387
      %v1785 = vunpack.c.l.bf16 %v1388
      %v1786 = vunpack.c.h.bf16 %v1388
      %v1787 = vunpack.c.l.bf16 %v1389
      %v1788 = vunpack.c.h.bf16 %v1389
      %v1789 = vunpack.c.l.bf16 %v1390
      %v1790 = vunpack.c.h.bf16 %v1390
      %v1791 = vunpack.c.l.bf16 %v1391
      %v1792 = vunpack.c.h.bf16 %v1391
      %v1793 = vunpack.c.l.bf16 %v1392
      %v1794 = vunpack.c.h.bf16 %v1392
      %v1795 = vunpack.c.l.bf16 %v1393
      %v1796 = vunpack.c.h.bf16 %v1393
      %v1797 = vunpack.c.l.bf16 %v1394
      %v1798 = vunpack.c.h.bf16 %v1394
      %v1799 = vunpack.c.l.bf16 %v1395
      %v1800 = vunpack.c.h.bf16 %v1395
      %v1801 = vunpack.c.l.bf16 %v1396
      %v1802 = vunpack.c.h.bf16 %v1396
      %v1803 = vunpack.c.l.bf16 %v1397
      %v1804 = vunpack.c.h.bf16 %v1397
      %v1805 = vunpack.c.l.bf16 %v1398
      %v1806 = vunpack.c.h.bf16 %v1398
      %v1807 = vunpack.c.l.bf16 %v1399
      %v1808 = vunpack.c.h.bf16 %v1399
      %v1809 = vunpack.c.l.bf16 %v1400
      %v1810 = vunpack.c.h.bf16 %v1400
      %v1811 = vunpack.c.l.bf16 %v1401
      %v1812 = vunpack.c.h.bf16 %v1401
      %v1813 = vunpack.c.l.bf16 %v1402
      %v1814 = vunpack.c.h.bf16 %v1402
      %v1815 = vunpack.c.l.bf16 %v1403
      %v1816 = vunpack.c.h.bf16 %v1403
      %v1817 = vunpack.c.l.bf16 %v1404
      %v1818 = vunpack.c.h.bf16 %v1404
      %v1819 = vunpack.c.l.bf16 %v1405
      %v1820 = vunpack.c.h.bf16 %v1405
      %v1821 = vunpack.c.l.bf16 %v1406
      %v1822 = vunpack.c.h.bf16 %v1406
      %1824 = vset.pattern.permute.xlu0 0
      %1825 = vperm.xlu0 %1824, %v1695
      %v1826 = vpop.permute.xlu0 %1825
      %1829 = vset.pattern.permute.xlu0 0
      %1830 = vperm.xlu0 %1829, %v1696
      %v1831 = vpop.permute.xlu0 %1830
      %1834 = vset.pattern.permute.xlu0 0
      %1835 = vperm.xlu0 %1834, %v1697
      %v1836 = vpop.permute.xlu0 %1835
      %1839 = vset.pattern.permute.xlu0 0
      %1840 = vperm.xlu0 %1839, %v1698
      %v1841 = vpop.permute.xlu0 %1840
      %1844 = vset.pattern.permute.xlu0 0
      %1845 = vperm.xlu0 %1844, %v1699
      %v1846 = vpop.permute.xlu0 %1845
      %1849 = vset.pattern.permute.xlu0 0
      %1850 = vperm.xlu0 %1849, %v1700
      %v1851 = vpop.permute.xlu0 %1850
      %1854 = vset.pattern.permute.xlu0 0
      %1855 = vperm.xlu0 %1854, %v1701
      %v1856 = vpop.permute.xlu0 %1855
      %1859 = vset.pattern.permute.xlu0 0
      %1860 = vperm.xlu0 %1859, %v1702
      %v1861 = vpop.permute.xlu0 %1860
      %1864 = vset.pattern.permute.xlu0 0
      %1865 = vperm.xlu0 %1864, %v1703
      %v1866 = vpop.permute.xlu0 %1865
      %1869 = vset.pattern.permute.xlu0 0
      %1870 = vperm.xlu0 %1869, %v1704
      %v1871 = vpop.permute.xlu0 %1870
      %1874 = vset.pattern.permute.xlu0 0
      %1875 = vperm.xlu0 %1874, %v1705
      %v1876 = vpop.permute.xlu0 %1875
      %1879 = vset.pattern.permute.xlu0 0
      %1880 = vperm.xlu0 %1879, %v1706
      %v1881 = vpop.permute.xlu0 %1880
      %1884 = vset.pattern.permute.xlu0 0
      %1885 = vperm.xlu0 %1884, %v1707
      %v1886 = vpop.permute.xlu0 %1885
      %1889 = vset.pattern.permute.xlu0 0
      %1890 = vperm.xlu0 %1889, %v1708
      %v1891 = vpop.permute.xlu0 %1890
      %1894 = vset.pattern.permute.xlu0 0
      %1895 = vperm.xlu0 %1894, %v1709
      %v1896 = vpop.permute.xlu0 %1895
      %1899 = vset.pattern.permute.xlu0 0
      %1900 = vperm.xlu0 %1899, %v1710
      %v1901 = vpop.permute.xlu0 %1900
      %1904 = vset.pattern.permute.xlu0 0
      %1905 = vperm.xlu0 %1904, %v1711
      %v1906 = vpop.permute.xlu0 %1905
      %1909 = vset.pattern.permute.xlu0 0
      %1910 = vperm.xlu0 %1909, %v1712
      %v1911 = vpop.permute.xlu0 %1910
      %1914 = vset.pattern.permute.xlu0 0
      %1915 = vperm.xlu0 %1914, %v1713
      %v1916 = vpop.permute.xlu0 %1915
      %1919 = vset.pattern.permute.xlu0 0
      %1920 = vperm.xlu0 %1919, %v1714
      %v1921 = vpop.permute.xlu0 %1920
      %1924 = vset.pattern.permute.xlu0 0
      %1925 = vperm.xlu0 %1924, %v1715
      %v1926 = vpop.permute.xlu0 %1925
      %1929 = vset.pattern.permute.xlu0 0
      %1930 = vperm.xlu0 %1929, %v1716
      %v1931 = vpop.permute.xlu0 %1930
      %1934 = vset.pattern.permute.xlu0 0
      %1935 = vperm.xlu0 %1934, %v1717
      %v1936 = vpop.permute.xlu0 %1935
      %1939 = vset.pattern.permute.xlu0 0
      %1940 = vperm.xlu0 %1939, %v1718
      %v1941 = vpop.permute.xlu0 %1940
      %1944 = vset.pattern.permute.xlu0 0
      %1945 = vperm.xlu0 %1944, %v1719
      %v1946 = vpop.permute.xlu0 %1945
      %1949 = vset.pattern.permute.xlu0 0
      %1950 = vperm.xlu0 %1949, %v1720
      %v1951 = vpop.permute.xlu0 %1950
      %1954 = vset.pattern.permute.xlu0 0
      %1955 = vperm.xlu0 %1954, %v1721
      %v1956 = vpop.permute.xlu0 %1955
      %1959 = vset.pattern.permute.xlu0 0
      %1960 = vperm.xlu0 %1959, %v1722
      %v1961 = vpop.permute.xlu0 %1960
      %1964 = vset.pattern.permute.xlu0 0
      %1965 = vperm.xlu0 %1964, %v1723
      %v1966 = vpop.permute.xlu0 %1965
      %1969 = vset.pattern.permute.xlu0 0
      %1970 = vperm.xlu0 %1969, %v1724
      %v1971 = vpop.permute.xlu0 %1970
      %1974 = vset.pattern.permute.xlu0 0
      %1975 = vperm.xlu0 %1974, %v1725
      %v1976 = vpop.permute.xlu0 %1975
      %1979 = vset.pattern.permute.xlu0 0
      %1980 = vperm.xlu0 %1979, %v1726
      %v1981 = vpop.permute.xlu0 %1980
      %1984 = vset.pattern.permute.xlu0 0
      %1985 = vperm.xlu0 %1984, %v1727
      %v1986 = vpop.permute.xlu0 %1985
      %1989 = vset.pattern.permute.xlu0 0
      %1990 = vperm.xlu0 %1989, %v1728
      %v1991 = vpop.permute.xlu0 %1990
      %1994 = vset.pattern.permute.xlu0 0
      %1995 = vperm.xlu0 %1994, %v1729
      %v1996 = vpop.permute.xlu0 %1995
      %1999 = vset.pattern.permute.xlu0 0
      %2000 = vperm.xlu0 %1999, %v1730
      %v2001 = vpop.permute.xlu0 %2000
      %2004 = vset.pattern.permute.xlu0 0
      %2005 = vperm.xlu0 %2004, %v1731
      %v2006 = vpop.permute.xlu0 %2005
      %2009 = vset.pattern.permute.xlu0 0
      %2010 = vperm.xlu0 %2009, %v1732
      %v2011 = vpop.permute.xlu0 %2010
      %2014 = vset.pattern.permute.xlu0 0
      %2015 = vperm.xlu0 %2014, %v1733
      %v2016 = vpop.permute.xlu0 %2015
      %2019 = vset.pattern.permute.xlu0 0
      %2020 = vperm.xlu0 %2019, %v1734
      %v2021 = vpop.permute.xlu0 %2020
      %2024 = vset.pattern.permute.xlu0 0
      %2025 = vperm.xlu0 %2024, %v1735
      %v2026 = vpop.permute.xlu0 %2025
      %2029 = vset.pattern.permute.xlu0 0
      %2030 = vperm.xlu0 %2029, %v1736
      %v2031 = vpop.permute.xlu0 %2030
      %2034 = vset.pattern.permute.xlu0 0
      %2035 = vperm.xlu0 %2034, %v1737
      %v2036 = vpop.permute.xlu0 %2035
      %2039 = vset.pattern.permute.xlu0 0
      %2040 = vperm.xlu0 %2039, %v1738
      %v2041 = vpop.permute.xlu0 %2040
      %2044 = vset.pattern.permute.xlu0 0
      %2045 = vperm.xlu0 %2044, %v1739
      %v2046 = vpop.permute.xlu0 %2045
      %2049 = vset.pattern.permute.xlu0 0
      %2050 = vperm.xlu0 %2049, %v1740
      %v2051 = vpop.permute.xlu0 %2050
      %2054 = vset.pattern.permute.xlu0 0
      %2055 = vperm.xlu0 %2054, %v1741
      %v2056 = vpop.permute.xlu0 %2055
      %2059 = vset.pattern.permute.xlu0 0
      %2060 = vperm.xlu0 %2059, %v1742
      %v2061 = vpop.permute.xlu0 %2060
      %2064 = vset.pattern.permute.xlu0 0
      %2065 = vperm.xlu0 %2064, %v1743
      %v2066 = vpop.permute.xlu0 %2065
      %2069 = vset.pattern.permute.xlu0 0
      %2070 = vperm.xlu0 %2069, %v1744
      %v2071 = vpop.permute.xlu0 %2070
      %2074 = vset.pattern.permute.xlu0 0
      %2075 = vperm.xlu0 %2074, %v1745
      %v2076 = vpop.permute.xlu0 %2075
      %2079 = vset.pattern.permute.xlu0 0
      %2080 = vperm.xlu0 %2079, %v1746
      %v2081 = vpop.permute.xlu0 %2080
      %2084 = vset.pattern.permute.xlu0 0
      %2085 = vperm.xlu0 %2084, %v1747
      %v2086 = vpop.permute.xlu0 %2085
      %2089 = vset.pattern.permute.xlu0 0
      %2090 = vperm.xlu0 %2089, %v1748
      %v2091 = vpop.permute.xlu0 %2090
      %2094 = vset.pattern.permute.xlu0 0
      %2095 = vperm.xlu0 %2094, %v1749
      %v2096 = vpop.permute.xlu0 %2095
      %2099 = vset.pattern.permute.xlu0 0
      %2100 = vperm.xlu0 %2099, %v1750
      %v2101 = vpop.permute.xlu0 %2100
      %2104 = vset.pattern.permute.xlu0 0
      %2105 = vperm.xlu0 %2104, %v1751
      %v2106 = vpop.permute.xlu0 %2105
      %2109 = vset.pattern.permute.xlu0 0
      %2110 = vperm.xlu0 %2109, %v1752
      %v2111 = vpop.permute.xlu0 %2110
      %2114 = vset.pattern.permute.xlu0 0
      %2115 = vperm.xlu0 %2114, %v1753
      %v2116 = vpop.permute.xlu0 %2115
      %2119 = vset.pattern.permute.xlu0 0
      %2120 = vperm.xlu0 %2119, %v1754
      %v2121 = vpop.permute.xlu0 %2120
      %2124 = vset.pattern.permute.xlu0 0
      %2125 = vperm.xlu0 %2124, %v1755
      %v2126 = vpop.permute.xlu0 %2125
      %2129 = vset.pattern.permute.xlu0 0
      %2130 = vperm.xlu0 %2129, %v1756
      %v2131 = vpop.permute.xlu0 %2130
      %2134 = vset.pattern.permute.xlu0 0
      %2135 = vperm.xlu0 %2134, %v1757
      %v2136 = vpop.permute.xlu0 %2135
      %2139 = vset.pattern.permute.xlu0 0
      %2140 = vperm.xlu0 %2139, %v1758
      %v2141 = vpop.permute.xlu0 %2140
      %v2143 = vmul.f32 %v1826, %v1759
      %v2144 = vmul.f32 %v1831, %v1760
      %v2145 = vmul.f32 %v1836, %v1761
      %v2146 = vmul.f32 %v1841, %v1762
      %v2147 = vmul.f32 %v1846, %v1763
      %v2148 = vmul.f32 %v1851, %v1764
      %v2149 = vmul.f32 %v1856, %v1765
      %v2150 = vmul.f32 %v1861, %v1766
      %v2151 = vmul.f32 %v1866, %v1767
      %v2152 = vmul.f32 %v1871, %v1768
      %v2153 = vmul.f32 %v1876, %v1769
      %v2154 = vmul.f32 %v1881, %v1770
      %v2155 = vmul.f32 %v1886, %v1771
      %v2156 = vmul.f32 %v1891, %v1772
      %v2157 = vmul.f32 %v1896, %v1773
      %v2158 = vmul.f32 %v1901, %v1774
      %v2159 = vmul.f32 %v1906, %v1775
      %v2160 = vmul.f32 %v1911, %v1776
      %v2161 = vmul.f32 %v1916, %v1777
      %v2162 = vmul.f32 %v1921, %v1778
      %v2163 = vmul.f32 %v1926, %v1779
      %v2164 = vmul.f32 %v1931, %v1780
      %v2165 = vmul.f32 %v1936, %v1781
      %v2166 = vmul.f32 %v1941, %v1782
      %v2167 = vmul.f32 %v1946, %v1783
      %v2168 = vmul.f32 %v1951, %v1784
      %v2169 = vmul.f32 %v1956, %v1785
      %v2170 = vmul.f32 %v1961, %v1786
      %v2171 = vmul.f32 %v1966, %v1787
      %v2172 = vmul.f32 %v1971, %v1788
      %v2173 = vmul.f32 %v1976, %v1789
      %v2174 = vmul.f32 %v1981, %v1790
      %v2175 = vmul.f32 %v1986, %v1791
      %v2176 = vmul.f32 %v1991, %v1792
      %v2177 = vmul.f32 %v1996, %v1793
      %v2178 = vmul.f32 %v2001, %v1794
      %v2179 = vmul.f32 %v2006, %v1795
      %v2180 = vmul.f32 %v2011, %v1796
      %v2181 = vmul.f32 %v2016, %v1797
      %v2182 = vmul.f32 %v2021, %v1798
      %v2183 = vmul.f32 %v2026, %v1799
      %v2184 = vmul.f32 %v2031, %v1800
      %v2185 = vmul.f32 %v2036, %v1801
      %v2186 = vmul.f32 %v2041, %v1802
      %v2187 = vmul.f32 %v2046, %v1803
      %v2188 = vmul.f32 %v2051, %v1804
      %v2189 = vmul.f32 %v2056, %v1805
      %v2190 = vmul.f32 %v2061, %v1806
      %v2191 = vmul.f32 %v2066, %v1807
      %v2192 = vmul.f32 %v2071, %v1808
      %v2193 = vmul.f32 %v2076, %v1809
      %v2194 = vmul.f32 %v2081, %v1810
      %v2195 = vmul.f32 %v2086, %v1811
      %v2196 = vmul.f32 %v2091, %v1812
      %v2197 = vmul.f32 %v2096, %v1813
      %v2198 = vmul.f32 %v2101, %v1814
      %v2199 = vmul.f32 %v2106, %v1815
      %v2200 = vmul.f32 %v2111, %v1816
      %v2201 = vmul.f32 %v2116, %v1817
      %v2202 = vmul.f32 %v2121, %v1818
      %v2203 = vmul.f32 %v2126, %v1819
      %v2204 = vmul.f32 %v2131, %v1820
      %v2205 = vmul.f32 %v2136, %v1821
      %v2206 = vmul.f32 %v2141, %v1822
      %v2207 = vadd.f32 %v2143, %v2144
      %v2208 = vadd.f32 %v2207, %v2145
      %v2209 = vadd.f32 %v2208, %v2146
      %v2210 = vadd.f32 %v2209, %v2147
      %v2211 = vadd.f32 %v2210, %v2148
      %v2212 = vadd.f32 %v2211, %v2149
      %v2213 = vadd.f32 %v2212, %v2150
      %v2214 = vadd.f32 %v2213, %v2151
      %v2215 = vadd.f32 %v2214, %v2152
      %v2216 = vadd.f32 %v2215, %v2153
      %v2217 = vadd.f32 %v2216, %v2154
      %v2218 = vadd.f32 %v2217, %v2155
      %v2219 = vadd.f32 %v2218, %v2156
      %v2220 = vadd.f32 %v2219, %v2157
      %v2221 = vadd.f32 %v2220, %v2158
      %v2222 = vadd.f32 %v2221, %v2159
      %v2223 = vadd.f32 %v2222, %v2160
      %v2224 = vadd.f32 %v2223, %v2161
      %v2225 = vadd.f32 %v2224, %v2162
      %v2226 = vadd.f32 %v2225, %v2163
      %v2227 = vadd.f32 %v2226, %v2164
      %v2228 = vadd.f32 %v2227, %v2165
      %v2229 = vadd.f32 %v2228, %v2166
      %v2230 = vadd.f32 %v2229, %v2167
      %v2231 = vadd.f32 %v2230, %v2168
      %v2232 = vadd.f32 %v2231, %v2169
      %v2233 = vadd.f32 %v2232, %v2170
      %v2234 = vadd.f32 %v2233, %v2171
      %v2235 = vadd.f32 %v2234, %v2172
      %v2236 = vadd.f32 %v2235, %v2173
      %v2237 = vadd.f32 %v2236, %v2174
      %v2238 = vadd.f32 %v2237, %v2175
      %v2239 = vadd.f32 %v2238, %v2176
      %v2240 = vadd.f32 %v2239, %v2177
      %v2241 = vadd.f32 %v2240, %v2178
      %v2242 = vadd.f32 %v2241, %v2179
      %v2243 = vadd.f32 %v2242, %v2180
      %v2244 = vadd.f32 %v2243, %v2181
      %v2245 = vadd.f32 %v2244, %v2182
      %v2246 = vadd.f32 %v2245, %v2183
      %v2247 = vadd.f32 %v2246, %v2184
      %v2248 = vadd.f32 %v2247, %v2185
      %v2249 = vadd.f32 %v2248, %v2186
      %v2250 = vadd.f32 %v2249, %v2187
      %v2251 = vadd.f32 %v2250, %v2188
      %v2252 = vadd.f32 %v2251, %v2189
      %v2253 = vadd.f32 %v2252, %v2190
      %v2254 = vadd.f32 %v2253, %v2191
      %v2255 = vadd.f32 %v2254, %v2192
      %v2256 = vadd.f32 %v2255, %v2193
      %v2257 = vadd.f32 %v2256, %v2194
      %v2258 = vadd.f32 %v2257, %v2195
      %v2259 = vadd.f32 %v2258, %v2196
      %v2260 = vadd.f32 %v2259, %v2197
      %v2261 = vadd.f32 %v2260, %v2198
      %v2262 = vadd.f32 %v2261, %v2199
      %v2263 = vadd.f32 %v2262, %v2200
      %v2264 = vadd.f32 %v2263, %v2201
      %v2265 = vadd.f32 %v2264, %v2202
      %v2266 = vadd.f32 %v2265, %v2203
      %v2267 = vadd.f32 %v2266, %v2204
      %v2268 = vadd.f32 %v2267, %v2205
      %v2269 = vadd.f32 %v2268, %v2206
      %v2270 = vrot.slane %v2269, 4
      %v2271 = vadd.f32 %v2269, %v2270
      %v2272 = vrot.slane %v2271, 2
      %v2273 = vadd.f32 %v2271, %v2272
      %v2274 = vrot.slane %v2273, 1
      %v2275 = vadd.f32 %v2273, %v2274
      %2276 = vst [vmem:[%s280] sm:$0x1] %v2275
      %s2277 = smul.u32 64, %s17
      %p2278 = scmp.lt.s32.totalorder %s2277, 127
      %s2279 = scalar_select %p2278, %s2277, 127
      %s2280 = smul.addr %s2279, 4
      %s2281 = scalar_lea.vmem %s4, %s2280
      %p2282 = scmp.lt.s32.totalorder %s17, 1
      %s2283 = scalar_select %p2282, %s17, 1
      %s2284 = scalar_lea.vmem %s5, %s2283
      // Predicated region
      $region37: #{gcn_layer_forward.3} parent=35 // pred_check
        %p2285 = pneg %p134
      $region38: #{gcn_layer_forward.3} parent=35 // pred_check_branch
        %2287 = sbr.rel (%p2285) target = $region40
      $region39: #{gcn_layer_forward.3} parent=35 // pred_region
        %s2288 = smul.u32 64, %s17
      $region40: #{gcn_layer_forward.3} parent=35 // pred_fallthru
        _
      // Predicated region
      $region41: #{gcn_layer_forward.3} parent=35 // pred_check
        %p2289 = pneg %p160
      $region42: #{gcn_layer_forward.3} parent=35 // pred_check_branch
        %2291 = sbr.rel (%p2289) target = $region44
      $region43: #{gcn_layer_forward.3} parent=35 // pred_region
        _
      $region44: #{gcn_layer_forward.3} parent=35 // pred_fallthru
        _
    $region36: #{gcn_layer_forward.3} parent=5 // pred_fallthru
      _
    %p2292 = scmp.le.s32.totalorder 2, %s12
    // Predicated region
    $region45: #{gcn_layer_forward.3} parent=5 // pred_check
      %p2293 = pneg %p2292
    $region46: #{gcn_layer_forward.3} parent=5 // pred_check_branch
      %2295 = sbr.rel (%p2293) target = $region48
    $region47: #{gcn_layer_forward.3} parent=5 // pred_region
      %s2296 = ssub.s32 %s12, 2
      // Predicated region
      $region49: #{gcn_layer_forward.3} parent=47 // pred_check
        %p2297 = pneg %p140
      $region50: #{gcn_layer_forward.3} parent=47 // pred_check_branch
        %2299 = sbr.rel (%p2297) target = $region52
      $region51: #{gcn_layer_forward.3} parent=47 // pred_region
        %s2300 = smul.u32 64, %s18
        %p2301 = scmp.lt.s32.totalorder %s2300, 127
        %s2302 = scalar_select %p2301, %s2300, 127
        %s2303 = smul.addr %s2302, 4
        %s2304 = scalar_lea.vmem %s4, %s2303
      $region52: #{gcn_layer_forward.3} parent=47 // pred_fallthru
        _
      // Predicated region
      $region53: #{gcn_layer_forward.3} parent=47 // pred_check
        %p2305 = pneg %p166
      $region54: #{gcn_layer_forward.3} parent=47 // pred_check_branch
        %2307 = sbr.rel (%p2305) target = $region56
      $region55: #{gcn_layer_forward.3} parent=47 // pred_region
        %p2308 = scmp.lt.s32.totalorder %s18, 1
        %s2309 = scalar_select %p2308, %s18, 1
        %s2310 = scalar_lea.vmem %s5, %s2309
      $region56: #{gcn_layer_forward.3} parent=47 // pred_fallthru
        _
    $region48: #{gcn_layer_forward.3} parent=5 // pred_fallthru
      _
  $region6: #{gcn_layer_forward.3} parent=0 // loop_footer
    %s16 = sadd.s32 1, %s12
  $region7: #{gcn_layer_forward.3} parent=0 // loop_footer_branch
    %11 = sbr.rel target = $region3
  $region8: #{gcn_layer_forward.3} parent=0 // loop_exit
    _

// kernel: gcn_layer_forward.5
$region0: #{gcn_layer_forward.5}
  #allocation0 [shape = 'u32[]', space=smem, size = 0x4, offset = 0x4, fixed_abs, tag = 'smem constant byte address 0x4 - core index']
  #allocation1 [shape = 'u32[144,128]{1,0:T(1,128)}', space=vmem, size = 0x12000, scoped, tag = 'internal scratch']
  %s0 = inlined_call_operand.vmem [shape: bf16[1024,128], index: 0, kind: input, shape index: {}]
  %s1 = inlined_call_operand.vmem [shape: f32[1,128], index: 1, kind: input, shape index: {}]
  %s2 = inlined_call_operand.vmem [shape: f32[1,128], index: 2, kind: input, shape index: {}]
  %s3 = inlined_call_operand.vmem [shape: f32[1024,64], index: 3, kind: output, shape index: {}]
  %s4 = sld [smem:[#allocation0]]
  $region45: #{gcn_layer_forward.5} parent=0
    _
  %s6 = ssub.s32 1, %s4
  %s7 = scalar_select 0, %s6, %s4
  loop: start=0, step=1, limit=4
  $region2: #{gcn_layer_forward.5} parent=0 // loop_pre_header
    _
  $region3: #{gcn_layer_forward.5} parent=0 // loop_header
    %s9 = sphi 0, %s13
    %p10 = scmp.ge.s32.totalorder %s9, 4
    %s19 = sphi 0, %s21
    %s22 = sphi 0, %s19
    %s23 = sphi 0, %s22
    %s39 = sphi 0, %s23
    %s43 = sphi 0, %s43
    %s45 = sphi 0, %s43
    %s46 = sphi 0, %s45
    %s60 = sphi 0, %s46
    %s64 = sphi 0, %s64
    %s66 = sphi 0, %s64
    %s67 = sphi 0, %s66
    %s81 = sphi 0, %s67
    %s87 = sphi 0, %s89
    %s90 = sphi 0, %s87
    %s91 = sphi 0, %s90
    %s107 = sphi 0, %s91
  $region4: #{gcn_layer_forward.5} parent=0 // loop_header_branch
    %12 = sbr.rel (%p10) target = $region8
  $region5: #{gcn_layer_forward.5} parent=0 // loop_body
    %s14 = ssub.s32 %s9, 1
    %s15 = ssub.s32 %s9, 2
    %s16 = sadd.s32 %s9, 1
    %s17 = ssub.s32 %s9, %s16
    %p18 = scmp.eq.s32.totalorder %s17, 0
    %s20 = sadd.s32 %s19, 1
    %s21 = scalar_select %p18, %s19, %s20
    %p24 = pneg %p18
    %p25 = scmp.eq.s32.totalorder %s9, 1
    %p26 = por %p24, %p25
    %p27 = scmp.ne.s32.totalorder %s19, %s22
    %p28 = scmp.eq.s32.totalorder %s9, 0
    %p29 = por %p27, %p28
    %p30 = scmp.ne.s32.totalorder %s19, %s22
    %p31 = scmp.eq.s32.totalorder %s14, 1
    %p32 = por %p30, %p31
    %p33 = scmp.ne.s32.totalorder %s22, %s23
    %p34 = scmp.eq.s32.totalorder %s14, 0
    %p35 = por %p33, %p34
    %p36 = scmp.ne.s32.totalorder %s22, %s23
    %p37 = scmp.eq.s32.totalorder %s15, 1
    %p38 = por %p36, %p37
    %p40 = scmp.ne.s32.totalorder %s23, %s39
    %p41 = scmp.eq.s32.totalorder %s15, 0
    %p42 = por %p40, %p41
    %s44 = sadd.s32 %s43, 1
    %p47 = scmp.eq.s32.totalorder %s9, 1
    %p48 = scmp.ne.s32.totalorder %s43, %s45
    %p49 = scmp.eq.s32.totalorder %s9, 0
    %p50 = por %p48, %p49
    %p51 = scmp.ne.s32.totalorder %s43, %s45
    %p52 = scmp.eq.s32.totalorder %s14, 1
    %p53 = por %p51, %p52
    %p54 = scmp.ne.s32.totalorder %s45, %s46
    %p55 = scmp.eq.s32.totalorder %s14, 0
    %p56 = por %p54, %p55
    %p57 = scmp.ne.s32.totalorder %s45, %s46
    %p58 = scmp.eq.s32.totalorder %s15, 1
    %p59 = por %p57, %p58
    %p61 = scmp.ne.s32.totalorder %s46, %s60
    %p62 = scmp.eq.s32.totalorder %s15, 0
    %p63 = por %p61, %p62
    %s65 = sadd.s32 %s64, 1
    %p68 = scmp.eq.s32.totalorder %s9, 1
    %p69 = scmp.ne.s32.totalorder %s64, %s66
    %p70 = scmp.eq.s32.totalorder %s9, 0
    %p71 = por %p69, %p70
    %p72 = scmp.ne.s32.totalorder %s64, %s66
    %p73 = scmp.eq.s32.totalorder %s14, 1
    %p74 = por %p72, %p73
    %p75 = scmp.ne.s32.totalorder %s66, %s67
    %p76 = scmp.eq.s32.totalorder %s14, 0
    %p77 = por %p75, %p76
    %p78 = scmp.ne.s32.totalorder %s66, %s67
    %p79 = scmp.eq.s32.totalorder %s15, 1
    %p80 = por %p78, %p79
    %p82 = scmp.ne.s32.totalorder %s67, %s81
    %p83 = scmp.eq.s32.totalorder %s15, 0
    %p84 = por %p82, %p83
    %s85 = ssub.s32 %s9, %s16
    %p86 = scmp.eq.s32.totalorder %s85, 0
    %s88 = sadd.s32 %s87, 1
    %s89 = scalar_select %p86, %s87, %s88
    %p92 = pneg %p86
    %p93 = scmp.eq.s32.totalorder %s9, 1
    %p94 = por %p92, %p93
    %p95 = scmp.ne.s32.totalorder %s87, %s90
    %p96 = scmp.eq.s32.totalorder %s9, 0
    %p97 = por %p95, %p96
    %p98 = scmp.ne.s32.totalorder %s87, %s90
    %p99 = scmp.eq.s32.totalorder %s14, 1
    %p100 = por %p98, %p99
    %p101 = scmp.ne.s32.totalorder %s90, %s91
    %p102 = scmp.eq.s32.totalorder %s14, 0
    %p103 = por %p101, %p102
    %p104 = scmp.ne.s32.totalorder %s90, %s91
    %p105 = scmp.eq.s32.totalorder %s15, 1
    %p106 = por %p104, %p105
    %p108 = scmp.ne.s32.totalorder %s91, %s107
    %p109 = scmp.eq.s32.totalorder %s15, 0
    %p110 = por %p108, %p109
    %p111 = scmp.le.s32.totalorder 1, %s9
    %p112 = scmp.lt.s32.totalorder %s9, 3
    %p113 = pnand %p111, %p112
    %p114 = pneg %p113
    // Predicated region
    $region9: #{gcn_layer_forward.5} parent=5 // pred_check
      _
    $region10: #{gcn_layer_forward.5} parent=5 // pred_check_branch
      %116 = sbr.rel (%p113) target = $region12
    $region11: #{gcn_layer_forward.5} parent=5 // pred_region
      %s117 = ssub.s32 %s9, 1
      // Predicated region
      $region13: #{gcn_layer_forward.5} parent=11 // pred_check
        %p118 = pneg %p56
      $region14: #{gcn_layer_forward.5} parent=11 // pred_check_branch
        %120 = sbr.rel (%p118) target = $region16
      $region15: #{gcn_layer_forward.5} parent=11 // pred_region
        _
      $region16: #{gcn_layer_forward.5} parent=11 // pred_fallthru
        _
      // Predicated region
      $region17: #{gcn_layer_forward.5} parent=11 // pred_check
        %p121 = pneg %p77
      $region18: #{gcn_layer_forward.5} parent=11 // pred_check_branch
        %123 = sbr.rel (%p121) target = $region20
      $region19: #{gcn_layer_forward.5} parent=11 // pred_region
        _
      $region20: #{gcn_layer_forward.5} parent=11 // pred_fallthru
        _
    $region12: #{gcn_layer_forward.5} parent=5 // pred_fallthru
      _
    %p124 = scmp.lt.s32.totalorder %s9, 2
    // Predicated region
    $region21: #{gcn_layer_forward.5} parent=5 // pred_check
      %p125 = pneg %p124
    $region22: #{gcn_layer_forward.5} parent=5 // pred_check_branch
      %127 = sbr.rel (%p125) target = $region24
    $region23: #{gcn_layer_forward.5} parent=5 // pred_region
      // Predicated region
      $region25: #{gcn_layer_forward.5} parent=23 // pred_check
        %p128 = pneg %p29
      $region26: #{gcn_layer_forward.5} parent=23 // pred_check_branch
        %130 = sbr.rel (%p128) target = $region28
      $region27: #{gcn_layer_forward.5} parent=23 // pred_region
        %s131 = smul.u32 64, %s9
        %p132 = scmp.lt.s32.totalorder %s131, 127
        %s133 = scalar_select %p132, %s131, 127
        %s134 = smul.addr %s133, 4
        %s135 = scalar_lea.vmem %s0, %s134
        %s136 = smul.u32 64, %s9
      $region28: #{gcn_layer_forward.5} parent=23 // pred_fallthru
        _
    $region24: #{gcn_layer_forward.5} parent=5 // pred_fallthru
      _
    %p137 = scmp.le.s32.totalorder 1, %s9
    %p138 = scmp.lt.s32.totalorder %s9, 3
    %p139 = pnand %p137, %p138
    %p140 = pneg %p139
    // Predicated region
    $region29: #{gcn_layer_forward.5} parent=5 // pred_check
      _
    $region30: #{gcn_layer_forward.5} parent=5 // pred_check_branch
      %142 = sbr.rel (%p139) target = $region32
    $region31: #{gcn_layer_forward.5} parent=5 // pred_region
      %s143 = ssub.s32 %s9, 1
      %s144 = smul.u32 64, %s14
      %p145 = scmp.lt.s32.totalorder %s144, 127
      %s146 = scalar_select %p145, %s144, 127
      %s147 = smul.addr %s146, 4
      %s148 = scalar_lea.vmem %s0, %s147
      %p149 = pneg %p35
      %p150 = pneg %p32
      %p151 = pneg %p56
      %p152 = pneg %p53
      %p153 = pneg %p77
      %p154 = pneg %p74
      %p155 = pneg %p103
      %p156 = pneg %p100
      %s157 = smul.u32 64, %s14
      %p158 = scmp.lt.s32.totalorder %s157, 127
      %s159 = scalar_select %p158, %s157, 127
      %s160 = smul.addr %s159, 8
      %s161 = scalar_lea.vmem %s3, %s160
      %s162 = smul.u32 64, %s14
      %p163 = scmp.lt.s32.totalorder %s162, 127
      %s164 = scalar_select %p163, %s162, 127
      %s165 = smul.addr %s164, 4
      %s166 = scalar_lea.vmem %s0, %s165
      %s167 = smul.u32 64, %s14
      %s168 = smul.u32 64, %s14
      %p169 = scmp.lt.s32.totalorder %s168, 127
      %s170 = scalar_select %p169, %s168, 127
      %s171 = smul.addr %s170, 8
      %s172 = scalar_lea.vmem %s3, %s171
      %s173 = smul.u32 64, %s14
      %v174 = vld [vmem:[%s166] sm:$0xf]
      %v175 = vld [vmem:[%s166 + $0x4] sm:$0xf]
      %v176 = vld [vmem:[%s166 + $0x8] sm:$0xf]
      %v177 = vld [vmem:[%s166 + $0xc] sm:$0xf]
      %v178 = vld [vmem:[%s166 + $0x10] sm:$0xf]
      %v179 = vld [vmem:[%s166 + $0x14] sm:$0xf]
      %v180 = vld [vmem:[%s166 + $0x18] sm:$0xf]
      %v181 = vld [vmem:[%s166 + $0x1c] sm:$0xf]
      %v182 = vld [vmem:[%s166 + $0x20] sm:$0xf]
      %v183 = vld [vmem:[%s166 + $0x24] sm:$0xf]
      %v184 = vld [vmem:[%s166 + $0x28] sm:$0xf]
      %v185 = vld [vmem:[%s166 + $0x2c] sm:$0xf]
      %v186 = vld [vmem:[%s166 + $0x30] sm:$0xf]
      %v187 = vld [vmem:[%s166 + $0x34] sm:$0xf]
      %v188 = vld [vmem:[%s166 + $0x38] sm:$0xf]
      %v189 = vld [vmem:[%s166 + $0x3c] sm:$0xf]
      %v190 = vld [vmem:[%s166 + $0x40] sm:$0xf]
      %v191 = vld [vmem:[%s166 + $0x44] sm:$0xf]
      %v192 = vld [vmem:[%s166 + $0x48] sm:$0xf]
      %v193 = vld [vmem:[%s166 + $0x4c] sm:$0xf]
      %v194 = vld [vmem:[%s166 + $0x50] sm:$0xf]
      %v195 = vld [vmem:[%s166 + $0x54] sm:$0xf]
      %v196 = vld [vmem:[%s166 + $0x58] sm:$0xf]
      %v197 = vld [vmem:[%s166 + $0x5c] sm:$0xf]
      %v198 = vld [vmem:[%s166 + $0x60] sm:$0xf]
      %v199 = vld [vmem:[%s166 + $0x64] sm:$0xf]
      %v200 = vld [vmem:[%s166 + $0x68] sm:$0xf]
      %v201 = vld [vmem:[%s166 + $0x6c] sm:$0xf]
      %v202 = vld [vmem:[%s166 + $0x70] sm:$0xf]
      %v203 = vld [vmem:[%s166 + $0x74] sm:$0xf]
      %v204 = vld [vmem:[%s166 + $0x78] sm:$0xf]
      %v205 = vld [vmem:[%s166 + $0x7c] sm:$0xf]
      %v206 = vld [vmem:[%s166 + $0x80] sm:$0xf]
      %v207 = vld [vmem:[%s166 + $0x84] sm:$0xf]
      %v208 = vld [vmem:[%s166 + $0x88] sm:$0xf]
      %v209 = vld [vmem:[%s166 + $0x8c] sm:$0xf]
      %v210 = vld [vmem:[%s166 + $0x90] sm:$0xf]
      %v211 = vld [vmem:[%s166 + $0x94] sm:$0xf]
      %v212 = vld [vmem:[%s166 + $0x98] sm:$0xf]
      %v213 = vld [vmem:[%s166 + $0x9c] sm:$0xf]
      %v214 = vld [vmem:[%s166 + $0xa0] sm:$0xf]
      %v215 = vld [vmem:[%s166 + $0xa4] sm:$0xf]
      %v216 = vld [vmem:[%s166 + $0xa8] sm:$0xf]
      %v217 = vld [vmem:[%s166 + $0xac] sm:$0xf]
      %v218 = vld [vmem:[%s166 + $0xb0] sm:$0xf]
      %v219 = vld [vmem:[%s166 + $0xb4] sm:$0xf]
      %v220 = vld [vmem:[%s166 + $0xb8] sm:$0xf]
      %v221 = vld [vmem:[%s166 + $0xbc] sm:$0xf]
      %v222 = vld [vmem:[%s166 + $0xc0] sm:$0xf]
      %v223 = vld [vmem:[%s166 + $0xc4] sm:$0xf]
      %v224 = vld [vmem:[%s166 + $0xc8] sm:$0xf]
      %v225 = vld [vmem:[%s166 + $0xcc] sm:$0xf]
      %v226 = vld [vmem:[%s166 + $0xd0] sm:$0xf]
      %v227 = vld [vmem:[%s166 + $0xd4] sm:$0xf]
      %v228 = vld [vmem:[%s166 + $0xd8] sm:$0xf]
      %v229 = vld [vmem:[%s166 + $0xdc] sm:$0xf]
      %v230 = vld [vmem:[%s166 + $0xe0] sm:$0xf]
      %v231 = vld [vmem:[%s166 + $0xe4] sm:$0xf]
      %v232 = vld [vmem:[%s166 + $0xe8] sm:$0xf]
      %v233 = vld [vmem:[%s166 + $0xec] sm:$0xf]
      %v234 = vld [vmem:[%s166 + $0xf0] sm:$0xf]
      %v235 = vld [vmem:[%s166 + $0xf4] sm:$0xf]
      %v236 = vld [vmem:[%s166 + $0xf8] sm:$0xf]
      %v237 = vld [vmem:[%s166 + $0xfc] sm:$0xf]
      %v238 = vunpack.c.l.bf16 %v174
      %v239 = vunpack.c.l.bf16 %v175
      %v240 = vunpack.c.l.bf16 %v176
      %v241 = vunpack.c.l.bf16 %v177
      %v242 = vunpack.c.l.bf16 %v178
      %v243 = vunpack.c.l.bf16 %v179
      %v244 = vunpack.c.l.bf16 %v180
      %v245 = vunpack.c.l.bf16 %v181
      %v246 = vunpack.c.l.bf16 %v182
      %v247 = vunpack.c.l.bf16 %v183
      %v248 = vunpack.c.l.bf16 %v184
      %v249 = vunpack.c.l.bf16 %v185
      %v250 = vunpack.c.l.bf16 %v186
      %v251 = vunpack.c.l.bf16 %v187
      %v252 = vunpack.c.l.bf16 %v188
      %v253 = vunpack.c.l.bf16 %v189
      %v254 = vunpack.c.l.bf16 %v190
      %v255 = vunpack.c.l.bf16 %v191
      %v256 = vunpack.c.l.bf16 %v192
      %v257 = vunpack.c.l.bf16 %v193
      %v258 = vunpack.c.l.bf16 %v194
      %v259 = vunpack.c.l.bf16 %v195
      %v260 = vunpack.c.l.bf16 %v196
      %v261 = vunpack.c.l.bf16 %v197
      %v262 = vunpack.c.l.bf16 %v198
      %v263 = vunpack.c.l.bf16 %v199
      %v264 = vunpack.c.l.bf16 %v200
      %v265 = vunpack.c.l.bf16 %v201
      %v266 = vunpack.c.l.bf16 %v202
      %v267 = vunpack.c.l.bf16 %v203
      %v268 = vunpack.c.l.bf16 %v204
      %v269 = vunpack.c.l.bf16 %v205
      %v270 = vunpack.c.l.bf16 %v206
      %v271 = vunpack.c.l.bf16 %v207
      %v272 = vunpack.c.l.bf16 %v208
      %v273 = vunpack.c.l.bf16 %v209
      %v274 = vunpack.c.l.bf16 %v210
      %v275 = vunpack.c.l.bf16 %v211
      %v276 = vunpack.c.l.bf16 %v212
      %v277 = vunpack.c.l.bf16 %v213
      %v278 = vunpack.c.l.bf16 %v214
      %v279 = vunpack.c.l.bf16 %v215
      %v280 = vunpack.c.l.bf16 %v216
      %v281 = vunpack.c.l.bf16 %v217
      %v282 = vunpack.c.l.bf16 %v218
      %v283 = vunpack.c.l.bf16 %v219
      %v284 = vunpack.c.l.bf16 %v220
      %v285 = vunpack.c.l.bf16 %v221
      %v286 = vunpack.c.l.bf16 %v222
      %v287 = vunpack.c.l.bf16 %v223
      %v288 = vunpack.c.l.bf16 %v224
      %v289 = vunpack.c.l.bf16 %v225
      %v290 = vunpack.c.l.bf16 %v226
      %v291 = vunpack.c.l.bf16 %v227
      %v292 = vunpack.c.l.bf16 %v228
      %v293 = vunpack.c.l.bf16 %v229
      %v294 = vunpack.c.l.bf16 %v230
      %v295 = vunpack.c.l.bf16 %v231
      %v296 = vunpack.c.l.bf16 %v232
      %v297 = vunpack.c.l.bf16 %v233
      %v298 = vunpack.c.l.bf16 %v234
      %v299 = vunpack.c.l.bf16 %v235
      %v300 = vunpack.c.l.bf16 %v236
      %v301 = vunpack.c.l.bf16 %v237
      %v302 = vld [vmem:[%s1] sm:$0x1]
      %v304 = vlaneseq
      %v305 = vshrl.u32 %v304, 7
      %v306 = vsub.s32 0, %v305
      %v307 = vrot.slane %v302, %v306
      %v309 = vmul.f32 %v238, %v307
      %v310 = vmul.f32 %v239, %v307
      %v311 = vmul.f32 %v240, %v307
      %v312 = vmul.f32 %v241, %v307
      %v313 = vmul.f32 %v242, %v307
      %v314 = vmul.f32 %v243, %v307
      %v315 = vmul.f32 %v244, %v307
      %v316 = vmul.f32 %v245, %v307
      %v317 = vmul.f32 %v246, %v307
      %v318 = vmul.f32 %v247, %v307
      %v319 = vmul.f32 %v248, %v307
      %v320 = vmul.f32 %v249, %v307
      %v321 = vmul.f32 %v250, %v307
      %v322 = vmul.f32 %v251, %v307
      %v323 = vmul.f32 %v252, %v307
      %v324 = vmul.f32 %v253, %v307
      %v325 = vmul.f32 %v254, %v307
      %v326 = vmul.f32 %v255, %v307
      %v327 = vmul.f32 %v256, %v307
      %v328 = vmul.f32 %v257, %v307
      %v329 = vmul.f32 %v258, %v307
      %v330 = vmul.f32 %v259, %v307
      %v331 = vmul.f32 %v260, %v307
      %v332 = vmul.f32 %v261, %v307
      %v333 = vmul.f32 %v262, %v307
      %v334 = vmul.f32 %v263, %v307
      %v335 = vmul.f32 %v264, %v307
      %v336 = vmul.f32 %v265, %v307
      %v337 = vmul.f32 %v266, %v307
      %v338 = vmul.f32 %v267, %v307
      %v339 = vmul.f32 %v268, %v307
      %v340 = vmul.f32 %v269, %v307
      %v341 = vmul.f32 %v270, %v307
      %v342 = vmul.f32 %v271, %v307
      %v343 = vmul.f32 %v272, %v307
      %v344 = vmul.f32 %v273, %v307
      %v345 = vmul.f32 %v274, %v307
      %v346 = vmul.f32 %v275, %v307
      %v347 = vmul.f32 %v276, %v307
      %v348 = vmul.f32 %v277, %v307
      %v349 = vmul.f32 %v278, %v307
      %v350 = vmul.f32 %v279, %v307
      %v351 = vmul.f32 %v280, %v307
      %v352 = vmul.f32 %v281, %v307
      %v353 = vmul.f32 %v282, %v307
      %v354 = vmul.f32 %v283, %v307
      %v355 = vmul.f32 %v284, %v307
      %v356 = vmul.f32 %v285, %v307
      %v357 = vmul.f32 %v286, %v307
      %v358 = vmul.f32 %v287, %v307
      %v359 = vmul.f32 %v288, %v307
      %v360 = vmul.f32 %v289, %v307
      %v361 = vmul.f32 %v290, %v307
      %v362 = vmul.f32 %v291, %v307
      %v363 = vmul.f32 %v292, %v307
      %v364 = vmul.f32 %v293, %v307
      %v365 = vmul.f32 %v294, %v307
      %v366 = vmul.f32 %v295, %v307
      %v367 = vmul.f32 %v296, %v307
      %v368 = vmul.f32 %v297, %v307
      %v369 = vmul.f32 %v298, %v307
      %v370 = vmul.f32 %v299, %v307
      %v371 = vmul.f32 %v300, %v307
      %v372 = vmul.f32 %v301, %v307
      %v373 = vld [vmem:[%s2] sm:$0x1]
      %v375 = vlaneseq
      %v376 = vshrl.u32 %v375, 7
      %v377 = vsub.s32 0, %v376
      %v378 = vrot.slane %v373, %v377
      %v380 = vadd.f32 %v309, %v378
      %v381 = vadd.f32 %v310, %v378
      %v382 = vadd.f32 %v311, %v378
      %v383 = vadd.f32 %v312, %v378
      %v384 = vadd.f32 %v313, %v378
      %v385 = vadd.f32 %v314, %v378
      %v386 = vadd.f32 %v315, %v378
      %v387 = vadd.f32 %v316, %v378
      %v388 = vadd.f32 %v317, %v378
      %v389 = vadd.f32 %v318, %v378
      %v390 = vadd.f32 %v319, %v378
      %v391 = vadd.f32 %v320, %v378
      %v392 = vadd.f32 %v321, %v378
      %v393 = vadd.f32 %v322, %v378
      %v394 = vadd.f32 %v323, %v378
      %v395 = vadd.f32 %v324, %v378
      %v396 = vadd.f32 %v325, %v378
      %v397 = vadd.f32 %v326, %v378
      %v398 = vadd.f32 %v327, %v378
      %v399 = vadd.f32 %v328, %v378
      %v400 = vadd.f32 %v329, %v378
      %v401 = vadd.f32 %v330, %v378
      %v402 = vadd.f32 %v331, %v378
      %v403 = vadd.f32 %v332, %v378
      %v404 = vadd.f32 %v333, %v378
      %v405 = vadd.f32 %v334, %v378
      %v406 = vadd.f32 %v335, %v378
      %v407 = vadd.f32 %v336, %v378
      %v408 = vadd.f32 %v337, %v378
      %v409 = vadd.f32 %v338, %v378
      %v410 = vadd.f32 %v339, %v378
      %v411 = vadd.f32 %v340, %v378
      %v412 = vadd.f32 %v341, %v378
      %v413 = vadd.f32 %v342, %v378
      %v414 = vadd.f32 %v343, %v378
      %v415 = vadd.f32 %v344, %v378
      %v416 = vadd.f32 %v345, %v378
      %v417 = vadd.f32 %v346, %v378
      %v418 = vadd.f32 %v347, %v378
      %v419 = vadd.f32 %v348, %v378
      %v420 = vadd.f32 %v349, %v378
      %v421 = vadd.f32 %v350, %v378
      %v422 = vadd.f32 %v351, %v378
      %v423 = vadd.f32 %v352, %v378
      %v424 = vadd.f32 %v353, %v378
      %v425 = vadd.f32 %v354, %v378
      %v426 = vadd.f32 %v355, %v378
      %v427 = vadd.f32 %v356, %v378
      %v428 = vadd.f32 %v357, %v378
      %v429 = vadd.f32 %v358, %v378
      %v430 = vadd.f32 %v359, %v378
      %v431 = vadd.f32 %v360, %v378
      %v432 = vadd.f32 %v361, %v378
      %v433 = vadd.f32 %v362, %v378
      %v434 = vadd.f32 %v363, %v378
      %v435 = vadd.f32 %v364, %v378
      %v436 = vadd.f32 %v365, %v378
      %v437 = vadd.f32 %v366, %v378
      %v438 = vadd.f32 %v367, %v378
      %v439 = vadd.f32 %v368, %v378
      %v440 = vadd.f32 %v369, %v378
      %v441 = vadd.f32 %v370, %v378
      %v442 = vadd.f32 %v371, %v378
      %v443 = vadd.f32 %v372, %v378
      %v444 = vmax.f32 %v380, 0.0
      %v445 = vmax.f32 %v381, 0.0
      %v446 = vmax.f32 %v382, 0.0
      %v447 = vmax.f32 %v383, 0.0
      %v448 = vmax.f32 %v384, 0.0
      %v449 = vmax.f32 %v385, 0.0
      %v450 = vmax.f32 %v386, 0.0
      %v451 = vmax.f32 %v387, 0.0
      %v452 = vmax.f32 %v388, 0.0
      %v453 = vmax.f32 %v389, 0.0
      %v454 = vmax.f32 %v390, 0.0
      %v455 = vmax.f32 %v391, 0.0
      %v456 = vmax.f32 %v392, 0.0
      %v457 = vmax.f32 %v393, 0.0
      %v458 = vmax.f32 %v394, 0.0
      %v459 = vmax.f32 %v395, 0.0
      %v460 = vmax.f32 %v396, 0.0
      %v461 = vmax.f32 %v397, 0.0
      %v462 = vmax.f32 %v398, 0.0
      %v463 = vmax.f32 %v399, 0.0
      %v464 = vmax.f32 %v400, 0.0
      %v465 = vmax.f32 %v401, 0.0
      %v466 = vmax.f32 %v402, 0.0
      %v467 = vmax.f32 %v403, 0.0
      %v468 = vmax.f32 %v404, 0.0
      %v469 = vmax.f32 %v405, 0.0
      %v470 = vmax.f32 %v406, 0.0
      %v471 = vmax.f32 %v407, 0.0
      %v472 = vmax.f32 %v408, 0.0
      %v473 = vmax.f32 %v409, 0.0
      %v474 = vmax.f32 %v410, 0.0
      %v475 = vmax.f32 %v411, 0.0
      %v476 = vmax.f32 %v412, 0.0
      %v477 = vmax.f32 %v413, 0.0
      %v478 = vmax.f32 %v414, 0.0
      %v479 = vmax.f32 %v415, 0.0
      %v480 = vmax.f32 %v416, 0.0
      %v481 = vmax.f32 %v417, 0.0
      %v482 = vmax.f32 %v418, 0.0
      %v483 = vmax.f32 %v419, 0.0
      %v484 = vmax.f32 %v420, 0.0
      %v485 = vmax.f32 %v421, 0.0
      %v486 = vmax.f32 %v422, 0.0
      %v487 = vmax.f32 %v423, 0.0
      %v488 = vmax.f32 %v424, 0.0
      %v489 = vmax.f32 %v425, 0.0
      %v490 = vmax.f32 %v426, 0.0
      %v491 = vmax.f32 %v427, 0.0
      %v492 = vmax.f32 %v428, 0.0
      %v493 = vmax.f32 %v429, 0.0
      %v494 = vmax.f32 %v430, 0.0
      %v495 = vmax.f32 %v431, 0.0
      %v496 = vmax.f32 %v432, 0.0
      %v497 = vmax.f32 %v433, 0.0
      %v498 = vmax.f32 %v434, 0.0
      %v499 = vmax.f32 %v435, 0.0
      %v500 = vmax.f32 %v436, 0.0
      %v501 = vmax.f32 %v437, 0.0
      %v502 = vmax.f32 %v438, 0.0
      %v503 = vmax.f32 %v439, 0.0
      %v504 = vmax.f32 %v440, 0.0
      %v505 = vmax.f32 %v441, 0.0
      %v506 = vmax.f32 %v442, 0.0
      %v507 = vmax.f32 %v443, 0.0
      %vm508 = vcmask 523264
      %509 = vst.msk [vmem:[%s172] sm:$0xff] %vm508, %v444
      %510 = vst.msk [vmem:[%s172 + $0x8] sm:$0xff] %vm508, %v445
      %511 = vst.msk [vmem:[%s172 + $0x10] sm:$0xff] %vm508, %v446
      %512 = vst.msk [vmem:[%s172 + $0x18] sm:$0xff] %vm508, %v447
      %513 = vst.msk [vmem:[%s172 + $0x20] sm:$0xff] %vm508, %v448
      %514 = vst.msk [vmem:[%s172 + $0x28] sm:$0xff] %vm508, %v449
      %515 = vst.msk [vmem:[%s172 + $0x30] sm:$0xff] %vm508, %v450
      %516 = vst.msk [vmem:[%s172 + $0x38] sm:$0xff] %vm508, %v451
      %517 = vst.msk [vmem:[%s172 + $0x40] sm:$0xff] %vm508, %v452
      %518 = vst.msk [vmem:[%s172 + $0x48] sm:$0xff] %vm508, %v453
      %519 = vst.msk [vmem:[%s172 + $0x50] sm:$0xff] %vm508, %v454
      %520 = vst.msk [vmem:[%s172 + $0x58] sm:$0xff] %vm508, %v455
      %521 = vst.msk [vmem:[%s172 + $0x60] sm:$0xff] %vm508, %v456
      %522 = vst.msk [vmem:[%s172 + $0x68] sm:$0xff] %vm508, %v457
      %523 = vst.msk [vmem:[%s172 + $0x70] sm:$0xff] %vm508, %v458
      %524 = vst.msk [vmem:[%s172 + $0x78] sm:$0xff] %vm508, %v459
      %525 = vst.msk [vmem:[%s172 + $0x80] sm:$0xff] %vm508, %v460
      %526 = vst.msk [vmem:[%s172 + $0x88] sm:$0xff] %vm508, %v461
      %527 = vst.msk [vmem:[%s172 + $0x90] sm:$0xff] %vm508, %v462
      %528 = vst.msk [vmem:[%s172 + $0x98] sm:$0xff] %vm508, %v463
      %529 = vst.msk [vmem:[%s172 + $0xa0] sm:$0xff] %vm508, %v464
      %530 = vst.msk [vmem:[%s172 + $0xa8] sm:$0xff] %vm508, %v465
      %531 = vst.msk [vmem:[%s172 + $0xb0] sm:$0xff] %vm508, %v466
      %532 = vst.msk [vmem:[%s172 + $0xb8] sm:$0xff] %vm508, %v467
      %533 = vst.msk [vmem:[%s172 + $0xc0] sm:$0xff] %vm508, %v468
      %534 = vst.msk [vmem:[%s172 + $0xc8] sm:$0xff] %vm508, %v469
      %535 = vst.msk [vmem:[%s172 + $0xd0] sm:$0xff] %vm508, %v470
      %536 = vst.msk [vmem:[%s172 + $0xd8] sm:$0xff] %vm508, %v471
      %537 = vst.msk [vmem:[%s172 + $0xe0] sm:$0xff] %vm508, %v472
      %538 = vst.msk [vmem:[%s172 + $0xe8] sm:$0xff] %vm508, %v473
      %539 = vst.msk [vmem:[%s172 + $0xf0] sm:$0xff] %vm508, %v474
      %540 = vst.msk [vmem:[%s172 + $0xf8] sm:$0xff] %vm508, %v475
      %541 = vst.msk [vmem:[%s172 + $0x100] sm:$0xff] %vm508, %v476
      %542 = vst.msk [vmem:[%s172 + $0x108] sm:$0xff] %vm508, %v477
      %543 = vst.msk [vmem:[%s172 + $0x110] sm:$0xff] %vm508, %v478
      %544 = vst.msk [vmem:[%s172 + $0x118] sm:$0xff] %vm508, %v479
      %545 = vst.msk [vmem:[%s172 + $0x120] sm:$0xff] %vm508, %v480
      %546 = vst.msk [vmem:[%s172 + $0x128] sm:$0xff] %vm508, %v481
      %547 = vst.msk [vmem:[%s172 + $0x130] sm:$0xff] %vm508, %v482
      %548 = vst.msk [vmem:[%s172 + $0x138] sm:$0xff] %vm508, %v483
      %549 = vst.msk [vmem:[%s172 + $0x140] sm:$0xff] %vm508, %v484
      %550 = vst.msk [vmem:[%s172 + $0x148] sm:$0xff] %vm508, %v485
      %551 = vst.msk [vmem:[%s172 + $0x150] sm:$0xff] %vm508, %v486
      %552 = vst.msk [vmem:[%s172 + $0x158] sm:$0xff] %vm508, %v487
      %553 = vst.msk [vmem:[%s172 + $0x160] sm:$0xff] %vm508, %v488
      %554 = vst.msk [vmem:[%s172 + $0x168] sm:$0xff] %vm508, %v489
      %555 = vst.msk [vmem:[%s172 + $0x170] sm:$0xff] %vm508, %v490
      %556 = vst.msk [vmem:[%s172 + $0x178] sm:$0xff] %vm508, %v491
      %557 = vst.msk [vmem:[%s172 + $0x180] sm:$0xff] %vm508, %v492
      %558 = vst.msk [vmem:[%s172 + $0x188] sm:$0xff] %vm508, %v493
      %559 = vst.msk [vmem:[%s172 + $0x190] sm:$0xff] %vm508, %v494
      %560 = vst.msk [vmem:[%s172 + $0x198] sm:$0xff] %vm508, %v495
      %561 = vst.msk [vmem:[%s172 + $0x1a0] sm:$0xff] %vm508, %v496
      %562 = vst.msk [vmem:[%s172 + $0x1a8] sm:$0xff] %vm508, %v497
      %563 = vst.msk [vmem:[%s172 + $0x1b0] sm:$0xff] %vm508, %v498
      %564 = vst.msk [vmem:[%s172 + $0x1b8] sm:$0xff] %vm508, %v499
      %565 = vst.msk [vmem:[%s172 + $0x1c0] sm:$0xff] %vm508, %v500
      %566 = vst.msk [vmem:[%s172 + $0x1c8] sm:$0xff] %vm508, %v501
      %567 = vst.msk [vmem:[%s172 + $0x1d0] sm:$0xff] %vm508, %v502
      %568 = vst.msk [vmem:[%s172 + $0x1d8] sm:$0xff] %vm508, %v503
      %569 = vst.msk [vmem:[%s172 + $0x1e0] sm:$0xff] %vm508, %v504
      %570 = vst.msk [vmem:[%s172 + $0x1e8] sm:$0xff] %vm508, %v505
      %571 = vst.msk [vmem:[%s172 + $0x1f0] sm:$0xff] %vm508, %v506
      %572 = vst.msk [vmem:[%s172 + $0x1f8] sm:$0xff] %vm508, %v507
      %s573 = smul.u32 64, %s14
      %p574 = scmp.lt.s32.totalorder %s573, 127
      %s575 = scalar_select %p574, %s573, 127
      %s576 = smul.addr %s575, 8
      %s577 = scalar_lea.vmem %s3, %s576
      // Predicated region
      $region33: #{gcn_layer_forward.5} parent=31 // pred_check
        %p578 = pneg %p100
      $region34: #{gcn_layer_forward.5} parent=31 // pred_check_branch
        %580 = sbr.rel (%p578) target = $region36
      $region35: #{gcn_layer_forward.5} parent=31 // pred_region
        %s581 = smul.u32 64, %s14
      $region36: #{gcn_layer_forward.5} parent=31 // pred_fallthru
        _
    $region32: #{gcn_layer_forward.5} parent=5 // pred_fallthru
      _
    %p582 = scmp.le.s32.totalorder 2, %s9
    // Predicated region
    $region37: #{gcn_layer_forward.5} parent=5 // pred_check
      %p583 = pneg %p582
    $region38: #{gcn_layer_forward.5} parent=5 // pred_check_branch
      %585 = sbr.rel (%p583) target = $region40
    $region39: #{gcn_layer_forward.5} parent=5 // pred_region
      %s586 = ssub.s32 %s9, 2
      // Predicated region
      $region41: #{gcn_layer_forward.5} parent=39 // pred_check
        %p587 = pneg %p106
      $region42: #{gcn_layer_forward.5} parent=39 // pred_check_branch
        %589 = sbr.rel (%p587) target = $region44
      $region43: #{gcn_layer_forward.5} parent=39 // pred_region
        %s590 = smul.u32 64, %s15
        %p591 = scmp.lt.s32.totalorder %s590, 127
        %s592 = scalar_select %p591, %s590, 127
        %s593 = smul.addr %s592, 8
        %s594 = scalar_lea.vmem %s3, %s593
      $region44: #{gcn_layer_forward.5} parent=39 // pred_fallthru
        _
    $region40: #{gcn_layer_forward.5} parent=5 // pred_fallthru
      _
  $region6: #{gcn_layer_forward.5} parent=0 // loop_footer
    %s13 = sadd.s32 1, %s9
  $region7: #{gcn_layer_forward.5} parent=0 // loop_footer_branch
    %8 = sbr.rel target = $region3
  $region8: #{gcn_layer_forward.5} parent=0 // loop_exit
    _

// kernel: gcn_layer_forward.4
$region0: #{gcn_layer_forward.4}
  #allocation0 [shape = 'u32[]', space=smem, size = 0x4, offset = 0x4, fixed_abs, tag = 'smem constant byte address 0x4 - core index']
  #allocation1 [shape = 'u32[144,128]{1,0:T(1,128)}', space=vmem, size = 0x12000, scoped, tag = 'internal scratch']
  #allocation2 [shape = 'f32[512,128]{1,0:T(8,128)}', space=vmem, size = 0x40000, scoped, tag = 'scratch operand']
  %s0 = inlined_call_operand.vmem [shape: s8[1024,1024], index: 0, kind: input, shape index: {}]
  %s1 = inlined_call_operand.vmem [shape: bf16[1024,128], index: 1, kind: input, shape index: {}]
  %s2 = inlined_call_operand.vmem [shape: f32[1024,1], index: 2, kind: input, shape index: {}]
  %s3 = inlined_call_operand.vmem [shape: f32[1,128], index: 3, kind: input, shape index: {}]
  %s4 = inlined_call_operand.vmem [shape: bf16[1024,128], index: 4, kind: output, shape index: {0}]
  %s5 = inlined_call_operand.vmem [shape: f32[2,1,128], index: 5, kind: output, shape index: {1}]
  %6 = xla_tuple %s4, %s5
  %s7 = sld [smem:[#allocation0]]
  $region65: #{gcn_layer_forward.4} parent=0
    _
  %s9 = ssub.s32 1, %s7
  %s10 = scalar_select 0, %s9, %s7
  loop: start=0, step=1, limit=4
  $region2: #{gcn_layer_forward.4} parent=0 // loop_pre_header
    _
  $region3: #{gcn_layer_forward.4} parent=0 // loop_header
    %s12 = sphi 0, %s16
    %p13 = scmp.ge.s32.totalorder %s12, 4
    %s19 = sphi 0, %s31
    %s20 = sphi 0, %s27
    %s21 = sphi 0, %s19
    %s22 = sphi 0, %s20
    %s23 = sphi 0, %s21
    %s24 = sphi 0, %s22
    %s36 = sphi 0, %s38
    %s39 = sphi 0, %s36
    %s40 = sphi 0, %s39
    %s56 = sphi 0, %s40
    %s62 = sphi 0, %s64
    %s65 = sphi 0, %s62
    %s66 = sphi 0, %s65
    %s82 = sphi 0, %s66
    %s88 = sphi 0, %s90
    %s91 = sphi 0, %s88
    %s92 = sphi 0, %s91
    %s108 = sphi 0, %s92
    %s112 = sphi 0, %s112
    %s114 = sphi 0, %s112
    %s115 = sphi 0, %s114
    %s129 = sphi 0, %s115
    %s135 = sphi 0, %s137
    %s138 = sphi 0, %s135
    %s139 = sphi 0, %s138
    %s155 = sphi 0, %s139
    %s161 = sphi 0, %s163
    %s164 = sphi 0, %s161
    %s165 = sphi 0, %s164
    %s181 = sphi 0, %s165
  $region4: #{gcn_layer_forward.4} parent=0 // loop_header_branch
    %15 = sbr.rel (%p13) target = $region8
  $region5: #{gcn_layer_forward.4} parent=0 // loop_body
    %s17 = ssub.s32 %s12, 1
    %s18 = ssub.s32 %s12, 2
    %s25 = sadd.s32 1, %s20
    %p26 = scmp.ge.s32.totalorder %s25, 1
    %s27 = scalar_select %p26, 0, %s25
    %s28 = sadd.s32 1, %s19
    %s29 = scalar_select %p26, %s28, %s19
    %p30 = scmp.ge.s32.totalorder %s29, 2
    %s31 = scalar_select %p30, 0, %s29
    %s32 = ssub.s32 %s19, %s31
    %s33 = ssub.s32 %s20, %s27
    %s34 = sor.u32 %s32, %s33
    %p35 = scmp.eq.s32.totalorder %s34, 0
    %s37 = sadd.s32 %s36, 1
    %s38 = scalar_select %p35, %s36, %s37
    %p41 = pneg %p35
    %p42 = scmp.eq.s32.totalorder %s12, 1
    %p43 = por %p41, %p42
    %p44 = scmp.ne.s32.totalorder %s36, %s39
    %p45 = scmp.eq.s32.totalorder %s12, 0
    %p46 = por %p44, %p45
    %p47 = scmp.ne.s32.totalorder %s36, %s39
    %p48 = scmp.eq.s32.totalorder %s17, 1
    %p49 = por %p47, %p48
    %p50 = scmp.ne.s32.totalorder %s39, %s40
    %p51 = scmp.eq.s32.totalorder %s17, 0
    %p52 = por %p50, %p51
    %p53 = scmp.ne.s32.totalorder %s39, %s40
    %p54 = scmp.eq.s32.totalorder %s18, 1
    %p55 = por %p53, %p54
    %p57 = scmp.ne.s32.totalorder %s40, %s56
    %p58 = scmp.eq.s32.totalorder %s18, 0
    %p59 = por %p57, %p58
    %s60 = ssub.s32 %s20, %s27
    %p61 = scmp.eq.s32.totalorder %s60, 0
    %s63 = sadd.s32 %s62, 1
    %s64 = scalar_select %p61, %s62, %s63
    %p67 = pneg %p61
    %p68 = scmp.eq.s32.totalorder %s12, 1
    %p69 = por %p67, %p68
    %p70 = scmp.ne.s32.totalorder %s62, %s65
    %p71 = scmp.eq.s32.totalorder %s12, 0
    %p72 = por %p70, %p71
    %p73 = scmp.ne.s32.totalorder %s62, %s65
    %p74 = scmp.eq.s32.totalorder %s17, 1
    %p75 = por %p73, %p74
    %p76 = scmp.ne.s32.totalorder %s65, %s66
    %p77 = scmp.eq.s32.totalorder %s17, 0
    %p78 = por %p76, %p77
    %p79 = scmp.ne.s32.totalorder %s65, %s66
    %p80 = scmp.eq.s32.totalorder %s18, 1
    %p81 = por %p79, %p80
    %p83 = scmp.ne.s32.totalorder %s66, %s82
    %p84 = scmp.eq.s32.totalorder %s18, 0
    %p85 = por %p83, %p84
    %s86 = ssub.s32 %s19, %s31
    %p87 = scmp.eq.s32.totalorder %s86, 0
    %s89 = sadd.s32 %s88, 1
    %s90 = scalar_select %p87, %s88, %s89
    %p93 = pneg %p87
    %p94 = scmp.eq.s32.totalorder %s12, 1
    %p95 = por %p93, %p94
    %p96 = scmp.ne.s32.totalorder %s88, %s91
    %p97 = scmp.eq.s32.totalorder %s12, 0
    %p98 = por %p96, %p97
    %p99 = scmp.ne.s32.totalorder %s88, %s91
    %p100 = scmp.eq.s32.totalorder %s17, 1
    %p101 = por %p99, %p100
    %p102 = scmp.ne.s32.totalorder %s91, %s92
    %p103 = scmp.eq.s32.totalorder %s17, 0
    %p104 = por %p102, %p103
    %p105 = scmp.ne.s32.totalorder %s91, %s92
    %p106 = scmp.eq.s32.totalorder %s18, 1
    %p107 = por %p105, %p106
    %p109 = scmp.ne.s32.totalorder %s92, %s108
    %p110 = scmp.eq.s32.totalorder %s18, 0
    %p111 = por %p109, %p110
    %s113 = sadd.s32 %s112, 1
    %p116 = scmp.eq.s32.totalorder %s12, 1
    %p117 = scmp.ne.s32.totalorder %s112, %s114
    %p118 = scmp.eq.s32.totalorder %s12, 0
    %p119 = por %p117, %p118
    %p120 = scmp.ne.s32.totalorder %s112, %s114
    %p121 = scmp.eq.s32.totalorder %s17, 1
    %p122 = por %p120, %p121
    %p123 = scmp.ne.s32.totalorder %s114, %s115
    %p124 = scmp.eq.s32.totalorder %s17, 0
    %p125 = por %p123, %p124
    %p126 = scmp.ne.s32.totalorder %s114, %s115
    %p127 = scmp.eq.s32.totalorder %s18, 1
    %p128 = por %p126, %p127
    %p130 = scmp.ne.s32.totalorder %s115, %s129
    %p131 = scmp.eq.s32.totalorder %s18, 0
    %p132 = por %p130, %p131
    %s133 = ssub.s32 %s19, %s31
    %p134 = scmp.eq.s32.totalorder %s133, 0
    %s136 = sadd.s32 %s135, 1
    %s137 = scalar_select %p134, %s135, %s136
    %p140 = pneg %p134
    %p141 = scmp.eq.s32.totalorder %s12, 1
    %p142 = por %p140, %p141
    %p143 = scmp.ne.s32.totalorder %s135, %s138
    %p144 = scmp.eq.s32.totalorder %s12, 0
    %p145 = por %p143, %p144
    %p146 = scmp.ne.s32.totalorder %s135, %s138
    %p147 = scmp.eq.s32.totalorder %s17, 1
    %p148 = por %p146, %p147
    %p149 = scmp.ne.s32.totalorder %s138, %s139
    %p150 = scmp.eq.s32.totalorder %s17, 0
    %p151 = por %p149, %p150
    %p152 = scmp.ne.s32.totalorder %s138, %s139
    %p153 = scmp.eq.s32.totalorder %s18, 1
    %p154 = por %p152, %p153
    %p156 = scmp.ne.s32.totalorder %s139, %s155
    %p157 = scmp.eq.s32.totalorder %s18, 0
    %p158 = por %p156, %p157
    %s159 = ssub.s32 %s19, %s31
    %p160 = scmp.eq.s32.totalorder %s159, 0
    %s162 = sadd.s32 %s161, 1
    %s163 = scalar_select %p160, %s161, %s162
    %p166 = pneg %p160
    %p167 = scmp.eq.s32.totalorder %s12, 1
    %p168 = por %p166, %p167
    %p169 = scmp.ne.s32.totalorder %s161, %s164
    %p170 = scmp.eq.s32.totalorder %s12, 0
    %p171 = por %p169, %p170
    %p172 = scmp.ne.s32.totalorder %s161, %s164
    %p173 = scmp.eq.s32.totalorder %s17, 1
    %p174 = por %p172, %p173
    %p175 = scmp.ne.s32.totalorder %s164, %s165
    %p176 = scmp.eq.s32.totalorder %s17, 0
    %p177 = por %p175, %p176
    %p178 = scmp.ne.s32.totalorder %s164, %s165
    %p179 = scmp.eq.s32.totalorder %s18, 1
    %p180 = por %p178, %p179
    %p182 = scmp.ne.s32.totalorder %s165, %s181
    %p183 = scmp.eq.s32.totalorder %s18, 0
    %p184 = por %p182, %p183
    %p185 = scmp.le.s32.totalorder 1, %s12
    %p186 = scmp.lt.s32.totalorder %s12, 3
    %p187 = pnand %p185, %p186
    %p188 = pneg %p187
    // Predicated region
    $region9: #{gcn_layer_forward.4} parent=5 // pred_check
      _
    $region10: #{gcn_layer_forward.4} parent=5 // pred_check_branch
      %190 = sbr.rel (%p187) target = $region12
    $region11: #{gcn_layer_forward.4} parent=5 // pred_region
      %s191 = ssub.s32 %s12, 1
      // Predicated region
      $region13: #{gcn_layer_forward.4} parent=11 // pred_check
        %p192 = pneg %p78
      $region14: #{gcn_layer_forward.4} parent=11 // pred_check_branch
        %194 = sbr.rel (%p192) target = $region16
      $region15: #{gcn_layer_forward.4} parent=11 // pred_region
        %s195 = smul.u32 128, %s22
        %p196 = scmp.lt.s32.totalorder %s195, 127
        %s197 = scalar_select %p196, %s195, 127
        %s198 = smul.addr %s197, 4
        %s199 = scalar_lea.vmem %s1, %s198
        %s200 = smul.u32 128, %s22
      $region16: #{gcn_layer_forward.4} parent=11 // pred_fallthru
        _
      // Predicated region
      $region17: #{gcn_layer_forward.4} parent=11 // pred_check
        %p201 = pneg %p125
      $region18: #{gcn_layer_forward.4} parent=11 // pred_check_branch
        %203 = sbr.rel (%p201) target = $region20
      $region19: #{gcn_layer_forward.4} parent=11 // pred_region
        _
      $region20: #{gcn_layer_forward.4} parent=11 // pred_fallthru
        _
    $region12: #{gcn_layer_forward.4} parent=5 // pred_fallthru
      _
    %p204 = scmp.lt.s32.totalorder %s12, 2
    // Predicated region
    $region21: #{gcn_layer_forward.4} parent=5 // pred_check
      %p205 = pneg %p204
    $region22: #{gcn_layer_forward.4} parent=5 // pred_check_branch
      %207 = sbr.rel (%p205) target = $region24
    $region23: #{gcn_layer_forward.4} parent=5 // pred_region
      // Predicated region
      $region25: #{gcn_layer_forward.4} parent=23 // pred_check
        %p208 = pneg %p46
      $region26: #{gcn_layer_forward.4} parent=23 // pred_check_branch
        %210 = sbr.rel (%p208) target = $region28
      $region27: #{gcn_layer_forward.4} parent=23 // pred_region
        %s211 = smul.u32 16, %s19
        %s212 = smul.u32 8, %s20
        %p213 = scmp.lt.s32.totalorder %s211, 31
        %s214 = scalar_select %p213, %s211, 31
        %p215 = scmp.lt.s32.totalorder %s212, 7
        %s216 = scalar_select %p215, %s212, 7
        %s217 = smul.addr %s214, 8
        %s218 = sadd.s32 %s216, %s217
        %s219 = smul.addr %s218, 8
        %s220 = scalar_lea.vmem %s0, %s219
        %s221 = smul.u32 16, %s19
        %s222 = smul.u32 8, %s20
      $region28: #{gcn_layer_forward.4} parent=23 // pred_fallthru
        _
      // Predicated region
      $region29: #{gcn_layer_forward.4} parent=23 // pred_check
        %p223 = pneg %p98
      $region30: #{gcn_layer_forward.4} parent=23 // pred_check_branch
        %225 = sbr.rel (%p223) target = $region32
      $region31: #{gcn_layer_forward.4} parent=23 // pred_region
        %s226 = smul.u32 64, %s19
        %p227 = scmp.lt.s32.totalorder %s226, 127
        %s228 = scalar_select %p227, %s226, 127
        %s229 = smul.addr %s228, 8
        %s230 = scalar_lea.vmem %s2, %s229
        %s231 = smul.u32 64, %s19
      $region32: #{gcn_layer_forward.4} parent=23 // pred_fallthru
        _
    $region24: #{gcn_layer_forward.4} parent=5 // pred_fallthru
      _
    %p232 = scmp.le.s32.totalorder 1, %s12
    %p233 = scmp.lt.s32.totalorder %s12, 3
    %p234 = pnand %p232, %p233
    %p235 = pneg %p234
    // Predicated region
    $region33: #{gcn_layer_forward.4} parent=5 // pred_check
      _
    $region34: #{gcn_layer_forward.4} parent=5 // pred_check_branch
      %237 = sbr.rel (%p234) target = $region36
    $region35: #{gcn_layer_forward.4} parent=5 // pred_region
      %s238 = ssub.s32 %s12, 1
      %s239 = smul.u32 16, %s21
      %s240 = smul.u32 8, %s22
      %p241 = scmp.lt.s32.totalorder %s239, 31
      %s242 = scalar_select %p241, %s239, 31
      %p243 = scmp.lt.s32.totalorder %s240, 7
      %s244 = scalar_select %p243, %s240, 7
      %s245 = smul.addr %s242, 8
      %s246 = sadd.s32 %s244, %s245
      %s247 = smul.addr %s246, 8
      %s248 = scalar_lea.vmem %s0, %s247
      %p249 = pneg %p52
      %p250 = pneg %p49
      %s251 = smul.u32 128, %s22
      %p252 = scmp.lt.s32.totalorder %s251, 127
      %s253 = scalar_select %p252, %s251, 127
      %s254 = smul.addr %s253, 4
      %s255 = scalar_lea.vmem %s1, %s254
      %p256 = pneg %p78
      %p257 = pneg %p75
      %s258 = smul.u32 64, %s21
      %p259 = scmp.lt.s32.totalorder %s258, 127
      %s260 = scalar_select %p259, %s258, 127
      %s261 = smul.addr %s260, 8
      %s262 = scalar_lea.vmem %s2, %s261
      %p263 = pneg %p104
      %p264 = pneg %p101
      %p265 = pneg %p125
      %p266 = pneg %p122
      %p267 = pneg %p151
      %p268 = pneg %p148
      %s269 = smul.u32 64, %s21
      %p270 = scmp.lt.s32.totalorder %s269, 127
      %s271 = scalar_select %p270, %s269, 127
      %s272 = smul.addr %s271, 4
      %s273 = scalar_lea.vmem %s4, %s272
      %p274 = pneg %p177
      %p275 = pneg %p174
      %p276 = scmp.lt.s32.totalorder %s21, 1
      %s277 = scalar_select %p276, %s21, 1
      %s278 = scalar_lea.vmem %s5, %s277
      %s279 = smul.u32 16, %s21
      %s280 = smul.u32 8, %s22
      %p281 = scmp.lt.s32.totalorder %s279, 31
      %s282 = scalar_select %p281, %s279, 31
      %p283 = scmp.lt.s32.totalorder %s280, 7
      %s284 = scalar_select %p283, %s280, 7
      %s285 = smul.addr %s282, 8
      %s286 = sadd.s32 %s284, %s285
      %s287 = smul.addr %s286, 8
      %s288 = scalar_lea.vmem %s0, %s287
      %s289 = smul.u32 16, %s21
      %s290 = smul.u32 8, %s22
      %s291 = smul.u32 128, %s22
      %p292 = scmp.lt.s32.totalorder %s291, 127
      %s293 = scalar_select %p292, %s291, 127
      %s294 = smul.addr %s293, 4
      %s295 = scalar_lea.vmem %s1, %s294
      %s296 = smul.u32 128, %s22
      %s297 = smul.u32 64, %s21
      %p298 = scmp.lt.s32.totalorder %s297, 127
      %s299 = scalar_select %p298, %s297, 127
      %s300 = smul.addr %s299, 8
      %s301 = scalar_lea.vmem %s2, %s300
      %s302 = smul.u32 64, %s21
      %s303 = smul.u32 64, %s21
      %p304 = scmp.lt.s32.totalorder %s303, 127
      %s305 = scalar_select %p304, %s303, 127
      %s306 = smul.addr %s305, 4
      %s307 = scalar_lea.vmem %s4, %s306
      %s308 = smul.u32 64, %s21
      %p309 = scmp.lt.s32.totalorder %s21, 1
      %s310 = scalar_select %p309, %s21, 1
      %s311 = scalar_lea.vmem %s5, %s310
      %p313 = scmp.eq.s32.totalorder %s22, 0
      // Predicated region
      $region37: #{gcn_layer_forward.4} parent=35 // pred_check
        %p314 = pneg %p313
      $region38: #{gcn_layer_forward.4} parent=35 // pred_check_branch
        %316 = sbr.rel (%p314) target = $region40
      $region39: #{gcn_layer_forward.4} parent=35 // pred_region
        %317 = vst [vmem:[#allocation2] sm:$0xff] 0.0
        %318 = vst [vmem:[#allocation2 + $0x8] sm:$0xff] 0.0
        %319 = vst [vmem:[#allocation2 + $0x10] sm:$0xff] 0.0
        %320 = vst [vmem:[#allocation2 + $0x18] sm:$0xff] 0.0
        %321 = vst [vmem:[#allocation2 + $0x20] sm:$0xff] 0.0
        %322 = vst [vmem:[#allocation2 + $0x28] sm:$0xff] 0.0
        %323 = vst [vmem:[#allocation2 + $0x30] sm:$0xff] 0.0
        %324 = vst [vmem:[#allocation2 + $0x38] sm:$0xff] 0.0
        %325 = vst [vmem:[#allocation2 + $0x40] sm:$0xff] 0.0
        %326 = vst [vmem:[#allocation2 + $0x48] sm:$0xff] 0.0
        %327 = vst [vmem:[#allocation2 + $0x50] sm:$0xff] 0.0
        %328 = vst [vmem:[#allocation2 + $0x58] sm:$0xff] 0.0
        %329 = vst [vmem:[#allocation2 + $0x60] sm:$0xff] 0.0
        %330 = vst [vmem:[#allocation2 + $0x68] sm:$0xff] 0.0
        %331 = vst [vmem:[#allocation2 + $0x70] sm:$0xff] 0.0
        %332 = vst [vmem:[#allocation2 + $0x78] sm:$0xff] 0.0
        %333 = vst [vmem:[#allocation2 + $0x80] sm:$0xff] 0.0
        %334 = vst [vmem:[#allocation2 + $0x88] sm:$0xff] 0.0
        %335 = vst [vmem:[#allocation2 + $0x90] sm:$0xff] 0.0
        %336 = vst [vmem:[#allocation2 + $0x98] sm:$0xff] 0.0
        %337 = vst [vmem:[#allocation2 + $0xa0] sm:$0xff] 0.0
        %338 = vst [vmem:[#allocation2 + $0xa8] sm:$0xff] 0.0
        %339 = vst [vmem:[#allocation2 + $0xb0] sm:$0xff] 0.0
        %340 = vst [vmem:[#allocation2 + $0xb8] sm:$0xff] 0.0
        %341 = vst [vmem:[#allocation2 + $0xc0] sm:$0xff] 0.0
        %342 = vst [vmem:[#allocation2 + $0xc8] sm:$0xff] 0.0
        %343 = vst [vmem:[#allocation2 + $0xd0] sm:$0xff] 0.0
        %344 = vst [vmem:[#allocation2 + $0xd8] sm:$0xff] 0.0
        %345 = vst [vmem:[#allocation2 + $0xe0] sm:$0xff] 0.0
        %346 = vst [vmem:[#allocation2 + $0xe8] sm:$0xff] 0.0
        %347 = vst [vmem:[#allocation2 + $0xf0] sm:$0xff] 0.0
        %348 = vst [vmem:[#allocation2 + $0xf8] sm:$0xff] 0.0
        %349 = vst [vmem:[#allocation2 + $0x100] sm:$0xff] 0.0
        %350 = vst [vmem:[#allocation2 + $0x108] sm:$0xff] 0.0
        %351 = vst [vmem:[#allocation2 + $0x110] sm:$0xff] 0.0
        %352 = vst [vmem:[#allocation2 + $0x118] sm:$0xff] 0.0
        %353 = vst [vmem:[#allocation2 + $0x120] sm:$0xff] 0.0
        %354 = vst [vmem:[#allocation2 + $0x128] sm:$0xff] 0.0
        %355 = vst [vmem:[#allocation2 + $0x130] sm:$0xff] 0.0
        %356 = vst [vmem:[#allocation2 + $0x138] sm:$0xff] 0.0
        %357 = vst [vmem:[#allocation2 + $0x140] sm:$0xff] 0.0
        %358 = vst [vmem:[#allocation2 + $0x148] sm:$0xff] 0.0
        %359 = vst [vmem:[#allocation2 + $0x150] sm:$0xff] 0.0
        %360 = vst [vmem:[#allocation2 + $0x158] sm:$0xff] 0.0
        %361 = vst [vmem:[#allocation2 + $0x160] sm:$0xff] 0.0
        %362 = vst [vmem:[#allocation2 + $0x168] sm:$0xff] 0.0
        %363 = vst [vmem:[#allocation2 + $0x170] sm:$0xff] 0.0
        %364 = vst [vmem:[#allocation2 + $0x178] sm:$0xff] 0.0
        %365 = vst [vmem:[#allocation2 + $0x180] sm:$0xff] 0.0
        %366 = vst [vmem:[#allocation2 + $0x188] sm:$0xff] 0.0
        %367 = vst [vmem:[#allocation2 + $0x190] sm:$0xff] 0.0
        %368 = vst [vmem:[#allocation2 + $0x198] sm:$0xff] 0.0
        %369 = vst [vmem:[#allocation2 + $0x1a0] sm:$0xff] 0.0
        %370 = vst [vmem:[#allocation2 + $0x1a8] sm:$0xff] 0.0
        %371 = vst [vmem:[#allocation2 + $0x1b0] sm:$0xff] 0.0
        %372 = vst [vmem:[#allocation2 + $0x1b8] sm:$0xff] 0.0
        %373 = vst [vmem:[#allocation2 + $0x1c0] sm:$0xff] 0.0
        %374 = vst [vmem:[#allocation2 + $0x1c8] sm:$0xff] 0.0
        %375 = vst [vmem:[#allocation2 + $0x1d0] sm:$0xff] 0.0
        %376 = vst [vmem:[#allocation2 + $0x1d8] sm:$0xff] 0.0
        %377 = vst [vmem:[#allocation2 + $0x1e0] sm:$0xff] 0.0
        %378 = vst [vmem:[#allocation2 + $0x1e8] sm:$0xff] 0.0
        %379 = vst [vmem:[#allocation2 + $0x1f0] sm:$0xff] 0.0
        %380 = vst [vmem:[#allocation2 + $0x1f8] sm:$0xff] 0.0
      $region40: #{gcn_layer_forward.4} parent=35 // pred_fallthru
        _
      %v381 = vld [vmem:[%s288] sm:$0xff]
      %v382 = vld [vmem:[%s288 + $0x8] sm:$0xff]
      %v383 = vld [vmem:[%s288 + $0x10] sm:$0xff]
      %v384 = vld [vmem:[%s288 + $0x18] sm:$0xff]
      %v385 = vld [vmem:[%s288 + $0x20] sm:$0xff]
      %v386 = vld [vmem:[%s288 + $0x28] sm:$0xff]
      %v387 = vld [vmem:[%s288 + $0x30] sm:$0xff]
      %v388 = vld [vmem:[%s288 + $0x38] sm:$0xff]
      %v389 = vld [vmem:[%s288 + $0x40] sm:$0xff]
      %v390 = vld [vmem:[%s288 + $0x48] sm:$0xff]
      %v391 = vld [vmem:[%s288 + $0x50] sm:$0xff]
      %v392 = vld [vmem:[%s288 + $0x58] sm:$0xff]
      %v393 = vld [vmem:[%s288 + $0x60] sm:$0xff]
      %v394 = vld [vmem:[%s288 + $0x68] sm:$0xff]
      %v395 = vld [vmem:[%s288 + $0x70] sm:$0xff]
      %v396 = vld [vmem:[%s288 + $0x78] sm:$0xff]
      %v397 = vld [vmem:[%s288 + $0x80] sm:$0xff]
      %v398 = vld [vmem:[%s288 + $0x88] sm:$0xff]
      %v399 = vld [vmem:[%s288 + $0x90] sm:$0xff]
      %v400 = vld [vmem:[%s288 + $0x98] sm:$0xff]
      %v401 = vld [vmem:[%s288 + $0xa0] sm:$0xff]
      %v402 = vld [vmem:[%s288 + $0xa8] sm:$0xff]
      %v403 = vld [vmem:[%s288 + $0xb0] sm:$0xff]
      %v404 = vld [vmem:[%s288 + $0xb8] sm:$0xff]
      %v405 = vld [vmem:[%s288 + $0xc0] sm:$0xff]
      %v406 = vld [vmem:[%s288 + $0xc8] sm:$0xff]
      %v407 = vld [vmem:[%s288 + $0xd0] sm:$0xff]
      %v408 = vld [vmem:[%s288 + $0xd8] sm:$0xff]
      %v409 = vld [vmem:[%s288 + $0xe0] sm:$0xff]
      %v410 = vld [vmem:[%s288 + $0xe8] sm:$0xff]
      %v411 = vld [vmem:[%s288 + $0xf0] sm:$0xff]
      %v412 = vld [vmem:[%s288 + $0xf8] sm:$0xff]
      %v413 = vld [vmem:[%s288 + $0x100] sm:$0xff]
      %v414 = vld [vmem:[%s288 + $0x108] sm:$0xff]
      %v415 = vld [vmem:[%s288 + $0x110] sm:$0xff]
      %v416 = vld [vmem:[%s288 + $0x118] sm:$0xff]
      %v417 = vld [vmem:[%s288 + $0x120] sm:$0xff]
      %v418 = vld [vmem:[%s288 + $0x128] sm:$0xff]
      %v419 = vld [vmem:[%s288 + $0x130] sm:$0xff]
      %v420 = vld [vmem:[%s288 + $0x138] sm:$0xff]
      %v421 = vld [vmem:[%s288 + $0x140] sm:$0xff]
      %v422 = vld [vmem:[%s288 + $0x148] sm:$0xff]
      %v423 = vld [vmem:[%s288 + $0x150] sm:$0xff]
      %v424 = vld [vmem:[%s288 + $0x158] sm:$0xff]
      %v425 = vld [vmem:[%s288 + $0x160] sm:$0xff]
      %v426 = vld [vmem:[%s288 + $0x168] sm:$0xff]
      %v427 = vld [vmem:[%s288 + $0x170] sm:$0xff]
      %v428 = vld [vmem:[%s288 + $0x178] sm:$0xff]
      %v429 = vld [vmem:[%s288 + $0x180] sm:$0xff]
      %v430 = vld [vmem:[%s288 + $0x188] sm:$0xff]
      %v431 = vld [vmem:[%s288 + $0x190] sm:$0xff]
      %v432 = vld [vmem:[%s288 + $0x198] sm:$0xff]
      %v433 = vld [vmem:[%s288 + $0x1a0] sm:$0xff]
      %v434 = vld [vmem:[%s288 + $0x1a8] sm:$0xff]
      %v435 = vld [vmem:[%s288 + $0x1b0] sm:$0xff]
      %v436 = vld [vmem:[%s288 + $0x1b8] sm:$0xff]
      %v437 = vld [vmem:[%s288 + $0x1c0] sm:$0xff]
      %v438 = vld [vmem:[%s288 + $0x1c8] sm:$0xff]
      %v439 = vld [vmem:[%s288 + $0x1d0] sm:$0xff]
      %v440 = vld [vmem:[%s288 + $0x1d8] sm:$0xff]
      %v441 = vld [vmem:[%s288 + $0x1e0] sm:$0xff]
      %v442 = vld [vmem:[%s288 + $0x1e8] sm:$0xff]
      %v443 = vld [vmem:[%s288 + $0x1f0] sm:$0xff]
      %v444 = vld [vmem:[%s288 + $0x1f8] sm:$0xff]
      %v445 = vld [vmem:[%s288 + $0x200] sm:$0xff]
      %v446 = vld [vmem:[%s288 + $0x208] sm:$0xff]
      %v447 = vld [vmem:[%s288 + $0x210] sm:$0xff]
      %v448 = vld [vmem:[%s288 + $0x218] sm:$0xff]
      %v449 = vld [vmem:[%s288 + $0x220] sm:$0xff]
      %v450 = vld [vmem:[%s288 + $0x228] sm:$0xff]
      %v451 = vld [vmem:[%s288 + $0x230] sm:$0xff]
      %v452 = vld [vmem:[%s288 + $0x238] sm:$0xff]
      %v453 = vld [vmem:[%s288 + $0x240] sm:$0xff]
      %v454 = vld [vmem:[%s288 + $0x248] sm:$0xff]
      %v455 = vld [vmem:[%s288 + $0x250] sm:$0xff]
      %v456 = vld [vmem:[%s288 + $0x258] sm:$0xff]
      %v457 = vld [vmem:[%s288 + $0x260] sm:$0xff]
      %v458 = vld [vmem:[%s288 + $0x268] sm:$0xff]
      %v459 = vld [vmem:[%s288 + $0x270] sm:$0xff]
      %v460 = vld [vmem:[%s288 + $0x278] sm:$0xff]
      %v461 = vld [vmem:[%s288 + $0x280] sm:$0xff]
      %v462 = vld [vmem:[%s288 + $0x288] sm:$0xff]
      %v463 = vld [vmem:[%s288 + $0x290] sm:$0xff]
      %v464 = vld [vmem:[%s288 + $0x298] sm:$0xff]
      %v465 = vld [vmem:[%s288 + $0x2a0] sm:$0xff]
      %v466 = vld [vmem:[%s288 + $0x2a8] sm:$0xff]
      %v467 = vld [vmem:[%s288 + $0x2b0] sm:$0xff]
      %v468 = vld [vmem:[%s288 + $0x2b8] sm:$0xff]
      %v469 = vld [vmem:[%s288 + $0x2c0] sm:$0xff]
      %v470 = vld [vmem:[%s288 + $0x2c8] sm:$0xff]
      %v471 = vld [vmem:[%s288 + $0x2d0] sm:$0xff]
      %v472 = vld [vmem:[%s288 + $0x2d8] sm:$0xff]
      %v473 = vld [vmem:[%s288 + $0x2e0] sm:$0xff]
      %v474 = vld [vmem:[%s288 + $0x2e8] sm:$0xff]
      %v475 = vld [vmem:[%s288 + $0x2f0] sm:$0xff]
      %v476 = vld [vmem:[%s288 + $0x2f8] sm:$0xff]
      %v477 = vld [vmem:[%s288 + $0x300] sm:$0xff]
      %v478 = vld [vmem:[%s288 + $0x308] sm:$0xff]
      %v479 = vld [vmem:[%s288 + $0x310] sm:$0xff]
      %v480 = vld [vmem:[%s288 + $0x318] sm:$0xff]
      %v481 = vld [vmem:[%s288 + $0x320] sm:$0xff]
      %v482 = vld [vmem:[%s288 + $0x328] sm:$0xff]
      %v483 = vld [vmem:[%s288 + $0x330] sm:$0xff]
      %v484 = vld [vmem:[%s288 + $0x338] sm:$0xff]
      %v485 = vld [vmem:[%s288 + $0x340] sm:$0xff]
      %v486 = vld [vmem:[%s288 + $0x348] sm:$0xff]
      %v487 = vld [vmem:[%s288 + $0x350] sm:$0xff]
      %v488 = vld [vmem:[%s288 + $0x358] sm:$0xff]
      %v489 = vld [vmem:[%s288 + $0x360] sm:$0xff]
      %v490 = vld [vmem:[%s288 + $0x368] sm:$0xff]
      %v491 = vld [vmem:[%s288 + $0x370] sm:$0xff]
      %v492 = vld [vmem:[%s288 + $0x378] sm:$0xff]
      %v493 = vld [vmem:[%s288 + $0x380] sm:$0xff]
      %v494 = vld [vmem:[%s288 + $0x388] sm:$0xff]
      %v495 = vld [vmem:[%s288 + $0x390] sm:$0xff]
      %v496 = vld [vmem:[%s288 + $0x398] sm:$0xff]
      %v497 = vld [vmem:[%s288 + $0x3a0] sm:$0xff]
      %v498 = vld [vmem:[%s288 + $0x3a8] sm:$0xff]
      %v499 = vld [vmem:[%s288 + $0x3b0] sm:$0xff]
      %v500 = vld [vmem:[%s288 + $0x3b8] sm:$0xff]
      %v501 = vld [vmem:[%s288 + $0x3c0] sm:$0xff]
      %v502 = vld [vmem:[%s288 + $0x3c8] sm:$0xff]
      %v503 = vld [vmem:[%s288 + $0x3d0] sm:$0xff]
      %v504 = vld [vmem:[%s288 + $0x3d8] sm:$0xff]
      %v505 = vld [vmem:[%s288 + $0x3e0] sm:$0xff]
      %v506 = vld [vmem:[%s288 + $0x3e8] sm:$0xff]
      %v507 = vld [vmem:[%s288 + $0x3f0] sm:$0xff]
      %v508 = vld [vmem:[%s288 + $0x3f8] sm:$0xff]
      %v509 = vunpack.c.l.s8.bf16 %v381
      %v510 = vunpack.c.l.s8.bf16 %v382
      %v511 = vunpack.c.l.s8.bf16 %v383
      %v512 = vunpack.c.l.s8.bf16 %v384
      %v513 = vunpack.c.l.s8.bf16 %v385
      %v514 = vunpack.c.l.s8.bf16 %v386
      %v515 = vunpack.c.l.s8.bf16 %v387
      %v516 = vunpack.c.l.s8.bf16 %v388
      %v517 = vunpack.c.h.s8.bf16 %v381
      %v518 = vunpack.c.h.s8.bf16 %v382
      %v519 = vunpack.c.h.s8.bf16 %v383
      %v520 = vunpack.c.h.s8.bf16 %v384
      %v521 = vunpack.c.h.s8.bf16 %v385
      %v522 = vunpack.c.h.s8.bf16 %v386
      %v523 = vunpack.c.h.s8.bf16 %v387
      %v524 = vunpack.c.h.s8.bf16 %v388
      %v525 = vunpack.c.l.s8.bf16 %v389
      %v526 = vunpack.c.l.s8.bf16 %v390
      %v527 = vunpack.c.l.s8.bf16 %v391
      %v528 = vunpack.c.l.s8.bf16 %v392
      %v529 = vunpack.c.l.s8.bf16 %v393
      %v530 = vunpack.c.l.s8.bf16 %v394
      %v531 = vunpack.c.l.s8.bf16 %v395
      %v532 = vunpack.c.l.s8.bf16 %v396
      %v533 = vunpack.c.h.s8.bf16 %v389
      %v534 = vunpack.c.h.s8.bf16 %v390
      %v535 = vunpack.c.h.s8.bf16 %v391
      %v536 = vunpack.c.h.s8.bf16 %v392
      %v537 = vunpack.c.h.s8.bf16 %v393
      %v538 = vunpack.c.h.s8.bf16 %v394
      %v539 = vunpack.c.h.s8.bf16 %v395
      %v540 = vunpack.c.h.s8.bf16 %v396
      %v541 = vunpack.c.l.s8.bf16 %v397
      %v542 = vunpack.c.l.s8.bf16 %v398
      %v543 = vunpack.c.l.s8.bf16 %v399
      %v544 = vunpack.c.l.s8.bf16 %v400
      %v545 = vunpack.c.l.s8.bf16 %v401
      %v546 = vunpack.c.l.s8.bf16 %v402
      %v547 = vunpack.c.l.s8.bf16 %v403
      %v548 = vunpack.c.l.s8.bf16 %v404
      %v549 = vunpack.c.h.s8.bf16 %v397
      %v550 = vunpack.c.h.s8.bf16 %v398
      %v551 = vunpack.c.h.s8.bf16 %v399
      %v552 = vunpack.c.h.s8.bf16 %v400
      %v553 = vunpack.c.h.s8.bf16 %v401
      %v554 = vunpack.c.h.s8.bf16 %v402
      %v555 = vunpack.c.h.s8.bf16 %v403
      %v556 = vunpack.c.h.s8.bf16 %v404
      %v557 = vunpack.c.l.s8.bf16 %v405
      %v558 = vunpack.c.l.s8.bf16 %v406
      %v559 = vunpack.c.l.s8.bf16 %v407
      %v560 = vunpack.c.l.s8.bf16 %v408
      %v561 = vunpack.c.l.s8.bf16 %v409
      %v562 = vunpack.c.l.s8.bf16 %v410
      %v563 = vunpack.c.l.s8.bf16 %v411
      %v564 = vunpack.c.l.s8.bf16 %v412
      %v565 = vunpack.c.h.s8.bf16 %v405
      %v566 = vunpack.c.h.s8.bf16 %v406
      %v567 = vunpack.c.h.s8.bf16 %v407
      %v568 = vunpack.c.h.s8.bf16 %v408
      %v569 = vunpack.c.h.s8.bf16 %v409
      %v570 = vunpack.c.h.s8.bf16 %v410
      %v571 = vunpack.c.h.s8.bf16 %v411
      %v572 = vunpack.c.h.s8.bf16 %v412
      %v573 = vunpack.c.l.s8.bf16 %v413
      %v574 = vunpack.c.l.s8.bf16 %v414
      %v575 = vunpack.c.l.s8.bf16 %v415
      %v576 = vunpack.c.l.s8.bf16 %v416
      %v577 = vunpack.c.l.s8.bf16 %v417
      %v578 = vunpack.c.l.s8.bf16 %v418
      %v579 = vunpack.c.l.s8.bf16 %v419
      %v580 = vunpack.c.l.s8.bf16 %v420
      %v581 = vunpack.c.h.s8.bf16 %v413
      %v582 = vunpack.c.h.s8.bf16 %v414
      %v583 = vunpack.c.h.s8.bf16 %v415
      %v584 = vunpack.c.h.s8.bf16 %v416
      %v585 = vunpack.c.h.s8.bf16 %v417
      %v586 = vunpack.c.h.s8.bf16 %v418
      %v587 = vunpack.c.h.s8.bf16 %v419
      %v588 = vunpack.c.h.s8.bf16 %v420
      %v589 = vunpack.c.l.s8.bf16 %v421
      %v590 = vunpack.c.l.s8.bf16 %v422
      %v591 = vunpack.c.l.s8.bf16 %v423
      %v592 = vunpack.c.l.s8.bf16 %v424
      %v593 = vunpack.c.l.s8.bf16 %v425
      %v594 = vunpack.c.l.s8.bf16 %v426
      %v595 = vunpack.c.l.s8.bf16 %v427
      %v596 = vunpack.c.l.s8.bf16 %v428
      %v597 = vunpack.c.h.s8.bf16 %v421
      %v598 = vunpack.c.h.s8.bf16 %v422
      %v599 = vunpack.c.h.s8.bf16 %v423
      %v600 = vunpack.c.h.s8.bf16 %v424
      %v601 = vunpack.c.h.s8.bf16 %v425
      %v602 = vunpack.c.h.s8.bf16 %v426
      %v603 = vunpack.c.h.s8.bf16 %v427
      %v604 = vunpack.c.h.s8.bf16 %v428
      %v605 = vunpack.c.l.s8.bf16 %v429
      %v606 = vunpack.c.l.s8.bf16 %v430
      %v607 = vunpack.c.l.s8.bf16 %v431
      %v608 = vunpack.c.l.s8.bf16 %v432
      %v609 = vunpack.c.l.s8.bf16 %v433
      %v610 = vunpack.c.l.s8.bf16 %v434
      %v611 = vunpack.c.l.s8.bf16 %v435
      %v612 = vunpack.c.l.s8.bf16 %v436
      %v613 = vunpack.c.h.s8.bf16 %v429
      %v614 = vunpack.c.h.s8.bf16 %v430
      %v615 = vunpack.c.h.s8.bf16 %v431
      %v616 = vunpack.c.h.s8.bf16 %v432
      %v617 = vunpack.c.h.s8.bf16 %v433
      %v618 = vunpack.c.h.s8.bf16 %v434
      %v619 = vunpack.c.h.s8.bf16 %v435
      %v620 = vunpack.c.h.s8.bf16 %v436
      %v621 = vunpack.c.l.s8.bf16 %v437
      %v622 = vunpack.c.l.s8.bf16 %v438
      %v623 = vunpack.c.l.s8.bf16 %v439
      %v624 = vunpack.c.l.s8.bf16 %v440
      %v625 = vunpack.c.l.s8.bf16 %v441
      %v626 = vunpack.c.l.s8.bf16 %v442
      %v627 = vunpack.c.l.s8.bf16 %v443
      %v628 = vunpack.c.l.s8.bf16 %v444
      %v629 = vunpack.c.h.s8.bf16 %v437
      %v630 = vunpack.c.h.s8.bf16 %v438
      %v631 = vunpack.c.h.s8.bf16 %v439
      %v632 = vunpack.c.h.s8.bf16 %v440
      %v633 = vunpack.c.h.s8.bf16 %v441
      %v634 = vunpack.c.h.s8.bf16 %v442
      %v635 = vunpack.c.h.s8.bf16 %v443
      %v636 = vunpack.c.h.s8.bf16 %v444
      %v637 = vunpack.c.l.s8.bf16 %v445
      %v638 = vunpack.c.l.s8.bf16 %v446
      %v639 = vunpack.c.l.s8.bf16 %v447
      %v640 = vunpack.c.l.s8.bf16 %v448
      %v641 = vunpack.c.l.s8.bf16 %v449
      %v642 = vunpack.c.l.s8.bf16 %v450
      %v643 = vunpack.c.l.s8.bf16 %v451
      %v644 = vunpack.c.l.s8.bf16 %v452
      %v645 = vunpack.c.h.s8.bf16 %v445
      %v646 = vunpack.c.h.s8.bf16 %v446
      %v647 = vunpack.c.h.s8.bf16 %v447
      %v648 = vunpack.c.h.s8.bf16 %v448
      %v649 = vunpack.c.h.s8.bf16 %v449
      %v650 = vunpack.c.h.s8.bf16 %v450
      %v651 = vunpack.c.h.s8.bf16 %v451
      %v652 = vunpack.c.h.s8.bf16 %v452
      %v653 = vunpack.c.l.s8.bf16 %v453
      %v654 = vunpack.c.l.s8.bf16 %v454
      %v655 = vunpack.c.l.s8.bf16 %v455
      %v656 = vunpack.c.l.s8.bf16 %v456
      %v657 = vunpack.c.l.s8.bf16 %v457
      %v658 = vunpack.c.l.s8.bf16 %v458
      %v659 = vunpack.c.l.s8.bf16 %v459
      %v660 = vunpack.c.l.s8.bf16 %v460
      %v661 = vunpack.c.h.s8.bf16 %v453
      %v662 = vunpack.c.h.s8.bf16 %v454
      %v663 = vunpack.c.h.s8.bf16 %v455
      %v664 = vunpack.c.h.s8.bf16 %v456
      %v665 = vunpack.c.h.s8.bf16 %v457
      %v666 = vunpack.c.h.s8.bf16 %v458
      %v667 = vunpack.c.h.s8.bf16 %v459
      %v668 = vunpack.c.h.s8.bf16 %v460
      %v669 = vunpack.c.l.s8.bf16 %v461
      %v670 = vunpack.c.l.s8.bf16 %v462
      %v671 = vunpack.c.l.s8.bf16 %v463
      %v672 = vunpack.c.l.s8.bf16 %v464
      %v673 = vunpack.c.l.s8.bf16 %v465
      %v674 = vunpack.c.l.s8.bf16 %v466
      %v675 = vunpack.c.l.s8.bf16 %v467
      %v676 = vunpack.c.l.s8.bf16 %v468
      %v677 = vunpack.c.h.s8.bf16 %v461
      %v678 = vunpack.c.h.s8.bf16 %v462
      %v679 = vunpack.c.h.s8.bf16 %v463
      %v680 = vunpack.c.h.s8.bf16 %v464
      %v681 = vunpack.c.h.s8.bf16 %v465
      %v682 = vunpack.c.h.s8.bf16 %v466
      %v683 = vunpack.c.h.s8.bf16 %v467
      %v684 = vunpack.c.h.s8.bf16 %v468
      %v685 = vunpack.c.l.s8.bf16 %v469
      %v686 = vunpack.c.l.s8.bf16 %v470
      %v687 = vunpack.c.l.s8.bf16 %v471
      %v688 = vunpack.c.l.s8.bf16 %v472
      %v689 = vunpack.c.l.s8.bf16 %v473
      %v690 = vunpack.c.l.s8.bf16 %v474
      %v691 = vunpack.c.l.s8.bf16 %v475
      %v692 = vunpack.c.l.s8.bf16 %v476
      %v693 = vunpack.c.h.s8.bf16 %v469
      %v694 = vunpack.c.h.s8.bf16 %v470
      %v695 = vunpack.c.h.s8.bf16 %v471
      %v696 = vunpack.c.h.s8.bf16 %v472
      %v697 = vunpack.c.h.s8.bf16 %v473
      %v698 = vunpack.c.h.s8.bf16 %v474
      %v699 = vunpack.c.h.s8.bf16 %v475
      %v700 = vunpack.c.h.s8.bf16 %v476
      %v701 = vunpack.c.l.s8.bf16 %v477
      %v702 = vunpack.c.l.s8.bf16 %v478
      %v703 = vunpack.c.l.s8.bf16 %v479
      %v704 = vunpack.c.l.s8.bf16 %v480
      %v705 = vunpack.c.l.s8.bf16 %v481
      %v706 = vunpack.c.l.s8.bf16 %v482
      %v707 = vunpack.c.l.s8.bf16 %v483
      %v708 = vunpack.c.l.s8.bf16 %v484
      %v709 = vunpack.c.h.s8.bf16 %v477
      %v710 = vunpack.c.h.s8.bf16 %v478
      %v711 = vunpack.c.h.s8.bf16 %v479
      %v712 = vunpack.c.h.s8.bf16 %v480
      %v713 = vunpack.c.h.s8.bf16 %v481
      %v714 = vunpack.c.h.s8.bf16 %v482
      %v715 = vunpack.c.h.s8.bf16 %v483
      %v716 = vunpack.c.h.s8.bf16 %v484
      %v717 = vunpack.c.l.s8.bf16 %v485
      %v718 = vunpack.c.l.s8.bf16 %v486
      %v719 = vunpack.c.l.s8.bf16 %v487
      %v720 = vunpack.c.l.s8.bf16 %v488
      %v721 = vunpack.c.l.s8.bf16 %v489
      %v722 = vunpack.c.l.s8.bf16 %v490
      %v723 = vunpack.c.l.s8.bf16 %v491
      %v724 = vunpack.c.l.s8.bf16 %v492
      %v725 = vunpack.c.h.s8.bf16 %v485
      %v726 = vunpack.c.h.s8.bf16 %v486
      %v727 = vunpack.c.h.s8.bf16 %v487
      %v728 = vunpack.c.h.s8.bf16 %v488
      %v729 = vunpack.c.h.s8.bf16 %v489
      %v730 = vunpack.c.h.s8.bf16 %v490
      %v731 = vunpack.c.h.s8.bf16 %v491
      %v732 = vunpack.c.h.s8.bf16 %v492
      %v733 = vunpack.c.l.s8.bf16 %v493
      %v734 = vunpack.c.l.s8.bf16 %v494
      %v735 = vunpack.c.l.s8.bf16 %v495
      %v736 = vunpack.c.l.s8.bf16 %v496
      %v737 = vunpack.c.l.s8.bf16 %v497
      %v738 = vunpack.c.l.s8.bf16 %v498
      %v739 = vunpack.c.l.s8.bf16 %v499
      %v740 = vunpack.c.l.s8.bf16 %v500
      %v741 = vunpack.c.h.s8.bf16 %v493
      %v742 = vunpack.c.h.s8.bf16 %v494
      %v743 = vunpack.c.h.s8.bf16 %v495
      %v744 = vunpack.c.h.s8.bf16 %v496
      %v745 = vunpack.c.h.s8.bf16 %v497
      %v746 = vunpack.c.h.s8.bf16 %v498
      %v747 = vunpack.c.h.s8.bf16 %v499
      %v748 = vunpack.c.h.s8.bf16 %v500
      %v749 = vunpack.c.l.s8.bf16 %v501
      %v750 = vunpack.c.l.s8.bf16 %v502
      %v751 = vunpack.c.l.s8.bf16 %v503
      %v752 = vunpack.c.l.s8.bf16 %v504
      %v753 = vunpack.c.l.s8.bf16 %v505
      %v754 = vunpack.c.l.s8.bf16 %v506
      %v755 = vunpack.c.l.s8.bf16 %v507
      %v756 = vunpack.c.l.s8.bf16 %v508
      %v757 = vunpack.c.h.s8.bf16 %v501
      %v758 = vunpack.c.h.s8.bf16 %v502
      %v759 = vunpack.c.h.s8.bf16 %v503
      %v760 = vunpack.c.h.s8.bf16 %v504
      %v761 = vunpack.c.h.s8.bf16 %v505
      %v762 = vunpack.c.h.s8.bf16 %v506
      %v763 = vunpack.c.h.s8.bf16 %v507
      %v764 = vunpack.c.h.s8.bf16 %v508
      %v765 = vld [vmem:[#allocation2] sm:$0xff]
      %v766 = vld [vmem:[#allocation2 + $0x8] sm:$0xff]
      %v767 = vld [vmem:[#allocation2 + $0x10] sm:$0xff]
      %v768 = vld [vmem:[#allocation2 + $0x18] sm:$0xff]
      %v769 = vld [vmem:[#allocation2 + $0x20] sm:$0xff]
      %v770 = vld [vmem:[#allocation2 + $0x28] sm:$0xff]
      %v771 = vld [vmem:[#allocation2 + $0x30] sm:$0xff]
      %v772 = vld [vmem:[#allocation2 + $0x38] sm:$0xff]
      %v773 = vld [vmem:[#allocation2 + $0x40] sm:$0xff]
      %v774 = vld [vmem:[#allocation2 + $0x48] sm:$0xff]
      %v775 = vld [vmem:[#allocation2 + $0x50] sm:$0xff]
      %v776 = vld [vmem:[#allocation2 + $0x58] sm:$0xff]
      %v777 = vld [vmem:[#allocation2 + $0x60] sm:$0xff]
      %v778 = vld [vmem:[#allocation2 + $0x68] sm:$0xff]
      %v779 = vld [vmem:[#allocation2 + $0x70] sm:$0xff]
      %v780 = vld [vmem:[#allocation2 + $0x78] sm:$0xff]
      %v781 = vld [vmem:[#allocation2 + $0x80] sm:$0xff]
      %v782 = vld [vmem:[#allocation2 + $0x88] sm:$0xff]
      %v783 = vld [vmem:[#allocation2 + $0x90] sm:$0xff]
      %v784 = vld [vmem:[#allocation2 + $0x98] sm:$0xff]
      %v785 = vld [vmem:[#allocation2 + $0xa0] sm:$0xff]
      %v786 = vld [vmem:[#allocation2 + $0xa8] sm:$0xff]
      %v787 = vld [vmem:[#allocation2 + $0xb0] sm:$0xff]
      %v788 = vld [vmem:[#allocation2 + $0xb8] sm:$0xff]
      %v789 = vld [vmem:[#allocation2 + $0xc0] sm:$0xff]
      %v790 = vld [vmem:[#allocation2 + $0xc8] sm:$0xff]
      %v791 = vld [vmem:[#allocation2 + $0xd0] sm:$0xff]
      %v792 = vld [vmem:[#allocation2 + $0xd8] sm:$0xff]
      %v793 = vld [vmem:[#allocation2 + $0xe0] sm:$0xff]
      %v794 = vld [vmem:[#allocation2 + $0xe8] sm:$0xff]
      %v795 = vld [vmem:[#allocation2 + $0xf0] sm:$0xff]
      %v796 = vld [vmem:[#allocation2 + $0xf8] sm:$0xff]
      %v797 = vld [vmem:[#allocation2 + $0x100] sm:$0xff]
      %v798 = vld [vmem:[#allocation2 + $0x108] sm:$0xff]
      %v799 = vld [vmem:[#allocation2 + $0x110] sm:$0xff]
      %v800 = vld [vmem:[#allocation2 + $0x118] sm:$0xff]
      %v801 = vld [vmem:[#allocation2 + $0x120] sm:$0xff]
      %v802 = vld [vmem:[#allocation2 + $0x128] sm:$0xff]
      %v803 = vld [vmem:[#allocation2 + $0x130] sm:$0xff]
      %v804 = vld [vmem:[#allocation2 + $0x138] sm:$0xff]
      %v805 = vld [vmem:[#allocation2 + $0x140] sm:$0xff]
      %v806 = vld [vmem:[#allocation2 + $0x148] sm:$0xff]
      %v807 = vld [vmem:[#allocation2 + $0x150] sm:$0xff]
      %v808 = vld [vmem:[#allocation2 + $0x158] sm:$0xff]
      %v809 = vld [vmem:[#allocation2 + $0x160] sm:$0xff]
      %v810 = vld [vmem:[#allocation2 + $0x168] sm:$0xff]
      %v811 = vld [vmem:[#allocation2 + $0x170] sm:$0xff]
      %v812 = vld [vmem:[#allocation2 + $0x178] sm:$0xff]
      %v813 = vld [vmem:[#allocation2 + $0x180] sm:$0xff]
      %v814 = vld [vmem:[#allocation2 + $0x188] sm:$0xff]
      %v815 = vld [vmem:[#allocation2 + $0x190] sm:$0xff]
      %v816 = vld [vmem:[#allocation2 + $0x198] sm:$0xff]
      %v817 = vld [vmem:[#allocation2 + $0x1a0] sm:$0xff]
      %v818 = vld [vmem:[#allocation2 + $0x1a8] sm:$0xff]
      %v819 = vld [vmem:[#allocation2 + $0x1b0] sm:$0xff]
      %v820 = vld [vmem:[#allocation2 + $0x1b8] sm:$0xff]
      %v821 = vld [vmem:[#allocation2 + $0x1c0] sm:$0xff]
      %v822 = vld [vmem:[#allocation2 + $0x1c8] sm:$0xff]
      %v823 = vld [vmem:[#allocation2 + $0x1d0] sm:$0xff]
      %v824 = vld [vmem:[#allocation2 + $0x1d8] sm:$0xff]
      %v825 = vld [vmem:[#allocation2 + $0x1e0] sm:$0xff]
      %v826 = vld [vmem:[#allocation2 + $0x1e8] sm:$0xff]
      %v827 = vld [vmem:[#allocation2 + $0x1f0] sm:$0xff]
      %v828 = vld [vmem:[#allocation2 + $0x1f8] sm:$0xff]
      %v829 = vld [vmem:[%s295] sm:$0xf]
      %v830 = vld [vmem:[%s295 + $0x4] sm:$0xf]
      %v831 = vld [vmem:[%s295 + $0x8] sm:$0xf]
      %v832 = vld [vmem:[%s295 + $0xc] sm:$0xf]
      %v833 = vld [vmem:[%s295 + $0x10] sm:$0xf]
      %v834 = vld [vmem:[%s295 + $0x14] sm:$0xf]
      %v835 = vld [vmem:[%s295 + $0x18] sm:$0xf]
      %v836 = vld [vmem:[%s295 + $0x1c] sm:$0xf]
      %v837 = vld [vmem:[%s295 + $0x20] sm:$0xf]
      %v838 = vld [vmem:[%s295 + $0x24] sm:$0xf]
      %v839 = vld [vmem:[%s295 + $0x28] sm:$0xf]
      %v840 = vld [vmem:[%s295 + $0x2c] sm:$0xf]
      %v841 = vld [vmem:[%s295 + $0x30] sm:$0xf]
      %v842 = vld [vmem:[%s295 + $0x34] sm:$0xf]
      %v843 = vld [vmem:[%s295 + $0x38] sm:$0xf]
      %v844 = vld [vmem:[%s295 + $0x3c] sm:$0xf]
      %v845 = vld [vmem:[%s295 + $0x40] sm:$0xf]
      %v846 = vld [vmem:[%s295 + $0x44] sm:$0xf]
      %v847 = vld [vmem:[%s295 + $0x48] sm:$0xf]
      %v848 = vld [vmem:[%s295 + $0x4c] sm:$0xf]
      %v849 = vld [vmem:[%s295 + $0x50] sm:$0xf]
      %v850 = vld [vmem:[%s295 + $0x54] sm:$0xf]
      %v851 = vld [vmem:[%s295 + $0x58] sm:$0xf]
      %v852 = vld [vmem:[%s295 + $0x5c] sm:$0xf]
      %v853 = vld [vmem:[%s295 + $0x60] sm:$0xf]
      %v854 = vld [vmem:[%s295 + $0x64] sm:$0xf]
      %v855 = vld [vmem:[%s295 + $0x68] sm:$0xf]
      %v856 = vld [vmem:[%s295 + $0x6c] sm:$0xf]
      %v857 = vld [vmem:[%s295 + $0x70] sm:$0xf]
      %v858 = vld [vmem:[%s295 + $0x74] sm:$0xf]
      %v859 = vld [vmem:[%s295 + $0x78] sm:$0xf]
      %v860 = vld [vmem:[%s295 + $0x7c] sm:$0xf]
      %v861 = vld [vmem:[%s295 + $0x80] sm:$0xf]
      %v862 = vld [vmem:[%s295 + $0x84] sm:$0xf]
      %v863 = vld [vmem:[%s295 + $0x88] sm:$0xf]
      %v864 = vld [vmem:[%s295 + $0x8c] sm:$0xf]
      %v865 = vld [vmem:[%s295 + $0x90] sm:$0xf]
      %v866 = vld [vmem:[%s295 + $0x94] sm:$0xf]
      %v867 = vld [vmem:[%s295 + $0x98] sm:$0xf]
      %v868 = vld [vmem:[%s295 + $0x9c] sm:$0xf]
      %v869 = vld [vmem:[%s295 + $0xa0] sm:$0xf]
      %v870 = vld [vmem:[%s295 + $0xa4] sm:$0xf]
      %v871 = vld [vmem:[%s295 + $0xa8] sm:$0xf]
      %v872 = vld [vmem:[%s295 + $0xac] sm:$0xf]
      %v873 = vld [vmem:[%s295 + $0xb0] sm:$0xf]
      %v874 = vld [vmem:[%s295 + $0xb4] sm:$0xf]
      %v875 = vld [vmem:[%s295 + $0xb8] sm:$0xf]
      %v876 = vld [vmem:[%s295 + $0xbc] sm:$0xf]
      %v877 = vld [vmem:[%s295 + $0xc0] sm:$0xf]
      %v878 = vld [vmem:[%s295 + $0xc4] sm:$0xf]
      %v879 = vld [vmem:[%s295 + $0xc8] sm:$0xf]
      %v880 = vld [vmem:[%s295 + $0xcc] sm:$0xf]
      %v881 = vld [vmem:[%s295 + $0xd0] sm:$0xf]
      %v882 = vld [vmem:[%s295 + $0xd4] sm:$0xf]
      %v883 = vld [vmem:[%s295 + $0xd8] sm:$0xf]
      %v884 = vld [vmem:[%s295 + $0xdc] sm:$0xf]
      %v885 = vld [vmem:[%s295 + $0xe0] sm:$0xf]
      %v886 = vld [vmem:[%s295 + $0xe4] sm:$0xf]
      %v887 = vld [vmem:[%s295 + $0xe8] sm:$0xf]
      %v888 = vld [vmem:[%s295 + $0xec] sm:$0xf]
      %v889 = vld [vmem:[%s295 + $0xf0] sm:$0xf]
      %v890 = vld [vmem:[%s295 + $0xf4] sm:$0xf]
      %v891 = vld [vmem:[%s295 + $0xf8] sm:$0xf]
      %v892 = vld [vmem:[%s295 + $0xfc] sm:$0xf]
      %v893 = vld [vmem:[%s295 + $0x100] sm:$0xf]
      %v894 = vld [vmem:[%s295 + $0x104] sm:$0xf]
      %v895 = vld [vmem:[%s295 + $0x108] sm:$0xf]
      %v896 = vld [vmem:[%s295 + $0x10c] sm:$0xf]
      %v897 = vld [vmem:[%s295 + $0x110] sm:$0xf]
      %v898 = vld [vmem:[%s295 + $0x114] sm:$0xf]
      %v899 = vld [vmem:[%s295 + $0x118] sm:$0xf]
      %v900 = vld [vmem:[%s295 + $0x11c] sm:$0xf]
      %v901 = vld [vmem:[%s295 + $0x120] sm:$0xf]
      %v902 = vld [vmem:[%s295 + $0x124] sm:$0xf]
      %v903 = vld [vmem:[%s295 + $0x128] sm:$0xf]
      %v904 = vld [vmem:[%s295 + $0x12c] sm:$0xf]
      %v905 = vld [vmem:[%s295 + $0x130] sm:$0xf]
      %v906 = vld [vmem:[%s295 + $0x134] sm:$0xf]
      %v907 = vld [vmem:[%s295 + $0x138] sm:$0xf]
      %v908 = vld [vmem:[%s295 + $0x13c] sm:$0xf]
      %v909 = vld [vmem:[%s295 + $0x140] sm:$0xf]
      %v910 = vld [vmem:[%s295 + $0x144] sm:$0xf]
      %v911 = vld [vmem:[%s295 + $0x148] sm:$0xf]
      %v912 = vld [vmem:[%s295 + $0x14c] sm:$0xf]
      %v913 = vld [vmem:[%s295 + $0x150] sm:$0xf]
      %v914 = vld [vmem:[%s295 + $0x154] sm:$0xf]
      %v915 = vld [vmem:[%s295 + $0x158] sm:$0xf]
      %v916 = vld [vmem:[%s295 + $0x15c] sm:$0xf]
      %v917 = vld [vmem:[%s295 + $0x160] sm:$0xf]
      %v918 = vld [vmem:[%s295 + $0x164] sm:$0xf]
      %v919 = vld [vmem:[%s295 + $0x168] sm:$0xf]
      %v920 = vld [vmem:[%s295 + $0x16c] sm:$0xf]
      %v921 = vld [vmem:[%s295 + $0x170] sm:$0xf]
      %v922 = vld [vmem:[%s295 + $0x174] sm:$0xf]
      %v923 = vld [vmem:[%s295 + $0x178] sm:$0xf]
      %v924 = vld [vmem:[%s295 + $0x17c] sm:$0xf]
      %v925 = vld [vmem:[%s295 + $0x180] sm:$0xf]
      %v926 = vld [vmem:[%s295 + $0x184] sm:$0xf]
      %v927 = vld [vmem:[%s295 + $0x188] sm:$0xf]
      %v928 = vld [vmem:[%s295 + $0x18c] sm:$0xf]
      %v929 = vld [vmem:[%s295 + $0x190] sm:$0xf]
      %v930 = vld [vmem:[%s295 + $0x194] sm:$0xf]
      %v931 = vld [vmem:[%s295 + $0x198] sm:$0xf]
      %v932 = vld [vmem:[%s295 + $0x19c] sm:$0xf]
      %v933 = vld [vmem:[%s295 + $0x1a0] sm:$0xf]
      %v934 = vld [vmem:[%s295 + $0x1a4] sm:$0xf]
      %v935 = vld [vmem:[%s295 + $0x1a8] sm:$0xf]
      %v936 = vld [vmem:[%s295 + $0x1ac] sm:$0xf]
      %v937 = vld [vmem:[%s295 + $0x1b0] sm:$0xf]
      %v938 = vld [vmem:[%s295 + $0x1b4] sm:$0xf]
      %v939 = vld [vmem:[%s295 + $0x1b8] sm:$0xf]
      %v940 = vld [vmem:[%s295 + $0x1bc] sm:$0xf]
      %v941 = vld [vmem:[%s295 + $0x1c0] sm:$0xf]
      %v942 = vld [vmem:[%s295 + $0x1c4] sm:$0xf]
      %v943 = vld [vmem:[%s295 + $0x1c8] sm:$0xf]
      %v944 = vld [vmem:[%s295 + $0x1cc] sm:$0xf]
      %v945 = vld [vmem:[%s295 + $0x1d0] sm:$0xf]
      %v946 = vld [vmem:[%s295 + $0x1d4] sm:$0xf]
      %v947 = vld [vmem:[%s295 + $0x1d8] sm:$0xf]
      %v948 = vld [vmem:[%s295 + $0x1dc] sm:$0xf]
      %v949 = vld [vmem:[%s295 + $0x1e0] sm:$0xf]
      %v950 = vld [vmem:[%s295 + $0x1e4] sm:$0xf]
      %v951 = vld [vmem:[%s295 + $0x1e8] sm:$0xf]
      %v952 = vld [vmem:[%s295 + $0x1ec] sm:$0xf]
      %v953 = vld [vmem:[%s295 + $0x1f0] sm:$0xf]
      %v954 = vld [vmem:[%s295 + $0x1f4] sm:$0xf]
      %v955 = vld [vmem:[%s295 + $0x1f8] sm:$0xf]
      %v956 = vld [vmem:[%s295 + $0x1fc] sm:$0xf]
      %v1085 = vunpack.c.l.b16 %v829
      %v1086 = vunpack.c.l.b16 %v830
      %v1087 = vunpack.c.l.b16 %v831
      %v1088 = vunpack.c.l.b16 %v832
      %v1089 = vunpack.c.l.b16 %v833
      %v1090 = vunpack.c.l.b16 %v834
      %v1091 = vunpack.c.l.b16 %v835
      %v1092 = vunpack.c.l.b16 %v836
      %v1093 = vunpack.c.l.b16 %v837
      %v1094 = vunpack.c.l.b16 %v838
      %v1095 = vunpack.c.l.b16 %v839
      %v1096 = vunpack.c.l.b16 %v840
      %v1097 = vunpack.c.l.b16 %v841
      %v1098 = vunpack.c.l.b16 %v842
      %v1099 = vunpack.c.l.b16 %v843
      %v1100 = vunpack.c.l.b16 %v844
      %v1101 = vunpack.c.l.b16 %v845
      %v1102 = vunpack.c.l.b16 %v846
      %v1103 = vunpack.c.l.b16 %v847
      %v1104 = vunpack.c.l.b16 %v848
      %v1105 = vunpack.c.l.b16 %v849
      %v1106 = vunpack.c.l.b16 %v850
      %v1107 = vunpack.c.l.b16 %v851
      %v1108 = vunpack.c.l.b16 %v852
      %v1109 = vunpack.c.l.b16 %v853
      %v1110 = vunpack.c.l.b16 %v854
      %v1111 = vunpack.c.l.b16 %v855
      %v1112 = vunpack.c.l.b16 %v856
      %v1113 = vunpack.c.l.b16 %v857
      %v1114 = vunpack.c.l.b16 %v858
      %v1115 = vunpack.c.l.b16 %v859
      %v1116 = vunpack.c.l.b16 %v860
      %v1117 = vunpack.c.l.b16 %v861
      %v1118 = vunpack.c.l.b16 %v862
      %v1119 = vunpack.c.l.b16 %v863
      %v1120 = vunpack.c.l.b16 %v864
      %v1121 = vunpack.c.l.b16 %v865
      %v1122 = vunpack.c.l.b16 %v866
      %v1123 = vunpack.c.l.b16 %v867
      %v1124 = vunpack.c.l.b16 %v868
      %v1125 = vunpack.c.l.b16 %v869
      %v1126 = vunpack.c.l.b16 %v870
      %v1127 = vunpack.c.l.b16 %v871
      %v1128 = vunpack.c.l.b16 %v872
      %v1129 = vunpack.c.l.b16 %v873
      %v1130 = vunpack.c.l.b16 %v874
      %v1131 = vunpack.c.l.b16 %v875
      %v1132 = vunpack.c.l.b16 %v876
      %v1133 = vunpack.c.l.b16 %v877
      %v1134 = vunpack.c.l.b16 %v878
      %v1135 = vunpack.c.l.b16 %v879
      %v1136 = vunpack.c.l.b16 %v880
      %v1137 = vunpack.c.l.b16 %v881
      %v1138 = vunpack.c.l.b16 %v882
      %v1139 = vunpack.c.l.b16 %v883
      %v1140 = vunpack.c.l.b16 %v884
      %v1141 = vunpack.c.l.b16 %v885
      %v1142 = vunpack.c.l.b16 %v886
      %v1143 = vunpack.c.l.b16 %v887
      %v1144 = vunpack.c.l.b16 %v888
      %v1145 = vunpack.c.l.b16 %v889
      %v1146 = vunpack.c.l.b16 %v890
      %v1147 = vunpack.c.l.b16 %v891
      %v1148 = vunpack.c.l.b16 %v892
      %v1149 = vunpack.c.l.b16 %v893
      %v1150 = vunpack.c.l.b16 %v894
      %v1151 = vunpack.c.l.b16 %v895
      %v1152 = vunpack.c.l.b16 %v896
      %v1153 = vunpack.c.l.b16 %v897
      %v1154 = vunpack.c.l.b16 %v898
      %v1155 = vunpack.c.l.b16 %v899
      %v1156 = vunpack.c.l.b16 %v900
      %v1157 = vunpack.c.l.b16 %v901
      %v1158 = vunpack.c.l.b16 %v902
      %v1159 = vunpack.c.l.b16 %v903
      %v1160 = vunpack.c.l.b16 %v904
      %v1161 = vunpack.c.l.b16 %v905
      %v1162 = vunpack.c.l.b16 %v906
      %v1163 = vunpack.c.l.b16 %v907
      %v1164 = vunpack.c.l.b16 %v908
      %v1165 = vunpack.c.l.b16 %v909
      %v1166 = vunpack.c.l.b16 %v910
      %v1167 = vunpack.c.l.b16 %v911
      %v1168 = vunpack.c.l.b16 %v912
      %v1169 = vunpack.c.l.b16 %v913
      %v1170 = vunpack.c.l.b16 %v914
      %v1171 = vunpack.c.l.b16 %v915
      %v1172 = vunpack.c.l.b16 %v916
      %v1173 = vunpack.c.l.b16 %v917
      %v1174 = vunpack.c.l.b16 %v918
      %v1175 = vunpack.c.l.b16 %v919
      %v1176 = vunpack.c.l.b16 %v920
      %v1177 = vunpack.c.l.b16 %v921
      %v1178 = vunpack.c.l.b16 %v922
      %v1179 = vunpack.c.l.b16 %v923
      %v1180 = vunpack.c.l.b16 %v924
      %v1181 = vunpack.c.l.b16 %v925
      %v1182 = vunpack.c.l.b16 %v926
      %v1183 = vunpack.c.l.b16 %v927
      %v1184 = vunpack.c.l.b16 %v928
      %v1185 = vunpack.c.l.b16 %v929
      %v1186 = vunpack.c.l.b16 %v930
      %v1187 = vunpack.c.l.b16 %v931
      %v1188 = vunpack.c.l.b16 %v932
      %v1189 = vunpack.c.l.b16 %v933
      %v1190 = vunpack.c.l.b16 %v934
      %v1191 = vunpack.c.l.b16 %v935
      %v1192 = vunpack.c.l.b16 %v936
      %v1193 = vunpack.c.l.b16 %v937
      %v1194 = vunpack.c.l.b16 %v938
      %v1195 = vunpack.c.l.b16 %v939
      %v1196 = vunpack.c.l.b16 %v940
      %v1197 = vunpack.c.l.b16 %v941
      %v1198 = vunpack.c.l.b16 %v942
      %v1199 = vunpack.c.l.b16 %v943
      %v1200 = vunpack.c.l.b16 %v944
      %v1201 = vunpack.c.l.b16 %v945
      %v1202 = vunpack.c.l.b16 %v946
      %v1203 = vunpack.c.l.b16 %v947
      %v1204 = vunpack.c.l.b16 %v948
      %v1205 = vunpack.c.l.b16 %v949
      %v1206 = vunpack.c.l.b16 %v950
      %v1207 = vunpack.c.l.b16 %v951
      %v1208 = vunpack.c.l.b16 %v952
      %v1209 = vunpack.c.l.b16 %v953
      %v1210 = vunpack.c.l.b16 %v954
      %v1211 = vunpack.c.l.b16 %v955
      %v1212 = vunpack.c.l.b16 %v956
      %v1213 = vpack.c.b16 %v1086, %v1085
      %v1214 = vpack.c.b16 %v1088, %v1087
      %v1215 = vpack.c.b16 %v1090, %v1089
      %v1216 = vpack.c.b16 %v1092, %v1091
      %v1217 = vpack.c.b16 %v1094, %v1093
      %v1218 = vpack.c.b16 %v1096, %v1095
      %v1219 = vpack.c.b16 %v1098, %v1097
      %v1220 = vpack.c.b16 %v1100, %v1099
      %v1221 = vpack.c.b16 %v1102, %v1101
      %v1222 = vpack.c.b16 %v1104, %v1103
      %v1223 = vpack.c.b16 %v1106, %v1105
      %v1224 = vpack.c.b16 %v1108, %v1107
      %v1225 = vpack.c.b16 %v1110, %v1109
      %v1226 = vpack.c.b16 %v1112, %v1111
      %v1227 = vpack.c.b16 %v1114, %v1113
      %v1228 = vpack.c.b16 %v1116, %v1115
      %v1229 = vpack.c.b16 %v1118, %v1117
      %v1230 = vpack.c.b16 %v1120, %v1119
      %v1231 = vpack.c.b16 %v1122, %v1121
      %v1232 = vpack.c.b16 %v1124, %v1123
      %v1233 = vpack.c.b16 %v1126, %v1125
      %v1234 = vpack.c.b16 %v1128, %v1127
      %v1235 = vpack.c.b16 %v1130, %v1129
      %v1236 = vpack.c.b16 %v1132, %v1131
      %v1237 = vpack.c.b16 %v1134, %v1133
      %v1238 = vpack.c.b16 %v1136, %v1135
      %v1239 = vpack.c.b16 %v1138, %v1137
      %v1240 = vpack.c.b16 %v1140, %v1139
      %v1241 = vpack.c.b16 %v1142, %v1141
      %v1242 = vpack.c.b16 %v1144, %v1143
      %v1243 = vpack.c.b16 %v1146, %v1145
      %v1244 = vpack.c.b16 %v1148, %v1147
      %v1245 = vpack.c.b16 %v1150, %v1149
      %v1246 = vpack.c.b16 %v1152, %v1151
      %v1247 = vpack.c.b16 %v1154, %v1153
      %v1248 = vpack.c.b16 %v1156, %v1155
      %v1249 = vpack.c.b16 %v1158, %v1157
      %v1250 = vpack.c.b16 %v1160, %v1159
      %v1251 = vpack.c.b16 %v1162, %v1161
      %v1252 = vpack.c.b16 %v1164, %v1163
      %v1253 = vpack.c.b16 %v1166, %v1165
      %v1254 = vpack.c.b16 %v1168, %v1167
      %v1255 = vpack.c.b16 %v1170, %v1169
      %v1256 = vpack.c.b16 %v1172, %v1171
      %v1257 = vpack.c.b16 %v1174, %v1173
      %v1258 = vpack.c.b16 %v1176, %v1175
      %v1259 = vpack.c.b16 %v1178, %v1177
      %v1260 = vpack.c.b16 %v1180, %v1179
      %v1261 = vpack.c.b16 %v1182, %v1181
      %v1262 = vpack.c.b16 %v1184, %v1183
      %v1263 = vpack.c.b16 %v1186, %v1185
      %v1264 = vpack.c.b16 %v1188, %v1187
      %v1265 = vpack.c.b16 %v1190, %v1189
      %v1266 = vpack.c.b16 %v1192, %v1191
      %v1267 = vpack.c.b16 %v1194, %v1193
      %v1268 = vpack.c.b16 %v1196, %v1195
      %v1269 = vpack.c.b16 %v1198, %v1197
      %v1270 = vpack.c.b16 %v1200, %v1199
      %v1271 = vpack.c.b16 %v1202, %v1201
      %v1272 = vpack.c.b16 %v1204, %v1203
      %v1273 = vpack.c.b16 %v1206, %v1205
      %v1274 = vpack.c.b16 %v1208, %v1207
      %v1275 = vpack.c.b16 %v1210, %v1209
      %v1276 = vpack.c.b16 %v1212, %v1211
      %1341 = vmatprep.subr.bf16.mxu0 0
      %1342 = vmatpush1.bf16.msra.mxu0 %v1220
      %1343 = vmatprep.subr.bf16.mxu0 0
      %1344 = vmatpush1.bf16.msra.mxu0 %v1219
      %1345 = vmatprep.subr.bf16.mxu0 0
      %1346 = vmatpush1.bf16.msra.mxu0 %v1218
      %1347 = vmatprep.subr.bf16.mxu0 0
      %1348 = vmatpush1.bf16.msra.mxu0 %v1217
      %1349 = vmatprep.subr.bf16.mxu0 0
      %1350 = vmatpush1.bf16.msra.mxu0 %v1216
      %1351 = vmatprep.subr.bf16.mxu0 0
      %1352 = vmatpush1.bf16.msra.mxu0 %v1215
      %1353 = vmatprep.subr.bf16.mxu0 0
      %1354 = vmatpush1.bf16.msra.mxu0 %v1214
      %1355 = vmatprep.subr.bf16.mxu0 0
      %1356 = vmatpush1.bf16.msra.mxu0 %v1213
      %1357 = vmatprep.subr.bf16.mxu0 0
      %1358 = vmatpush2.bf16.msra.mxu0 %v1228
      %1359 = vmatprep.subr.bf16.mxu0 0
      %1360 = vmatpush2.bf16.msra.mxu0 %v1227
      %1361 = vmatprep.subr.bf16.mxu0 0
      %1362 = vmatpush2.bf16.msra.mxu0 %v1226
      %1363 = vmatprep.subr.bf16.mxu0 0
      %1364 = vmatpush2.bf16.msra.mxu0 %v1225
      %1365 = vmatprep.subr.bf16.mxu0 0
      %1366 = vmatpush2.bf16.msra.mxu0 %v1224
      %1367 = vmatprep.subr.bf16.mxu0 0
      %1368 = vmatpush2.bf16.msra.mxu0 %v1223
      %1369 = vmatprep.subr.bf16.mxu0 0
      %1370 = vmatpush2.bf16.msra.mxu0 %v1222
      %1371 = vmatprep.subr.bf16.mxu0 0
      %1372 = vmatpush2.bf16.msra.mxu0 %v1221
      %1373 = vmatprep.mubr.bf16.mxu0 %v510
      %1374 = vmatmul.mubr.bf16.gmra.mxu0 %v509
      %v1375 = vpop.f32.mrf.mxu0
      %v1376 = vadd.f32 0.0, %v1375
      %v1377 = vpop.f32.mrf.mxu0
      %v1378 = vpop.f32.mrf.mxu0
      %v1379 = vadd.f32 0.0, %v1378
      %v1380 = vpop.f32.mrf.mxu0
      %1381 = vmatprep.mubr.bf16.mxu0 %v518
      %1382 = vmatmul.mubr.bf16.gmra.mxu0 %v517
      %v1383 = vpop.f32.mrf.mxu0
      %v1384 = vadd.f32 0.0, %v1383
      %v1385 = vpop.f32.mrf.mxu0
      %v1386 = vpop.f32.mrf.mxu0
      %v1387 = vadd.f32 0.0, %v1386
      %v1388 = vpop.f32.mrf.mxu0
      %1389 = vmatprep.mubr.bf16.mxu0 %v526
      %1390 = vmatmul.mubr.bf16.gmra.mxu0 %v525
      %v1391 = vpop.f32.mrf.mxu0
      %v1392 = vadd.f32 0.0, %v1391
      %v1393 = vpop.f32.mrf.mxu0
      %v1394 = vpop.f32.mrf.mxu0
      %v1395 = vadd.f32 0.0, %v1394
      %v1396 = vpop.f32.mrf.mxu0
      %1397 = vmatprep.mubr.bf16.mxu0 %v534
      %1398 = vmatmul.mubr.bf16.gmra.mxu0 %v533
      %v1399 = vpop.f32.mrf.mxu0
      %v1400 = vadd.f32 0.0, %v1399
      %v1401 = vpop.f32.mrf.mxu0
      %v1402 = vpop.f32.mrf.mxu0
      %v1403 = vadd.f32 0.0, %v1402
      %v1404 = vpop.f32.mrf.mxu0
      %1405 = vmatprep.mubr.bf16.mxu0 %v542
      %1406 = vmatmul.mubr.bf16.gmra.mxu0 %v541
      %v1407 = vpop.f32.mrf.mxu0
      %v1408 = vadd.f32 0.0, %v1407
      %v1409 = vpop.f32.mrf.mxu0
      %v1410 = vpop.f32.mrf.mxu0
      %v1411 = vadd.f32 0.0, %v1410
      %v1412 = vpop.f32.mrf.mxu0
      %1413 = vmatprep.mubr.bf16.mxu0 %v550
      %1414 = vmatmul.mubr.bf16.gmra.mxu0 %v549
      %v1415 = vpop.f32.mrf.mxu0
      %v1416 = vadd.f32 0.0, %v1415
      %v1417 = vpop.f32.mrf.mxu0
      %v1418 = vpop.f32.mrf.mxu0
      %v1419 = vadd.f32 0.0, %v1418
      %v1420 = vpop.f32.mrf.mxu0
      %1421 = vmatprep.mubr.bf16.mxu0 %v558
      %1422 = vmatmul.mubr.bf16.gmra.mxu0 %v557
      %v1423 = vpop.f32.mrf.mxu0
      %v1424 = vadd.f32 0.0, %v1423
      %v1425 = vpop.f32.mrf.mxu0
      %v1426 = vpop.f32.mrf.mxu0
      %v1427 = vadd.f32 0.0, %v1426
      %v1428 = vpop.f32.mrf.mxu0
      %1429 = vmatprep.mubr.bf16.mxu0 %v566
      %1430 = vmatmul.mubr.bf16.gmra.mxu0 %v565
      %v1431 = vpop.f32.mrf.mxu0
      %v1432 = vadd.f32 0.0, %v1431
      %v1433 = vpop.f32.mrf.mxu0
      %v1434 = vpop.f32.mrf.mxu0
      %v1435 = vadd.f32 0.0, %v1434
      %v1436 = vpop.f32.mrf.mxu0
      %1437 = vmatprep.mubr.bf16.mxu0 %v574
      %1438 = vmatmul.mubr.bf16.gmra.mxu0 %v573
      %v1439 = vpop.f32.mrf.mxu0
      %v1440 = vadd.f32 0.0, %v1439
      %v1441 = vpop.f32.mrf.mxu0
      %v1442 = vpop.f32.mrf.mxu0
      %v1443 = vadd.f32 0.0, %v1442
      %v1444 = vpop.f32.mrf.mxu0
      %1445 = vmatprep.mubr.bf16.mxu0 %v582
      %1446 = vmatmul.mubr.bf16.gmra.mxu0 %v581
      %v1447 = vpop.f32.mrf.mxu0
      %v1448 = vadd.f32 0.0, %v1447
      %v1449 = vpop.f32.mrf.mxu0
      %v1450 = vpop.f32.mrf.mxu0
      %v1451 = vadd.f32 0.0, %v1450
      %v1452 = vpop.f32.mrf.mxu0
      %1453 = vmatprep.mubr.bf16.mxu0 %v590
      %1454 = vmatmul.mubr.bf16.gmra.mxu0 %v589
      %v1455 = vpop.f32.mrf.mxu0
      %v1456 = vadd.f32 0.0, %v1455
      %v1457 = vpop.f32.mrf.mxu0
      %v1458 = vpop.f32.mrf.mxu0
      %v1459 = vadd.f32 0.0, %v1458
      %v1460 = vpop.f32.mrf.mxu0
      %1461 = vmatprep.mubr.bf16.mxu0 %v598
      %1462 = vmatmul.mubr.bf16.gmra.mxu0 %v597
      %v1463 = vpop.f32.mrf.mxu0
      %v1464 = vadd.f32 0.0, %v1463
      %v1465 = vpop.f32.mrf.mxu0
      %v1466 = vpop.f32.mrf.mxu0
      %v1467 = vadd.f32 0.0, %v1466
      %v1468 = vpop.f32.mrf.mxu0
      %1469 = vmatprep.mubr.bf16.mxu0 %v606
      %1470 = vmatmul.mubr.bf16.gmra.mxu0 %v605
      %v1471 = vpop.f32.mrf.mxu0
      %v1472 = vadd.f32 0.0, %v1471
      %v1473 = vpop.f32.mrf.mxu0
      %v1474 = vpop.f32.mrf.mxu0
      %v1475 = vadd.f32 0.0, %v1474
      %v1476 = vpop.f32.mrf.mxu0
      %1477 = vmatprep.mubr.bf16.mxu0 %v614
      %1478 = vmatmul.mubr.bf16.gmra.mxu0 %v613
      %v1479 = vpop.f32.mrf.mxu0
      %v1480 = vadd.f32 0.0, %v1479
      %v1481 = vpop.f32.mrf.mxu0
      %v1482 = vpop.f32.mrf.mxu0
      %v1483 = vadd.f32 0.0, %v1482
      %v1484 = vpop.f32.mrf.mxu0
      %1485 = vmatprep.mubr.bf16.mxu0 %v622
      %1486 = vmatmul.mubr.bf16.gmra.mxu0 %v621
      %v1487 = vpop.f32.mrf.mxu0
      %v1488 = vadd.f32 0.0, %v1487
      %v1489 = vpop.f32.mrf.mxu0
      %v1490 = vpop.f32.mrf.mxu0
      %v1491 = vadd.f32 0.0, %v1490
      %v1492 = vpop.f32.mrf.mxu0
      %1493 = vmatprep.mubr.bf16.mxu0 %v630
      %1494 = vmatmul.mubr.bf16.gmra.mxu0 %v629
      %v1495 = vpop.f32.mrf.mxu0
      %v1496 = vadd.f32 0.0, %v1495
      %v1497 = vpop.f32.mrf.mxu0
      %v1498 = vpop.f32.mrf.mxu0
      %v1499 = vadd.f32 0.0, %v1498
      %v1500 = vpop.f32.mrf.mxu0
      %1501 = vmatprep.mubr.bf16.mxu0 %v638
      %1502 = vmatmul.mubr.bf16.gmra.mxu0 %v637
      %v1503 = vpop.f32.mrf.mxu0
      %v1504 = vadd.f32 0.0, %v1503
      %v1505 = vpop.f32.mrf.mxu0
      %v1506 = vpop.f32.mrf.mxu0
      %v1507 = vadd.f32 0.0, %v1506
      %v1508 = vpop.f32.mrf.mxu0
      %1509 = vmatprep.mubr.bf16.mxu0 %v646
      %1510 = vmatmul.mubr.bf16.gmra.mxu0 %v645
      %v1511 = vpop.f32.mrf.mxu0
      %v1512 = vadd.f32 0.0, %v1511
      %v1513 = vpop.f32.mrf.mxu0
      %v1514 = vpop.f32.mrf.mxu0
      %v1515 = vadd.f32 0.0, %v1514
      %v1516 = vpop.f32.mrf.mxu0
      %1517 = vmatprep.mubr.bf16.mxu0 %v654
      %1518 = vmatmul.mubr.bf16.gmra.mxu0 %v653
      %v1519 = vpop.f32.mrf.mxu0
      %v1520 = vadd.f32 0.0, %v1519
      %v1521 = vpop.f32.mrf.mxu0
      %v1522 = vpop.f32.mrf.mxu0
      %v1523 = vadd.f32 0.0, %v1522
      %v1524 = vpop.f32.mrf.mxu0
      %1525 = vmatprep.mubr.bf16.mxu0 %v662
      %1526 = vmatmul.mubr.bf16.gmra.mxu0 %v661
      %v1527 = vpop.f32.mrf.mxu0
      %v1528 = vadd.f32 0.0, %v1527
      %v1529 = vpop.f32.mrf.mxu0
      %v1530 = vpop.f32.mrf.mxu0
      %v1531 = vadd.f32 0.0, %v1530
      %v1532 = vpop.f32.mrf.mxu0
      %1533 = vmatprep.mubr.bf16.mxu0 %v670
      %1534 = vmatmul.mubr.bf16.gmra.mxu0 %v669
      %v1535 = vpop.f32.mrf.mxu0
      %v1536 = vadd.f32 0.0, %v1535
      %v1537 = vpop.f32.mrf.mxu0
      %v1538 = vpop.f32.mrf.mxu0
      %v1539 = vadd.f32 0.0, %v1538
      %v1540 = vpop.f32.mrf.mxu0
      %1541 = vmatprep.mubr.bf16.mxu0 %v678
      %1542 = vmatmul.mubr.bf16.gmra.mxu0 %v677
      %v1543 = vpop.f32.mrf.mxu0
      %v1544 = vadd.f32 0.0, %v1543
      %v1545 = vpop.f32.mrf.mxu0
      %v1546 = vpop.f32.mrf.mxu0
      %v1547 = vadd.f32 0.0, %v1546
      %v1548 = vpop.f32.mrf.mxu0
      %1549 = vmatprep.mubr.bf16.mxu0 %v686
      %1550 = vmatmul.mubr.bf16.gmra.mxu0 %v685
      %v1551 = vpop.f32.mrf.mxu0
      %v1552 = vadd.f32 0.0, %v1551
      %v1553 = vpop.f32.mrf.mxu0
      %v1554 = vpop.f32.mrf.mxu0
      %v1555 = vadd.f32 0.0, %v1554
      %v1556 = vpop.f32.mrf.mxu0
      %1557 = vmatprep.mubr.bf16.mxu0 %v694
      %1558 = vmatmul.mubr.bf16.gmra.mxu0 %v693
      %v1559 = vpop.f32.mrf.mxu0
      %v1560 = vadd.f32 0.0, %v1559
      %v1561 = vpop.f32.mrf.mxu0
      %v1562 = vpop.f32.mrf.mxu0
      %v1563 = vadd.f32 0.0, %v1562
      %v1564 = vpop.f32.mrf.mxu0
      %1565 = vmatprep.mubr.bf16.mxu0 %v702
      %1566 = vmatmul.mubr.bf16.gmra.mxu0 %v701
      %v1567 = vpop.f32.mrf.mxu0
      %v1568 = vadd.f32 0.0, %v1567
      %v1569 = vpop.f32.mrf.mxu0
      %v1570 = vpop.f32.mrf.mxu0
      %v1571 = vadd.f32 0.0, %v1570
      %v1572 = vpop.f32.mrf.mxu0
      %1573 = vmatprep.mubr.bf16.mxu0 %v710
      %1574 = vmatmul.mubr.bf16.gmra.mxu0 %v709
      %v1575 = vpop.f32.mrf.mxu0
      %v1576 = vadd.f32 0.0, %v1575
      %v1577 = vpop.f32.mrf.mxu0
      %v1578 = vpop.f32.mrf.mxu0
      %v1579 = vadd.f32 0.0, %v1578
      %v1580 = vpop.f32.mrf.mxu0
      %1581 = vmatprep.mubr.bf16.mxu0 %v718
      %1582 = vmatmul.mubr.bf16.gmra.mxu0 %v717
      %v1583 = vpop.f32.mrf.mxu0
      %v1584 = vadd.f32 0.0, %v1583
      %v1585 = vpop.f32.mrf.mxu0
      %v1586 = vpop.f32.mrf.mxu0
      %v1587 = vadd.f32 0.0, %v1586
      %v1588 = vpop.f32.mrf.mxu0
      %1589 = vmatprep.mubr.bf16.mxu0 %v726
      %1590 = vmatmul.mubr.bf16.gmra.mxu0 %v725
      %v1591 = vpop.f32.mrf.mxu0
      %v1592 = vadd.f32 0.0, %v1591
      %v1593 = vpop.f32.mrf.mxu0
      %v1594 = vpop.f32.mrf.mxu0
      %v1595 = vadd.f32 0.0, %v1594
      %v1596 = vpop.f32.mrf.mxu0
      %1597 = vmatprep.mubr.bf16.mxu0 %v734
      %1598 = vmatmul.mubr.bf16.gmra.mxu0 %v733
      %v1599 = vpop.f32.mrf.mxu0
      %v1600 = vadd.f32 0.0, %v1599
      %v1601 = vpop.f32.mrf.mxu0
      %v1602 = vpop.f32.mrf.mxu0
      %v1603 = vadd.f32 0.0, %v1602
      %v1604 = vpop.f32.mrf.mxu0
      %1605 = vmatprep.mubr.bf16.mxu0 %v742
      %1606 = vmatmul.mubr.bf16.gmra.mxu0 %v741
      %v1607 = vpop.f32.mrf.mxu0
      %v1608 = vadd.f32 0.0, %v1607
      %v1609 = vpop.f32.mrf.mxu0
      %v1610 = vpop.f32.mrf.mxu0
      %v1611 = vadd.f32 0.0, %v1610
      %v1612 = vpop.f32.mrf.mxu0
      %1613 = vmatprep.mubr.bf16.mxu0 %v750
      %1614 = vmatmul.mubr.bf16.gmra.mxu0 %v749
      %v1615 = vpop.f32.mrf.mxu0
      %v1616 = vadd.f32 0.0, %v1615
      %v1617 = vpop.f32.mrf.mxu0
      %v1618 = vpop.f32.mrf.mxu0
      %v1619 = vadd.f32 0.0, %v1618
      %v1620 = vpop.f32.mrf.mxu0
      %1621 = vmatprep.mubr.bf16.mxu0 %v758
      %1622 = vmatmul.mubr.bf16.gmra.mxu0 %v757
      %v1623 = vpop.f32.mrf.mxu0
      %v1624 = vadd.f32 0.0, %v1623
      %v1625 = vpop.f32.mrf.mxu0
      %v1626 = vpop.f32.mrf.mxu0
      %v1627 = vadd.f32 0.0, %v1626
      %v1628 = vpop.f32.mrf.mxu0
      %1629 = vdwg.mxu0
      %1630 = vmatprep.subr.bf16.mxu0 0
      %1631 = vmatpush1.bf16.msra.mxu0 %v1236
      %1632 = vmatprep.subr.bf16.mxu0 0
      %1633 = vmatpush1.bf16.msra.mxu0 %v1235
      %1634 = vmatprep.subr.bf16.mxu0 0
      %1635 = vmatpush1.bf16.msra.mxu0 %v1234
      %1636 = vmatprep.subr.bf16.mxu0 0
      %1637 = vmatpush1.bf16.msra.mxu0 %v1233
      %1638 = vmatprep.subr.bf16.mxu0 0
      %1639 = vmatpush1.bf16.msra.mxu0 %v1232
      %1640 = vmatprep.subr.bf16.mxu0 0
      %1641 = vmatpush1.bf16.msra.mxu0 %v1231
      %1642 = vmatprep.subr.bf16.mxu0 0
      %1643 = vmatpush1.bf16.msra.mxu0 %v1230
      %1644 = vmatprep.subr.bf16.mxu0 0
      %1645 = vmatpush1.bf16.msra.mxu0 %v1229
      %1646 = vmatprep.subr.bf16.mxu0 0
      %1647 = vmatpush2.bf16.msra.mxu0 %v1244
      %1648 = vmatprep.subr.bf16.mxu0 0
      %1649 = vmatpush2.bf16.msra.mxu0 %v1243
      %1650 = vmatprep.subr.bf16.mxu0 0
      %1651 = vmatpush2.bf16.msra.mxu0 %v1242
      %1652 = vmatprep.subr.bf16.mxu0 0
      %1653 = vmatpush2.bf16.msra.mxu0 %v1241
      %1654 = vmatprep.subr.bf16.mxu0 0
      %1655 = vmatpush2.bf16.msra.mxu0 %v1240
      %1656 = vmatprep.subr.bf16.mxu0 0
      %1657 = vmatpush2.bf16.msra.mxu0 %v1239
      %1658 = vmatprep.subr.bf16.mxu0 0
      %1659 = vmatpush2.bf16.msra.mxu0 %v1238
      %1660 = vmatprep.subr.bf16.mxu0 0
      %1661 = vmatpush2.bf16.msra.mxu0 %v1237
      %1662 = vmatprep.mubr.bf16.mxu0 %v512
      %1663 = vmatmul.mubr.bf16.gmra.mxu0 %v511
      %v1664 = vpop.f32.mrf.mxu0
      %v1665 = vadd.f32 %v1376, %v1664
      %v1666 = vpop.f32.mrf.mxu0
      %v1667 = vpop.f32.mrf.mxu0
      %v1668 = vadd.f32 %v1379, %v1667
      %v1669 = vpop.f32.mrf.mxu0
      %1670 = vmatprep.mubr.bf16.mxu0 %v520
      %1671 = vmatmul.mubr.bf16.gmra.mxu0 %v519
      %v1672 = vpop.f32.mrf.mxu0
      %v1673 = vadd.f32 %v1384, %v1672
      %v1674 = vpop.f32.mrf.mxu0
      %v1675 = vpop.f32.mrf.mxu0
      %v1676 = vadd.f32 %v1387, %v1675
      %v1677 = vpop.f32.mrf.mxu0
      %1678 = vmatprep.mubr.bf16.mxu0 %v528
      %1679 = vmatmul.mubr.bf16.gmra.mxu0 %v527
      %v1680 = vpop.f32.mrf.mxu0
      %v1681 = vadd.f32 %v1392, %v1680
      %v1682 = vpop.f32.mrf.mxu0
      %v1683 = vpop.f32.mrf.mxu0
      %v1684 = vadd.f32 %v1395, %v1683
      %v1685 = vpop.f32.mrf.mxu0
      %1686 = vmatprep.mubr.bf16.mxu0 %v536
      %1687 = vmatmul.mubr.bf16.gmra.mxu0 %v535
      %v1688 = vpop.f32.mrf.mxu0
      %v1689 = vadd.f32 %v1400, %v1688
      %v1690 = vpop.f32.mrf.mxu0
      %v1691 = vpop.f32.mrf.mxu0
      %v1692 = vadd.f32 %v1403, %v1691
      %v1693 = vpop.f32.mrf.mxu0
      %1694 = vmatprep.mubr.bf16.mxu0 %v544
      %1695 = vmatmul.mubr.bf16.gmra.mxu0 %v543
      %v1696 = vpop.f32.mrf.mxu0
      %v1697 = vadd.f32 %v1408, %v1696
      %v1698 = vpop.f32.mrf.mxu0
      %v1699 = vpop.f32.mrf.mxu0
      %v1700 = vadd.f32 %v1411, %v1699
      %v1701 = vpop.f32.mrf.mxu0
      %1702 = vmatprep.mubr.bf16.mxu0 %v552
      %1703 = vmatmul.mubr.bf16.gmra.mxu0 %v551
      %v1704 = vpop.f32.mrf.mxu0
      %v1705 = vadd.f32 %v1416, %v1704
      %v1706 = vpop.f32.mrf.mxu0
      %v1707 = vpop.f32.mrf.mxu0
      %v1708 = vadd.f32 %v1419, %v1707
      %v1709 = vpop.f32.mrf.mxu0
      %1710 = vmatprep.mubr.bf16.mxu0 %v560
      %1711 = vmatmul.mubr.bf16.gmra.mxu0 %v559
      %v1712 = vpop.f32.mrf.mxu0
      %v1713 = vadd.f32 %v1424, %v1712
      %v1714 = vpop.f32.mrf.mxu0
      %v1715 = vpop.f32.mrf.mxu0
      %v1716 = vadd.f32 %v1427, %v1715
      %v1717 = vpop.f32.mrf.mxu0
      %1718 = vmatprep.mubr.bf16.mxu0 %v568
      %1719 = vmatmul.mubr.bf16.gmra.mxu0 %v567
      %v1720 = vpop.f32.mrf.mxu0
      %v1721 = vadd.f32 %v1432, %v1720
      %v1722 = vpop.f32.mrf.mxu0
      %v1723 = vpop.f32.mrf.mxu0
      %v1724 = vadd.f32 %v1435, %v1723
      %v1725 = vpop.f32.mrf.mxu0
      %1726 = vmatprep.mubr.bf16.mxu0 %v576
      %1727 = vmatmul.mubr.bf16.gmra.mxu0 %v575
      %v1728 = vpop.f32.mrf.mxu0
      %v1729 = vadd.f32 %v1440, %v1728
      %v1730 = vpop.f32.mrf.mxu0
      %v1731 = vpop.f32.mrf.mxu0
      %v1732 = vadd.f32 %v1443, %v1731
      %v1733 = vpop.f32.mrf.mxu0
      %1734 = vmatprep.mubr.bf16.mxu0 %v584
      %1735 = vmatmul.mubr.bf16.gmra.mxu0 %v583
      %v1736 = vpop.f32.mrf.mxu0
      %v1737 = vadd.f32 %v1448, %v1736
      %v1738 = vpop.f32.mrf.mxu0
      %v1739 = vpop.f32.mrf.mxu0
      %v1740 = vadd.f32 %v1451, %v1739
      %v1741 = vpop.f32.mrf.mxu0
      %1742 = vmatprep.mubr.bf16.mxu0 %v592
      %1743 = vmatmul.mubr.bf16.gmra.mxu0 %v591
      %v1744 = vpop.f32.mrf.mxu0
      %v1745 = vadd.f32 %v1456, %v1744
      %v1746 = vpop.f32.mrf.mxu0
      %v1747 = vpop.f32.mrf.mxu0
      %v1748 = vadd.f32 %v1459, %v1747
      %v1749 = vpop.f32.mrf.mxu0
      %1750 = vmatprep.mubr.bf16.mxu0 %v600
      %1751 = vmatmul.mubr.bf16.gmra.mxu0 %v599
      %v1752 = vpop.f32.mrf.mxu0
      %v1753 = vadd.f32 %v1464, %v1752
      %v1754 = vpop.f32.mrf.mxu0
      %v1755 = vpop.f32.mrf.mxu0
      %v1756 = vadd.f32 %v1467, %v1755
      %v1757 = vpop.f32.mrf.mxu0
      %1758 = vmatprep.mubr.bf16.mxu0 %v608
      %1759 = vmatmul.mubr.bf16.gmra.mxu0 %v607
      %v1760 = vpop.f32.mrf.mxu0
      %v1761 = vadd.f32 %v1472, %v1760
      %v1762 = vpop.f32.mrf.mxu0
      %v1763 = vpop.f32.mrf.mxu0
      %v1764 = vadd.f32 %v1475, %v1763
      %v1765 = vpop.f32.mrf.mxu0
      %1766 = vmatprep.mubr.bf16.mxu0 %v616
      %1767 = vmatmul.mubr.bf16.gmra.mxu0 %v615
      %v1768 = vpop.f32.mrf.mxu0
      %v1769 = vadd.f32 %v1480, %v1768
      %v1770 = vpop.f32.mrf.mxu0
      %v1771 = vpop.f32.mrf.mxu0
      %v1772 = vadd.f32 %v1483, %v1771
      %v1773 = vpop.f32.mrf.mxu0
      %1774 = vmatprep.mubr.bf16.mxu0 %v624
      %1775 = vmatmul.mubr.bf16.gmra.mxu0 %v623
      %v1776 = vpop.f32.mrf.mxu0
      %v1777 = vadd.f32 %v1488, %v1776
      %v1778 = vpop.f32.mrf.mxu0
      %v1779 = vpop.f32.mrf.mxu0
      %v1780 = vadd.f32 %v1491, %v1779
      %v1781 = vpop.f32.mrf.mxu0
      %1782 = vmatprep.mubr.bf16.mxu0 %v632
      %1783 = vmatmul.mubr.bf16.gmra.mxu0 %v631
      %v1784 = vpop.f32.mrf.mxu0
      %v1785 = vadd.f32 %v1496, %v1784
      %v1786 = vpop.f32.mrf.mxu0
      %v1787 = vpop.f32.mrf.mxu0
      %v1788 = vadd.f32 %v1499, %v1787
      %v1789 = vpop.f32.mrf.mxu0
      %1790 = vmatprep.mubr.bf16.mxu0 %v640
      %1791 = vmatmul.mubr.bf16.gmra.mxu0 %v639
      %v1792 = vpop.f32.mrf.mxu0
      %v1793 = vadd.f32 %v1504, %v1792
      %v1794 = vpop.f32.mrf.mxu0
      %v1795 = vpop.f32.mrf.mxu0
      %v1796 = vadd.f32 %v1507, %v1795
      %v1797 = vpop.f32.mrf.mxu0
      %1798 = vmatprep.mubr.bf16.mxu0 %v648
      %1799 = vmatmul.mubr.bf16.gmra.mxu0 %v647
      %v1800 = vpop.f32.mrf.mxu0
      %v1801 = vadd.f32 %v1512, %v1800
      %v1802 = vpop.f32.mrf.mxu0
      %v1803 = vpop.f32.mrf.mxu0
      %v1804 = vadd.f32 %v1515, %v1803
      %v1805 = vpop.f32.mrf.mxu0
      %1806 = vmatprep.mubr.bf16.mxu0 %v656
      %1807 = vmatmul.mubr.bf16.gmra.mxu0 %v655
      %v1808 = vpop.f32.mrf.mxu0
      %v1809 = vadd.f32 %v1520, %v1808
      %v1810 = vpop.f32.mrf.mxu0
      %v1811 = vpop.f32.mrf.mxu0
      %v1812 = vadd.f32 %v1523, %v1811
      %v1813 = vpop.f32.mrf.mxu0
      %1814 = vmatprep.mubr.bf16.mxu0 %v664
      %1815 = vmatmul.mubr.bf16.gmra.mxu0 %v663
      %v1816 = vpop.f32.mrf.mxu0
      %v1817 = vadd.f32 %v1528, %v1816
      %v1818 = vpop.f32.mrf.mxu0
      %v1819 = vpop.f32.mrf.mxu0
      %v1820 = vadd.f32 %v1531, %v1819
      %v1821 = vpop.f32.mrf.mxu0
      %1822 = vmatprep.mubr.bf16.mxu0 %v672
      %1823 = vmatmul.mubr.bf16.gmra.mxu0 %v671
      %v1824 = vpop.f32.mrf.mxu0
      %v1825 = vadd.f32 %v1536, %v1824
      %v1826 = vpop.f32.mrf.mxu0
      %v1827 = vpop.f32.mrf.mxu0
      %v1828 = vadd.f32 %v1539, %v1827
      %v1829 = vpop.f32.mrf.mxu0
      %1830 = vmatprep.mubr.bf16.mxu0 %v680
      %1831 = vmatmul.mubr.bf16.gmra.mxu0 %v679
      %v1832 = vpop.f32.mrf.mxu0
      %v1833 = vadd.f32 %v1544, %v1832
      %v1834 = vpop.f32.mrf.mxu0
      %v1835 = vpop.f32.mrf.mxu0
      %v1836 = vadd.f32 %v1547, %v1835
      %v1837 = vpop.f32.mrf.mxu0
      %1838 = vmatprep.mubr.bf16.mxu0 %v688
      %1839 = vmatmul.mubr.bf16.gmra.mxu0 %v687
      %v1840 = vpop.f32.mrf.mxu0
      %v1841 = vadd.f32 %v1552, %v1840
      %v1842 = vpop.f32.mrf.mxu0
      %v1843 = vpop.f32.mrf.mxu0
      %v1844 = vadd.f32 %v1555, %v1843
      %v1845 = vpop.f32.mrf.mxu0
      %1846 = vmatprep.mubr.bf16.mxu0 %v696
      %1847 = vmatmul.mubr.bf16.gmra.mxu0 %v695
      %v1848 = vpop.f32.mrf.mxu0
      %v1849 = vadd.f32 %v1560, %v1848
      %v1850 = vpop.f32.mrf.mxu0
      %v1851 = vpop.f32.mrf.mxu0
      %v1852 = vadd.f32 %v1563, %v1851
      %v1853 = vpop.f32.mrf.mxu0
      %1854 = vmatprep.mubr.bf16.mxu0 %v704
      %1855 = vmatmul.mubr.bf16.gmra.mxu0 %v703
      %v1856 = vpop.f32.mrf.mxu0
      %v1857 = vadd.f32 %v1568, %v1856
      %v1858 = vpop.f32.mrf.mxu0
      %v1859 = vpop.f32.mrf.mxu0
      %v1860 = vadd.f32 %v1571, %v1859
      %v1861 = vpop.f32.mrf.mxu0
      %1862 = vmatprep.mubr.bf16.mxu0 %v712
      %1863 = vmatmul.mubr.bf16.gmra.mxu0 %v711
      %v1864 = vpop.f32.mrf.mxu0
      %v1865 = vadd.f32 %v1576, %v1864
      %v1866 = vpop.f32.mrf.mxu0
      %v1867 = vpop.f32.mrf.mxu0
      %v1868 = vadd.f32 %v1579, %v1867
      %v1869 = vpop.f32.mrf.mxu0
      %1870 = vmatprep.mubr.bf16.mxu0 %v720
      %1871 = vmatmul.mubr.bf16.gmra.mxu0 %v719
      %v1872 = vpop.f32.mrf.mxu0
      %v1873 = vadd.f32 %v1584, %v1872
      %v1874 = vpop.f32.mrf.mxu0
      %v1875 = vpop.f32.mrf.mxu0
      %v1876 = vadd.f32 %v1587, %v1875
      %v1877 = vpop.f32.mrf.mxu0
      %1878 = vmatprep.mubr.bf16.mxu0 %v728
      %1879 = vmatmul.mubr.bf16.gmra.mxu0 %v727
      %v1880 = vpop.f32.mrf.mxu0
      %v1881 = vadd.f32 %v1592, %v1880
      %v1882 = vpop.f32.mrf.mxu0
      %v1883 = vpop.f32.mrf.mxu0
      %v1884 = vadd.f32 %v1595, %v1883
      %v1885 = vpop.f32.mrf.mxu0
      %1886 = vmatprep.mubr.bf16.mxu0 %v736
      %1887 = vmatmul.mubr.bf16.gmra.mxu0 %v735
      %v1888 = vpop.f32.mrf.mxu0
      %v1889 = vadd.f32 %v1600, %v1888
      %v1890 = vpop.f32.mrf.mxu0
      %v1891 = vpop.f32.mrf.mxu0
      %v1892 = vadd.f32 %v1603, %v1891
      %v1893 = vpop.f32.mrf.mxu0
      %1894 = vmatprep.mubr.bf16.mxu0 %v744
      %1895 = vmatmul.mubr.bf16.gmra.mxu0 %v743
      %v1896 = vpop.f32.mrf.mxu0
      %v1897 = vadd.f32 %v1608, %v1896
      %v1898 = vpop.f32.mrf.mxu0
      %v1899 = vpop.f32.mrf.mxu0
      %v1900 = vadd.f32 %v1611, %v1899
      %v1901 = vpop.f32.mrf.mxu0
      %1902 = vmatprep.mubr.bf16.mxu0 %v752
      %1903 = vmatmul.mubr.bf16.gmra.mxu0 %v751
      %v1904 = vpop.f32.mrf.mxu0
      %v1905 = vadd.f32 %v1616, %v1904
      %v1906 = vpop.f32.mrf.mxu0
      %v1907 = vpop.f32.mrf.mxu0
      %v1908 = vadd.f32 %v1619, %v1907
      %v1909 = vpop.f32.mrf.mxu0
      %1910 = vmatprep.mubr.bf16.mxu0 %v760
      %1911 = vmatmul.mubr.bf16.gmra.mxu0 %v759
      %v1912 = vpop.f32.mrf.mxu0
      %v1913 = vadd.f32 %v1624, %v1912
      %v1914 = vpop.f32.mrf.mxu0
      %v1915 = vpop.f32.mrf.mxu0
      %v1916 = vadd.f32 %v1627, %v1915
      %v1917 = vpop.f32.mrf.mxu0
      %1918 = vdwg.mxu0
      %1919 = vmatprep.subr.bf16.mxu0 0
      %1920 = vmatpush1.bf16.msra.mxu0 %v1252
      %1921 = vmatprep.subr.bf16.mxu0 0
      %1922 = vmatpush1.bf16.msra.mxu0 %v1251
      %1923 = vmatprep.subr.bf16.mxu0 0
      %1924 = vmatpush1.bf16.msra.mxu0 %v1250
      %1925 = vmatprep.subr.bf16.mxu0 0
      %1926 = vmatpush1.bf16.msra.mxu0 %v1249
      %1927 = vmatprep.subr.bf16.mxu0 0
      %1928 = vmatpush1.bf16.msra.mxu0 %v1248
      %1929 = vmatprep.subr.bf16.mxu0 0
      %1930 = vmatpush1.bf16.msra.mxu0 %v1247
      %1931 = vmatprep.subr.bf16.mxu0 0
      %1932 = vmatpush1.bf16.msra.mxu0 %v1246
      %1933 = vmatprep.subr.bf16.mxu0 0
      %1934 = vmatpush1.bf16.msra.mxu0 %v1245
      %1935 = vmatprep.subr.bf16.mxu0 0
      %1936 = vmatpush2.bf16.msra.mxu0 %v1260
      %1937 = vmatprep.subr.bf16.mxu0 0
      %1938 = vmatpush2.bf16.msra.mxu0 %v1259
      %1939 = vmatprep.subr.bf16.mxu0 0
      %1940 = vmatpush2.bf16.msra.mxu0 %v1258
      %1941 = vmatprep.subr.bf16.mxu0 0
      %1942 = vmatpush2.bf16.msra.mxu0 %v1257
      %1943 = vmatprep.subr.bf16.mxu0 0
      %1944 = vmatpush2.bf16.msra.mxu0 %v1256
      %1945 = vmatprep.subr.bf16.mxu0 0
      %1946 = vmatpush2.bf16.msra.mxu0 %v1255
      %1947 = vmatprep.subr.bf16.mxu0 0
      %1948 = vmatpush2.bf16.msra.mxu0 %v1254
      %1949 = vmatprep.subr.bf16.mxu0 0
      %1950 = vmatpush2.bf16.msra.mxu0 %v1253
      %1951 = vmatprep.mubr.bf16.mxu0 %v514
      %1952 = vmatmul.mubr.bf16.gmra.mxu0 %v513
      %v1953 = vpop.f32.mrf.mxu0
      %v1954 = vadd.f32 %v1665, %v1953
      %v1955 = vpop.f32.mrf.mxu0
      %v1956 = vpop.f32.mrf.mxu0
      %v1957 = vadd.f32 %v1668, %v1956
      %v1958 = vpop.f32.mrf.mxu0
      %1959 = vmatprep.mubr.bf16.mxu0 %v522
      %1960 = vmatmul.mubr.bf16.gmra.mxu0 %v521
      %v1961 = vpop.f32.mrf.mxu0
      %v1962 = vadd.f32 %v1673, %v1961
      %v1963 = vpop.f32.mrf.mxu0
      %v1964 = vpop.f32.mrf.mxu0
      %v1965 = vadd.f32 %v1676, %v1964
      %v1966 = vpop.f32.mrf.mxu0
      %1967 = vmatprep.mubr.bf16.mxu0 %v530
      %1968 = vmatmul.mubr.bf16.gmra.mxu0 %v529
      %v1969 = vpop.f32.mrf.mxu0
      %v1970 = vadd.f32 %v1681, %v1969
      %v1971 = vpop.f32.mrf.mxu0
      %v1972 = vpop.f32.mrf.mxu0
      %v1973 = vadd.f32 %v1684, %v1972
      %v1974 = vpop.f32.mrf.mxu0
      %1975 = vmatprep.mubr.bf16.mxu0 %v538
      %1976 = vmatmul.mubr.bf16.gmra.mxu0 %v537
      %v1977 = vpop.f32.mrf.mxu0
      %v1978 = vadd.f32 %v1689, %v1977
      %v1979 = vpop.f32.mrf.mxu0
      %v1980 = vpop.f32.mrf.mxu0
      %v1981 = vadd.f32 %v1692, %v1980
      %v1982 = vpop.f32.mrf.mxu0
      %1983 = vmatprep.mubr.bf16.mxu0 %v546
      %1984 = vmatmul.mubr.bf16.gmra.mxu0 %v545
      %v1985 = vpop.f32.mrf.mxu0
      %v1986 = vadd.f32 %v1697, %v1985
      %v1987 = vpop.f32.mrf.mxu0
      %v1988 = vpop.f32.mrf.mxu0
      %v1989 = vadd.f32 %v1700, %v1988
      %v1990 = vpop.f32.mrf.mxu0
      %1991 = vmatprep.mubr.bf16.mxu0 %v554
      %1992 = vmatmul.mubr.bf16.gmra.mxu0 %v553
      %v1993 = vpop.f32.mrf.mxu0
      %v1994 = vadd.f32 %v1705, %v1993
      %v1995 = vpop.f32.mrf.mxu0
      %v1996 = vpop.f32.mrf.mxu0
      %v1997 = vadd.f32 %v1708, %v1996
      %v1998 = vpop.f32.mrf.mxu0
      %1999 = vmatprep.mubr.bf16.mxu0 %v562
      %2000 = vmatmul.mubr.bf16.gmra.mxu0 %v561
      %v2001 = vpop.f32.mrf.mxu0
      %v2002 = vadd.f32 %v1713, %v2001
      %v2003 = vpop.f32.mrf.mxu0
      %v2004 = vpop.f32.mrf.mxu0
      %v2005 = vadd.f32 %v1716, %v2004
      %v2006 = vpop.f32.mrf.mxu0
      %2007 = vmatprep.mubr.bf16.mxu0 %v570
      %2008 = vmatmul.mubr.bf16.gmra.mxu0 %v569
      %v2009 = vpop.f32.mrf.mxu0
      %v2010 = vadd.f32 %v1721, %v2009
      %v2011 = vpop.f32.mrf.mxu0
      %v2012 = vpop.f32.mrf.mxu0
      %v2013 = vadd.f32 %v1724, %v2012
      %v2014 = vpop.f32.mrf.mxu0
      %2015 = vmatprep.mubr.bf16.mxu0 %v578
      %2016 = vmatmul.mubr.bf16.gmra.mxu0 %v577
      %v2017 = vpop.f32.mrf.mxu0
      %v2018 = vadd.f32 %v1729, %v2017
      %v2019 = vpop.f32.mrf.mxu0
      %v2020 = vpop.f32.mrf.mxu0
      %v2021 = vadd.f32 %v1732, %v2020
      %v2022 = vpop.f32.mrf.mxu0
      %2023 = vmatprep.mubr.bf16.mxu0 %v586
      %2024 = vmatmul.mubr.bf16.gmra.mxu0 %v585
      %v2025 = vpop.f32.mrf.mxu0
      %v2026 = vadd.f32 %v1737, %v2025
      %v2027 = vpop.f32.mrf.mxu0
      %v2028 = vpop.f32.mrf.mxu0
      %v2029 = vadd.f32 %v1740, %v2028
      %v2030 = vpop.f32.mrf.mxu0
      %2031 = vmatprep.mubr.bf16.mxu0 %v594
      %2032 = vmatmul.mubr.bf16.gmra.mxu0 %v593
      %v2033 = vpop.f32.mrf.mxu0
      %v2034 = vadd.f32 %v1745, %v2033
      %v2035 = vpop.f32.mrf.mxu0
      %v2036 = vpop.f32.mrf.mxu0
      %v2037 = vadd.f32 %v1748, %v2036
      %v2038 = vpop.f32.mrf.mxu0
      %2039 = vmatprep.mubr.bf16.mxu0 %v602
      %2040 = vmatmul.mubr.bf16.gmra.mxu0 %v601
      %v2041 = vpop.f32.mrf.mxu0
      %v2042 = vadd.f32 %v1753, %v2041
      %v2043 = vpop.f32.mrf.mxu0
      %v2044 = vpop.f32.mrf.mxu0
      %v2045 = vadd.f32 %v1756, %v2044
      %v2046 = vpop.f32.mrf.mxu0
      %2047 = vmatprep.mubr.bf16.mxu0 %v610
      %2048 = vmatmul.mubr.bf16.gmra.mxu0 %v609
      %v2049 = vpop.f32.mrf.mxu0
      %v2050 = vadd.f32 %v1761, %v2049
      %v2051 = vpop.f32.mrf.mxu0
      %v2052 = vpop.f32.mrf.mxu0
      %v2053 = vadd.f32 %v1764, %v2052
      %v2054 = vpop.f32.mrf.mxu0
      %2055 = vmatprep.mubr.bf16.mxu0 %v618
      %2056 = vmatmul.mubr.bf16.gmra.mxu0 %v617
      %v2057 = vpop.f32.mrf.mxu0
      %v2058 = vadd.f32 %v1769, %v2057
      %v2059 = vpop.f32.mrf.mxu0
      %v2060 = vpop.f32.mrf.mxu0
      %v2061 = vadd.f32 %v1772, %v2060
      %v2062 = vpop.f32.mrf.mxu0
      %2063 = vmatprep.mubr.bf16.mxu0 %v626
      %2064 = vmatmul.mubr.bf16.gmra.mxu0 %v625
      %v2065 = vpop.f32.mrf.mxu0
      %v2066 = vadd.f32 %v1777, %v2065
      %v2067 = vpop.f32.mrf.mxu0
      %v2068 = vpop.f32.mrf.mxu0
      %v2069 = vadd.f32 %v1780, %v2068
      %v2070 = vpop.f32.mrf.mxu0
      %2071 = vmatprep.mubr.bf16.mxu0 %v634
      %2072 = vmatmul.mubr.bf16.gmra.mxu0 %v633
      %v2073 = vpop.f32.mrf.mxu0
      %v2074 = vadd.f32 %v1785, %v2073
      %v2075 = vpop.f32.mrf.mxu0
      %v2076 = vpop.f32.mrf.mxu0
      %v2077 = vadd.f32 %v1788, %v2076
      %v2078 = vpop.f32.mrf.mxu0
      %2079 = vmatprep.mubr.bf16.mxu0 %v642
      %2080 = vmatmul.mubr.bf16.gmra.mxu0 %v641
      %v2081 = vpop.f32.mrf.mxu0
      %v2082 = vadd.f32 %v1793, %v2081
      %v2083 = vpop.f32.mrf.mxu0
      %v2084 = vpop.f32.mrf.mxu0
      %v2085 = vadd.f32 %v1796, %v2084
      %v2086 = vpop.f32.mrf.mxu0
      %2087 = vmatprep.mubr.bf16.mxu0 %v650
      %2088 = vmatmul.mubr.bf16.gmra.mxu0 %v649
      %v2089 = vpop.f32.mrf.mxu0
      %v2090 = vadd.f32 %v1801, %v2089
      %v2091 = vpop.f32.mrf.mxu0
      %v2092 = vpop.f32.mrf.mxu0
      %v2093 = vadd.f32 %v1804, %v2092
      %v2094 = vpop.f32.mrf.mxu0
      %2095 = vmatprep.mubr.bf16.mxu0 %v658
      %2096 = vmatmul.mubr.bf16.gmra.mxu0 %v657
      %v2097 = vpop.f32.mrf.mxu0
      %v2098 = vadd.f32 %v1809, %v2097
      %v2099 = vpop.f32.mrf.mxu0
      %v2100 = vpop.f32.mrf.mxu0
      %v2101 = vadd.f32 %v1812, %v2100
      %v2102 = vpop.f32.mrf.mxu0
      %2103 = vmatprep.mubr.bf16.mxu0 %v666
      %2104 = vmatmul.mubr.bf16.gmra.mxu0 %v665
      %v2105 = vpop.f32.mrf.mxu0
      %v2106 = vadd.f32 %v1817, %v2105
      %v2107 = vpop.f32.mrf.mxu0
      %v2108 = vpop.f32.mrf.mxu0
      %v2109 = vadd.f32 %v1820, %v2108
      %v2110 = vpop.f32.mrf.mxu0
      %2111 = vmatprep.mubr.bf16.mxu0 %v674
      %2112 = vmatmul.mubr.bf16.gmra.mxu0 %v673
      %v2113 = vpop.f32.mrf.mxu0
      %v2114 = vadd.f32 %v1825, %v2113
      %v2115 = vpop.f32.mrf.mxu0
      %v2116 = vpop.f32.mrf.mxu0
      %v2117 = vadd.f32 %v1828, %v2116
      %v2118 = vpop.f32.mrf.mxu0
      %2119 = vmatprep.mubr.bf16.mxu0 %v682
      %2120 = vmatmul.mubr.bf16.gmra.mxu0 %v681
      %v2121 = vpop.f32.mrf.mxu0
      %v2122 = vadd.f32 %v1833, %v2121
      %v2123 = vpop.f32.mrf.mxu0
      %v2124 = vpop.f32.mrf.mxu0
      %v2125 = vadd.f32 %v1836, %v2124
      %v2126 = vpop.f32.mrf.mxu0
      %2127 = vmatprep.mubr.bf16.mxu0 %v690
      %2128 = vmatmul.mubr.bf16.gmra.mxu0 %v689
      %v2129 = vpop.f32.mrf.mxu0
      %v2130 = vadd.f32 %v1841, %v2129
      %v2131 = vpop.f32.mrf.mxu0
      %v2132 = vpop.f32.mrf.mxu0
      %v2133 = vadd.f32 %v1844, %v2132
      %v2134 = vpop.f32.mrf.mxu0
      %2135 = vmatprep.mubr.bf16.mxu0 %v698
      %2136 = vmatmul.mubr.bf16.gmra.mxu0 %v697
      %v2137 = vpop.f32.mrf.mxu0
      %v2138 = vadd.f32 %v1849, %v2137
      %v2139 = vpop.f32.mrf.mxu0
      %v2140 = vpop.f32.mrf.mxu0
      %v2141 = vadd.f32 %v1852, %v2140
      %v2142 = vpop.f32.mrf.mxu0
      %2143 = vmatprep.mubr.bf16.mxu0 %v706
      %2144 = vmatmul.mubr.bf16.gmra.mxu0 %v705
      %v2145 = vpop.f32.mrf.mxu0
      %v2146 = vadd.f32 %v1857, %v2145
      %v2147 = vpop.f32.mrf.mxu0
      %v2148 = vpop.f32.mrf.mxu0
      %v2149 = vadd.f32 %v1860, %v2148
      %v2150 = vpop.f32.mrf.mxu0
      %2151 = vmatprep.mubr.bf16.mxu0 %v714
      %2152 = vmatmul.mubr.bf16.gmra.mxu0 %v713
      %v2153 = vpop.f32.mrf.mxu0
      %v2154 = vadd.f32 %v1865, %v2153
      %v2155 = vpop.f32.mrf.mxu0
      %v2156 = vpop.f32.mrf.mxu0
      %v2157 = vadd.f32 %v1868, %v2156
      %v2158 = vpop.f32.mrf.mxu0
      %2159 = vmatprep.mubr.bf16.mxu0 %v722
      %2160 = vmatmul.mubr.bf16.gmra.mxu0 %v721
      %v2161 = vpop.f32.mrf.mxu0
      %v2162 = vadd.f32 %v1873, %v2161
      %v2163 = vpop.f32.mrf.mxu0
      %v2164 = vpop.f32.mrf.mxu0
      %v2165 = vadd.f32 %v1876, %v2164
      %v2166 = vpop.f32.mrf.mxu0
      %2167 = vmatprep.mubr.bf16.mxu0 %v730
      %2168 = vmatmul.mubr.bf16.gmra.mxu0 %v729
      %v2169 = vpop.f32.mrf.mxu0
      %v2170 = vadd.f32 %v1881, %v2169
      %v2171 = vpop.f32.mrf.mxu0
      %v2172 = vpop.f32.mrf.mxu0
      %v2173 = vadd.f32 %v1884, %v2172
      %v2174 = vpop.f32.mrf.mxu0
      %2175 = vmatprep.mubr.bf16.mxu0 %v738
      %2176 = vmatmul.mubr.bf16.gmra.mxu0 %v737
      %v2177 = vpop.f32.mrf.mxu0
      %v2178 = vadd.f32 %v1889, %v2177
      %v2179 = vpop.f32.mrf.mxu0
      %v2180 = vpop.f32.mrf.mxu0
      %v2181 = vadd.f32 %v1892, %v2180
      %v2182 = vpop.f32.mrf.mxu0
      %2183 = vmatprep.mubr.bf16.mxu0 %v746
      %2184 = vmatmul.mubr.bf16.gmra.mxu0 %v745
      %v2185 = vpop.f32.mrf.mxu0
      %v2186 = vadd.f32 %v1897, %v2185
      %v2187 = vpop.f32.mrf.mxu0
      %v2188 = vpop.f32.mrf.mxu0
      %v2189 = vadd.f32 %v1900, %v2188
      %v2190 = vpop.f32.mrf.mxu0
      %2191 = vmatprep.mubr.bf16.mxu0 %v754
      %2192 = vmatmul.mubr.bf16.gmra.mxu0 %v753
      %v2193 = vpop.f32.mrf.mxu0
      %v2194 = vadd.f32 %v1905, %v2193
      %v2195 = vpop.f32.mrf.mxu0
      %v2196 = vpop.f32.mrf.mxu0
      %v2197 = vadd.f32 %v1908, %v2196
      %v2198 = vpop.f32.mrf.mxu0
      %2199 = vmatprep.mubr.bf16.mxu0 %v762
      %2200 = vmatmul.mubr.bf16.gmra.mxu0 %v761
      %v2201 = vpop.f32.mrf.mxu0
      %v2202 = vadd.f32 %v1913, %v2201
      %v2203 = vpop.f32.mrf.mxu0
      %v2204 = vpop.f32.mrf.mxu0
      %v2205 = vadd.f32 %v1916, %v2204
      %v2206 = vpop.f32.mrf.mxu0
      %2207 = vdwg.mxu0
      %2208 = vmatprep.subr.bf16.mxu0 0
      %2209 = vmatpush1.bf16.msra.mxu0 %v1268
      %2210 = vmatprep.subr.bf16.mxu0 0
      %2211 = vmatpush1.bf16.msra.mxu0 %v1267
      %2212 = vmatprep.subr.bf16.mxu0 0
      %2213 = vmatpush1.bf16.msra.mxu0 %v1266
      %2214 = vmatprep.subr.bf16.mxu0 0
      %2215 = vmatpush1.bf16.msra.mxu0 %v1265
      %2216 = vmatprep.subr.bf16.mxu0 0
      %2217 = vmatpush1.bf16.msra.mxu0 %v1264
      %2218 = vmatprep.subr.bf16.mxu0 0
      %2219 = vmatpush1.bf16.msra.mxu0 %v1263
      %2220 = vmatprep.subr.bf16.mxu0 0
      %2221 = vmatpush1.bf16.msra.mxu0 %v1262
      %2222 = vmatprep.subr.bf16.mxu0 0
      %2223 = vmatpush1.bf16.msra.mxu0 %v1261
      %2224 = vmatprep.subr.bf16.mxu0 0
      %2225 = vmatpush2.bf16.msra.mxu0 %v1276
      %2226 = vmatprep.subr.bf16.mxu0 0
      %2227 = vmatpush2.bf16.msra.mxu0 %v1275
      %2228 = vmatprep.subr.bf16.mxu0 0
      %2229 = vmatpush2.bf16.msra.mxu0 %v1274
      %2230 = vmatprep.subr.bf16.mxu0 0
      %2231 = vmatpush2.bf16.msra.mxu0 %v1273
      %2232 = vmatprep.subr.bf16.mxu0 0
      %2233 = vmatpush2.bf16.msra.mxu0 %v1272
      %2234 = vmatprep.subr.bf16.mxu0 0
      %2235 = vmatpush2.bf16.msra.mxu0 %v1271
      %2236 = vmatprep.subr.bf16.mxu0 0
      %2237 = vmatpush2.bf16.msra.mxu0 %v1270
      %2238 = vmatprep.subr.bf16.mxu0 0
      %2239 = vmatpush2.bf16.msra.mxu0 %v1269
      %2240 = vmatprep.mubr.bf16.mxu0 %v516
      %2241 = vmatmul.mubr.bf16.gmra.mxu0 %v515
      %v2242 = vpop.f32.mrf.mxu0
      %v2243 = vadd.f32 %v1954, %v2242
      %v2244 = vpop.f32.mrf.mxu0
      %v2245 = vpop.f32.mrf.mxu0
      %v2246 = vadd.f32 %v1957, %v2245
      %v2247 = vpop.f32.mrf.mxu0
      %2248 = vmatprep.mubr.bf16.mxu0 %v524
      %2249 = vmatmul.mubr.bf16.gmra.mxu0 %v523
      %v2250 = vpop.f32.mrf.mxu0
      %v2251 = vadd.f32 %v1962, %v2250
      %v2252 = vpop.f32.mrf.mxu0
      %v2253 = vpop.f32.mrf.mxu0
      %v2254 = vadd.f32 %v1965, %v2253
      %v2255 = vpop.f32.mrf.mxu0
      %2256 = vmatprep.mubr.bf16.mxu0 %v532
      %2257 = vmatmul.mubr.bf16.gmra.mxu0 %v531
      %v2258 = vpop.f32.mrf.mxu0
      %v2259 = vadd.f32 %v1970, %v2258
      %v2260 = vpop.f32.mrf.mxu0
      %v2261 = vpop.f32.mrf.mxu0
      %v2262 = vadd.f32 %v1973, %v2261
      %v2263 = vpop.f32.mrf.mxu0
      %2264 = vmatprep.mubr.bf16.mxu0 %v540
      %2265 = vmatmul.mubr.bf16.gmra.mxu0 %v539
      %v2266 = vpop.f32.mrf.mxu0
      %v2267 = vadd.f32 %v1978, %v2266
      %v2268 = vpop.f32.mrf.mxu0
      %v2269 = vpop.f32.mrf.mxu0
      %v2270 = vadd.f32 %v1981, %v2269
      %v2271 = vpop.f32.mrf.mxu0
      %2272 = vmatprep.mubr.bf16.mxu0 %v548
      %2273 = vmatmul.mubr.bf16.gmra.mxu0 %v547
      %v2274 = vpop.f32.mrf.mxu0
      %v2275 = vadd.f32 %v1986, %v2274
      %v2276 = vpop.f32.mrf.mxu0
      %v2277 = vpop.f32.mrf.mxu0
      %v2278 = vadd.f32 %v1989, %v2277
      %v2279 = vpop.f32.mrf.mxu0
      %2280 = vmatprep.mubr.bf16.mxu0 %v556
      %2281 = vmatmul.mubr.bf16.gmra.mxu0 %v555
      %v2282 = vpop.f32.mrf.mxu0
      %v2283 = vadd.f32 %v1994, %v2282
      %v2284 = vpop.f32.mrf.mxu0
      %v2285 = vpop.f32.mrf.mxu0
      %v2286 = vadd.f32 %v1997, %v2285
      %v2287 = vpop.f32.mrf.mxu0
      %2288 = vmatprep.mubr.bf16.mxu0 %v564
      %2289 = vmatmul.mubr.bf16.gmra.mxu0 %v563
      %v2290 = vpop.f32.mrf.mxu0
      %v2291 = vadd.f32 %v2002, %v2290
      %v2292 = vpop.f32.mrf.mxu0
      %v2293 = vpop.f32.mrf.mxu0
      %v2294 = vadd.f32 %v2005, %v2293
      %v2295 = vpop.f32.mrf.mxu0
      %2296 = vmatprep.mubr.bf16.mxu0 %v572
      %2297 = vmatmul.mubr.bf16.gmra.mxu0 %v571
      %v2298 = vpop.f32.mrf.mxu0
      %v2299 = vadd.f32 %v2010, %v2298
      %v2300 = vpop.f32.mrf.mxu0
      %v2301 = vpop.f32.mrf.mxu0
      %v2302 = vadd.f32 %v2013, %v2301
      %v2303 = vpop.f32.mrf.mxu0
      %2304 = vmatprep.mubr.bf16.mxu0 %v580
      %2305 = vmatmul.mubr.bf16.gmra.mxu0 %v579
      %v2306 = vpop.f32.mrf.mxu0
      %v2307 = vadd.f32 %v2018, %v2306
      %v2308 = vpop.f32.mrf.mxu0
      %v2309 = vpop.f32.mrf.mxu0
      %v2310 = vadd.f32 %v2021, %v2309
      %v2311 = vpop.f32.mrf.mxu0
      %2312 = vmatprep.mubr.bf16.mxu0 %v588
      %2313 = vmatmul.mubr.bf16.gmra.mxu0 %v587
      %v2314 = vpop.f32.mrf.mxu0
      %v2315 = vadd.f32 %v2026, %v2314
      %v2316 = vpop.f32.mrf.mxu0
      %v2317 = vpop.f32.mrf.mxu0
      %v2318 = vadd.f32 %v2029, %v2317
      %v2319 = vpop.f32.mrf.mxu0
      %2320 = vmatprep.mubr.bf16.mxu0 %v596
      %2321 = vmatmul.mubr.bf16.gmra.mxu0 %v595
      %v2322 = vpop.f32.mrf.mxu0
      %v2323 = vadd.f32 %v2034, %v2322
      %v2324 = vpop.f32.mrf.mxu0
      %v2325 = vpop.f32.mrf.mxu0
      %v2326 = vadd.f32 %v2037, %v2325
      %v2327 = vpop.f32.mrf.mxu0
      %2328 = vmatprep.mubr.bf16.mxu0 %v604
      %2329 = vmatmul.mubr.bf16.gmra.mxu0 %v603
      %v2330 = vpop.f32.mrf.mxu0
      %v2331 = vadd.f32 %v2042, %v2330
      %v2332 = vpop.f32.mrf.mxu0
      %v2333 = vpop.f32.mrf.mxu0
      %v2334 = vadd.f32 %v2045, %v2333
      %v2335 = vpop.f32.mrf.mxu0
      %2336 = vmatprep.mubr.bf16.mxu0 %v612
      %2337 = vmatmul.mubr.bf16.gmra.mxu0 %v611
      %v2338 = vpop.f32.mrf.mxu0
      %v2339 = vadd.f32 %v2050, %v2338
      %v2340 = vpop.f32.mrf.mxu0
      %v2341 = vpop.f32.mrf.mxu0
      %v2342 = vadd.f32 %v2053, %v2341
      %v2343 = vpop.f32.mrf.mxu0
      %2344 = vmatprep.mubr.bf16.mxu0 %v620
      %2345 = vmatmul.mubr.bf16.gmra.mxu0 %v619
      %v2346 = vpop.f32.mrf.mxu0
      %v2347 = vadd.f32 %v2058, %v2346
      %v2348 = vpop.f32.mrf.mxu0
      %v2349 = vpop.f32.mrf.mxu0
      %v2350 = vadd.f32 %v2061, %v2349
      %v2351 = vpop.f32.mrf.mxu0
      %2352 = vmatprep.mubr.bf16.mxu0 %v628
      %2353 = vmatmul.mubr.bf16.gmra.mxu0 %v627
      %v2354 = vpop.f32.mrf.mxu0
      %v2355 = vadd.f32 %v2066, %v2354
      %v2356 = vpop.f32.mrf.mxu0
      %v2357 = vpop.f32.mrf.mxu0
      %v2358 = vadd.f32 %v2069, %v2357
      %v2359 = vpop.f32.mrf.mxu0
      %2360 = vmatprep.mubr.bf16.mxu0 %v636
      %2361 = vmatmul.mubr.bf16.gmra.mxu0 %v635
      %v2362 = vpop.f32.mrf.mxu0
      %v2363 = vadd.f32 %v2074, %v2362
      %v2364 = vpop.f32.mrf.mxu0
      %v2365 = vpop.f32.mrf.mxu0
      %v2366 = vadd.f32 %v2077, %v2365
      %v2367 = vpop.f32.mrf.mxu0
      %2368 = vmatprep.mubr.bf16.mxu0 %v644
      %2369 = vmatmul.mubr.bf16.gmra.mxu0 %v643
      %v2370 = vpop.f32.mrf.mxu0
      %v2371 = vadd.f32 %v2082, %v2370
      %v2372 = vpop.f32.mrf.mxu0
      %v2373 = vpop.f32.mrf.mxu0
      %v2374 = vadd.f32 %v2085, %v2373
      %v2375 = vpop.f32.mrf.mxu0
      %2376 = vmatprep.mubr.bf16.mxu0 %v652
      %2377 = vmatmul.mubr.bf16.gmra.mxu0 %v651
      %v2378 = vpop.f32.mrf.mxu0
      %v2379 = vadd.f32 %v2090, %v2378
      %v2380 = vpop.f32.mrf.mxu0
      %v2381 = vpop.f32.mrf.mxu0
      %v2382 = vadd.f32 %v2093, %v2381
      %v2383 = vpop.f32.mrf.mxu0
      %2384 = vmatprep.mubr.bf16.mxu0 %v660
      %2385 = vmatmul.mubr.bf16.gmra.mxu0 %v659
      %v2386 = vpop.f32.mrf.mxu0
      %v2387 = vadd.f32 %v2098, %v2386
      %v2388 = vpop.f32.mrf.mxu0
      %v2389 = vpop.f32.mrf.mxu0
      %v2390 = vadd.f32 %v2101, %v2389
      %v2391 = vpop.f32.mrf.mxu0
      %2392 = vmatprep.mubr.bf16.mxu0 %v668
      %2393 = vmatmul.mubr.bf16.gmra.mxu0 %v667
      %v2394 = vpop.f32.mrf.mxu0
      %v2395 = vadd.f32 %v2106, %v2394
      %v2396 = vpop.f32.mrf.mxu0
      %v2397 = vpop.f32.mrf.mxu0
      %v2398 = vadd.f32 %v2109, %v2397
      %v2399 = vpop.f32.mrf.mxu0
      %2400 = vmatprep.mubr.bf16.mxu0 %v676
      %2401 = vmatmul.mubr.bf16.gmra.mxu0 %v675
      %v2402 = vpop.f32.mrf.mxu0
      %v2403 = vadd.f32 %v2114, %v2402
      %v2404 = vpop.f32.mrf.mxu0
      %v2405 = vpop.f32.mrf.mxu0
      %v2406 = vadd.f32 %v2117, %v2405
      %v2407 = vpop.f32.mrf.mxu0
      %2408 = vmatprep.mubr.bf16.mxu0 %v684
      %2409 = vmatmul.mubr.bf16.gmra.mxu0 %v683
      %v2410 = vpop.f32.mrf.mxu0
      %v2411 = vadd.f32 %v2122, %v2410
      %v2412 = vpop.f32.mrf.mxu0
      %v2413 = vpop.f32.mrf.mxu0
      %v2414 = vadd.f32 %v2125, %v2413
      %v2415 = vpop.f32.mrf.mxu0
      %2416 = vmatprep.mubr.bf16.mxu0 %v692
      %2417 = vmatmul.mubr.bf16.gmra.mxu0 %v691
      %v2418 = vpop.f32.mrf.mxu0
      %v2419 = vadd.f32 %v2130, %v2418
      %v2420 = vpop.f32.mrf.mxu0
      %v2421 = vpop.f32.mrf.mxu0
      %v2422 = vadd.f32 %v2133, %v2421
      %v2423 = vpop.f32.mrf.mxu0
      %2424 = vmatprep.mubr.bf16.mxu0 %v700
      %2425 = vmatmul.mubr.bf16.gmra.mxu0 %v699
      %v2426 = vpop.f32.mrf.mxu0
      %v2427 = vadd.f32 %v2138, %v2426
      %v2428 = vpop.f32.mrf.mxu0
      %v2429 = vpop.f32.mrf.mxu0
      %v2430 = vadd.f32 %v2141, %v2429
      %v2431 = vpop.f32.mrf.mxu0
      %2432 = vmatprep.mubr.bf16.mxu0 %v708
      %2433 = vmatmul.mubr.bf16.gmra.mxu0 %v707
      %v2434 = vpop.f32.mrf.mxu0
      %v2435 = vadd.f32 %v2146, %v2434
      %v2436 = vpop.f32.mrf.mxu0
      %v2437 = vpop.f32.mrf.mxu0
      %v2438 = vadd.f32 %v2149, %v2437
      %v2439 = vpop.f32.mrf.mxu0
      %2440 = vmatprep.mubr.bf16.mxu0 %v716
      %2441 = vmatmul.mubr.bf16.gmra.mxu0 %v715
      %v2442 = vpop.f32.mrf.mxu0
      %v2443 = vadd.f32 %v2154, %v2442
      %v2444 = vpop.f32.mrf.mxu0
      %v2445 = vpop.f32.mrf.mxu0
      %v2446 = vadd.f32 %v2157, %v2445
      %v2447 = vpop.f32.mrf.mxu0
      %2448 = vmatprep.mubr.bf16.mxu0 %v724
      %2449 = vmatmul.mubr.bf16.gmra.mxu0 %v723
      %v2450 = vpop.f32.mrf.mxu0
      %v2451 = vadd.f32 %v2162, %v2450
      %v2452 = vpop.f32.mrf.mxu0
      %v2453 = vpop.f32.mrf.mxu0
      %v2454 = vadd.f32 %v2165, %v2453
      %v2455 = vpop.f32.mrf.mxu0
      %2456 = vmatprep.mubr.bf16.mxu0 %v732
      %2457 = vmatmul.mubr.bf16.gmra.mxu0 %v731
      %v2458 = vpop.f32.mrf.mxu0
      %v2459 = vadd.f32 %v2170, %v2458
      %v2460 = vpop.f32.mrf.mxu0
      %v2461 = vpop.f32.mrf.mxu0
      %v2462 = vadd.f32 %v2173, %v2461
      %v2463 = vpop.f32.mrf.mxu0
      %2464 = vmatprep.mubr.bf16.mxu0 %v740
      %2465 = vmatmul.mubr.bf16.gmra.mxu0 %v739
      %v2466 = vpop.f32.mrf.mxu0
      %v2467 = vadd.f32 %v2178, %v2466
      %v2468 = vpop.f32.mrf.mxu0
      %v2469 = vpop.f32.mrf.mxu0
      %v2470 = vadd.f32 %v2181, %v2469
      %v2471 = vpop.f32.mrf.mxu0
      %2472 = vmatprep.mubr.bf16.mxu0 %v748
      %2473 = vmatmul.mubr.bf16.gmra.mxu0 %v747
      %v2474 = vpop.f32.mrf.mxu0
      %v2475 = vadd.f32 %v2186, %v2474
      %v2476 = vpop.f32.mrf.mxu0
      %v2477 = vpop.f32.mrf.mxu0
      %v2478 = vadd.f32 %v2189, %v2477
      %v2479 = vpop.f32.mrf.mxu0
      %2480 = vmatprep.mubr.bf16.mxu0 %v756
      %2481 = vmatmul.mubr.bf16.gmra.mxu0 %v755
      %v2482 = vpop.f32.mrf.mxu0
      %v2483 = vadd.f32 %v2194, %v2482
      %v2484 = vpop.f32.mrf.mxu0
      %v2485 = vpop.f32.mrf.mxu0
      %v2486 = vadd.f32 %v2197, %v2485
      %v2487 = vpop.f32.mrf.mxu0
      %2488 = vmatprep.mubr.bf16.mxu0 %v764
      %2489 = vmatmul.mubr.bf16.gmra.mxu0 %v763
      %v2490 = vpop.f32.mrf.mxu0
      %v2491 = vadd.f32 %v2202, %v2490
      %v2492 = vpop.f32.mrf.mxu0
      %v2493 = vpop.f32.mrf.mxu0
      %v2494 = vadd.f32 %v2205, %v2493
      %v2495 = vpop.f32.mrf.mxu0
      %2496 = vdwg.mxu0
      %v2497 = vadd.f32 %v765, %v2243
      %v2498 = vadd.f32 %v766, %v2246
      %v2499 = vadd.f32 %v767, %v2251
      %v2500 = vadd.f32 %v768, %v2254
      %v2501 = vadd.f32 %v769, %v2259
      %v2502 = vadd.f32 %v770, %v2262
      %v2503 = vadd.f32 %v771, %v2267
      %v2504 = vadd.f32 %v772, %v2270
      %v2505 = vadd.f32 %v773, %v2275
      %v2506 = vadd.f32 %v774, %v2278
      %v2507 = vadd.f32 %v775, %v2283
      %v2508 = vadd.f32 %v776, %v2286
      %v2509 = vadd.f32 %v777, %v2291
      %v2510 = vadd.f32 %v778, %v2294
      %v2511 = vadd.f32 %v779, %v2299
      %v2512 = vadd.f32 %v780, %v2302
      %v2513 = vadd.f32 %v781, %v2307
      %v2514 = vadd.f32 %v782, %v2310
      %v2515 = vadd.f32 %v783, %v2315
      %v2516 = vadd.f32 %v784, %v2318
      %v2517 = vadd.f32 %v785, %v2323
      %v2518 = vadd.f32 %v786, %v2326
      %v2519 = vadd.f32 %v787, %v2331
      %v2520 = vadd.f32 %v788, %v2334
      %v2521 = vadd.f32 %v789, %v2339
      %v2522 = vadd.f32 %v790, %v2342
      %v2523 = vadd.f32 %v791, %v2347
      %v2524 = vadd.f32 %v792, %v2350
      %v2525 = vadd.f32 %v793, %v2355
      %v2526 = vadd.f32 %v794, %v2358
      %v2527 = vadd.f32 %v795, %v2363
      %v2528 = vadd.f32 %v796, %v2366
      %v2529 = vadd.f32 %v797, %v2371
      %v2530 = vadd.f32 %v798, %v2374
      %v2531 = vadd.f32 %v799, %v2379
      %v2532 = vadd.f32 %v800, %v2382
      %v2533 = vadd.f32 %v801, %v2387
      %v2534 = vadd.f32 %v802, %v2390
      %v2535 = vadd.f32 %v803, %v2395
      %v2536 = vadd.f32 %v804, %v2398
      %v2537 = vadd.f32 %v805, %v2403
      %v2538 = vadd.f32 %v806, %v2406
      %v2539 = vadd.f32 %v807, %v2411
      %v2540 = vadd.f32 %v808, %v2414
      %v2541 = vadd.f32 %v809, %v2419
      %v2542 = vadd.f32 %v810, %v2422
      %v2543 = vadd.f32 %v811, %v2427
      %v2544 = vadd.f32 %v812, %v2430
      %v2545 = vadd.f32 %v813, %v2435
      %v2546 = vadd.f32 %v814, %v2438
      %v2547 = vadd.f32 %v815, %v2443
      %v2548 = vadd.f32 %v816, %v2446
      %v2549 = vadd.f32 %v817, %v2451
      %v2550 = vadd.f32 %v818, %v2454
      %v2551 = vadd.f32 %v819, %v2459
      %v2552 = vadd.f32 %v820, %v2462
      %v2553 = vadd.f32 %v821, %v2467
      %v2554 = vadd.f32 %v822, %v2470
      %v2555 = vadd.f32 %v823, %v2475
      %v2556 = vadd.f32 %v824, %v2478
      %v2557 = vadd.f32 %v825, %v2483
      %v2558 = vadd.f32 %v826, %v2486
      %v2559 = vadd.f32 %v827, %v2491
      %v2560 = vadd.f32 %v828, %v2494
      %2561 = vst [vmem:[#allocation2] sm:$0xff] %v2497
      %2562 = vst [vmem:[#allocation2 + $0x8] sm:$0xff] %v2498
      %2563 = vst [vmem:[#allocation2 + $0x10] sm:$0xff] %v2499
      %2564 = vst [vmem:[#allocation2 + $0x18] sm:$0xff] %v2500
      %2565 = vst [vmem:[#allocation2 + $0x20] sm:$0xff] %v2501
      %2566 = vst [vmem:[#allocation2 + $0x28] sm:$0xff] %v2502
      %2567 = vst [vmem:[#allocation2 + $0x30] sm:$0xff] %v2503
      %2568 = vst [vmem:[#allocation2 + $0x38] sm:$0xff] %v2504
      %2569 = vst [vmem:[#allocation2 + $0x40] sm:$0xff] %v2505
      %2570 = vst [vmem:[#allocation2 + $0x48] sm:$0xff] %v2506
      %2571 = vst [vmem:[#allocation2 + $0x50] sm:$0xff] %v2507
      %2572 = vst [vmem:[#allocation2 + $0x58] sm:$0xff] %v2508
      %2573 = vst [vmem:[#allocation2 + $0x60] sm:$0xff] %v2509
      %2574 = vst [vmem:[#allocation2 + $0x68] sm:$0xff] %v2510
      %2575 = vst [vmem:[#allocation2 + $0x70] sm:$0xff] %v2511
      %2576 = vst [vmem:[#allocation2 + $0x78] sm:$0xff] %v2512
      %2577 = vst [vmem:[#allocation2 + $0x80] sm:$0xff] %v2513
      %2578 = vst [vmem:[#allocation2 + $0x88] sm:$0xff] %v2514
      %2579 = vst [vmem:[#allocation2 + $0x90] sm:$0xff] %v2515
      %2580 = vst [vmem:[#allocation2 + $0x98] sm:$0xff] %v2516
      %2581 = vst [vmem:[#allocation2 + $0xa0] sm:$0xff] %v2517
      %2582 = vst [vmem:[#allocation2 + $0xa8] sm:$0xff] %v2518
      %2583 = vst [vmem:[#allocation2 + $0xb0] sm:$0xff] %v2519
      %2584 = vst [vmem:[#allocation2 + $0xb8] sm:$0xff] %v2520
      %2585 = vst [vmem:[#allocation2 + $0xc0] sm:$0xff] %v2521
      %2586 = vst [vmem:[#allocation2 + $0xc8] sm:$0xff] %v2522
      %2587 = vst [vmem:[#allocation2 + $0xd0] sm:$0xff] %v2523
      %2588 = vst [vmem:[#allocation2 + $0xd8] sm:$0xff] %v2524
      %2589 = vst [vmem:[#allocation2 + $0xe0] sm:$0xff] %v2525
      %2590 = vst [vmem:[#allocation2 + $0xe8] sm:$0xff] %v2526
      %2591 = vst [vmem:[#allocation2 + $0xf0] sm:$0xff] %v2527
      %2592 = vst [vmem:[#allocation2 + $0xf8] sm:$0xff] %v2528
      %2593 = vst [vmem:[#allocation2 + $0x100] sm:$0xff] %v2529
      %2594 = vst [vmem:[#allocation2 + $0x108] sm:$0xff] %v2530
      %2595 = vst [vmem:[#allocation2 + $0x110] sm:$0xff] %v2531
      %2596 = vst [vmem:[#allocation2 + $0x118] sm:$0xff] %v2532
      %2597 = vst [vmem:[#allocation2 + $0x120] sm:$0xff] %v2533
      %2598 = vst [vmem:[#allocation2 + $0x128] sm:$0xff] %v2534
      %2599 = vst [vmem:[#allocation2 + $0x130] sm:$0xff] %v2535
      %2600 = vst [vmem:[#allocation2 + $0x138] sm:$0xff] %v2536
      %2601 = vst [vmem:[#allocation2 + $0x140] sm:$0xff] %v2537
      %2602 = vst [vmem:[#allocation2 + $0x148] sm:$0xff] %v2538
      %2603 = vst [vmem:[#allocation2 + $0x150] sm:$0xff] %v2539
      %2604 = vst [vmem:[#allocation2 + $0x158] sm:$0xff] %v2540
      %2605 = vst [vmem:[#allocation2 + $0x160] sm:$0xff] %v2541
      %2606 = vst [vmem:[#allocation2 + $0x168] sm:$0xff] %v2542
      %2607 = vst [vmem:[#allocation2 + $0x170] sm:$0xff] %v2543
      %2608 = vst [vmem:[#allocation2 + $0x178] sm:$0xff] %v2544
      %2609 = vst [vmem:[#allocation2 + $0x180] sm:$0xff] %v2545
      %2610 = vst [vmem:[#allocation2 + $0x188] sm:$0xff] %v2546
      %2611 = vst [vmem:[#allocation2 + $0x190] sm:$0xff] %v2547
      %2612 = vst [vmem:[#allocation2 + $0x198] sm:$0xff] %v2548
      %2613 = vst [vmem:[#allocation2 + $0x1a0] sm:$0xff] %v2549
      %2614 = vst [vmem:[#allocation2 + $0x1a8] sm:$0xff] %v2550
      %2615 = vst [vmem:[#allocation2 + $0x1b0] sm:$0xff] %v2551
      %2616 = vst [vmem:[#allocation2 + $0x1b8] sm:$0xff] %v2552
      %2617 = vst [vmem:[#allocation2 + $0x1c0] sm:$0xff] %v2553
      %2618 = vst [vmem:[#allocation2 + $0x1c8] sm:$0xff] %v2554
      %2619 = vst [vmem:[#allocation2 + $0x1d0] sm:$0xff] %v2555
      %2620 = vst [vmem:[#allocation2 + $0x1d8] sm:$0xff] %v2556
      %2621 = vst [vmem:[#allocation2 + $0x1e0] sm:$0xff] %v2557
      %2622 = vst [vmem:[#allocation2 + $0x1e8] sm:$0xff] %v2558
      %2623 = vst [vmem:[#allocation2 + $0x1f0] sm:$0xff] %v2559
      %2624 = vst [vmem:[#allocation2 + $0x1f8] sm:$0xff] %v2560
      // Predicated region
      $region41: #{gcn_layer_forward.4} parent=35 // pred_check
        %p2625 = pneg %p313
      $region42: #{gcn_layer_forward.4} parent=35 // pred_check_branch
        %2627 = sbr.rel (%p2625) target = $region44
      $region43: #{gcn_layer_forward.4} parent=35 // pred_region
        %v2628 = vld [vmem:[%s301] sm:$0xff]
        %v2629 = vld [vmem:[%s301 + $0x8] sm:$0xff]
        %v2630 = vld [vmem:[%s301 + $0x10] sm:$0xff]
        %v2631 = vld [vmem:[%s301 + $0x18] sm:$0xff]
        %v2632 = vld [vmem:[%s301 + $0x20] sm:$0xff]
        %v2633 = vld [vmem:[%s301 + $0x28] sm:$0xff]
        %v2634 = vld [vmem:[%s301 + $0x30] sm:$0xff]
        %v2635 = vld [vmem:[%s301 + $0x38] sm:$0xff]
        %v2636 = vld [vmem:[%s301 + $0x40] sm:$0xff]
        %v2637 = vld [vmem:[%s301 + $0x48] sm:$0xff]
        %v2638 = vld [vmem:[%s301 + $0x50] sm:$0xff]
        %v2639 = vld [vmem:[%s301 + $0x58] sm:$0xff]
        %v2640 = vld [vmem:[%s301 + $0x60] sm:$0xff]
        %v2641 = vld [vmem:[%s301 + $0x68] sm:$0xff]
        %v2642 = vld [vmem:[%s301 + $0x70] sm:$0xff]
        %v2643 = vld [vmem:[%s301 + $0x78] sm:$0xff]
        %v2644 = vld [vmem:[%s301 + $0x80] sm:$0xff]
        %v2645 = vld [vmem:[%s301 + $0x88] sm:$0xff]
        %v2646 = vld [vmem:[%s301 + $0x90] sm:$0xff]
        %v2647 = vld [vmem:[%s301 + $0x98] sm:$0xff]
        %v2648 = vld [vmem:[%s301 + $0xa0] sm:$0xff]
        %v2649 = vld [vmem:[%s301 + $0xa8] sm:$0xff]
        %v2650 = vld [vmem:[%s301 + $0xb0] sm:$0xff]
        %v2651 = vld [vmem:[%s301 + $0xb8] sm:$0xff]
        %v2652 = vld [vmem:[%s301 + $0xc0] sm:$0xff]
        %v2653 = vld [vmem:[%s301 + $0xc8] sm:$0xff]
        %v2654 = vld [vmem:[%s301 + $0xd0] sm:$0xff]
        %v2655 = vld [vmem:[%s301 + $0xd8] sm:$0xff]
        %v2656 = vld [vmem:[%s301 + $0xe0] sm:$0xff]
        %v2657 = vld [vmem:[%s301 + $0xe8] sm:$0xff]
        %v2658 = vld [vmem:[%s301 + $0xf0] sm:$0xff]
        %v2659 = vld [vmem:[%s301 + $0xf8] sm:$0xff]
        %v2660 = vld [vmem:[%s301 + $0x100] sm:$0xff]
        %v2661 = vld [vmem:[%s301 + $0x108] sm:$0xff]
        %v2662 = vld [vmem:[%s301 + $0x110] sm:$0xff]
        %v2663 = vld [vmem:[%s301 + $0x118] sm:$0xff]
        %v2664 = vld [vmem:[%s301 + $0x120] sm:$0xff]
        %v2665 = vld [vmem:[%s301 + $0x128] sm:$0xff]
        %v2666 = vld [vmem:[%s301 + $0x130] sm:$0xff]
        %v2667 = vld [vmem:[%s301 + $0x138] sm:$0xff]
        %v2668 = vld [vmem:[%s301 + $0x140] sm:$0xff]
        %v2669 = vld [vmem:[%s301 + $0x148] sm:$0xff]
        %v2670 = vld [vmem:[%s301 + $0x150] sm:$0xff]
        %v2671 = vld [vmem:[%s301 + $0x158] sm:$0xff]
        %v2672 = vld [vmem:[%s301 + $0x160] sm:$0xff]
        %v2673 = vld [vmem:[%s301 + $0x168] sm:$0xff]
        %v2674 = vld [vmem:[%s301 + $0x170] sm:$0xff]
        %v2675 = vld [vmem:[%s301 + $0x178] sm:$0xff]
        %v2676 = vld [vmem:[%s301 + $0x180] sm:$0xff]
        %v2677 = vld [vmem:[%s301 + $0x188] sm:$0xff]
        %v2678 = vld [vmem:[%s301 + $0x190] sm:$0xff]
        %v2679 = vld [vmem:[%s301 + $0x198] sm:$0xff]
        %v2680 = vld [vmem:[%s301 + $0x1a0] sm:$0xff]
        %v2681 = vld [vmem:[%s301 + $0x1a8] sm:$0xff]
        %v2682 = vld [vmem:[%s301 + $0x1b0] sm:$0xff]
        %v2683 = vld [vmem:[%s301 + $0x1b8] sm:$0xff]
        %v2684 = vld [vmem:[%s301 + $0x1c0] sm:$0xff]
        %v2685 = vld [vmem:[%s301 + $0x1c8] sm:$0xff]
        %v2686 = vld [vmem:[%s301 + $0x1d0] sm:$0xff]
        %v2687 = vld [vmem:[%s301 + $0x1d8] sm:$0xff]
        %v2688 = vld [vmem:[%s301 + $0x1e0] sm:$0xff]
        %v2689 = vld [vmem:[%s301 + $0x1e8] sm:$0xff]
        %v2690 = vld [vmem:[%s301 + $0x1f0] sm:$0xff]
        %v2691 = vld [vmem:[%s301 + $0x1f8] sm:$0xff]
        %v2692 = vld [vmem:[#allocation2] sm:$0xff]
        %v2693 = vld [vmem:[#allocation2 + $0x8] sm:$0xff]
        %v2694 = vld [vmem:[#allocation2 + $0x10] sm:$0xff]
        %v2695 = vld [vmem:[#allocation2 + $0x18] sm:$0xff]
        %v2696 = vld [vmem:[#allocation2 + $0x20] sm:$0xff]
        %v2697 = vld [vmem:[#allocation2 + $0x28] sm:$0xff]
        %v2698 = vld [vmem:[#allocation2 + $0x30] sm:$0xff]
        %v2699 = vld [vmem:[#allocation2 + $0x38] sm:$0xff]
        %v2700 = vld [vmem:[#allocation2 + $0x40] sm:$0xff]
        %v2701 = vld [vmem:[#allocation2 + $0x48] sm:$0xff]
        %v2702 = vld [vmem:[#allocation2 + $0x50] sm:$0xff]
        %v2703 = vld [vmem:[#allocation2 + $0x58] sm:$0xff]
        %v2704 = vld [vmem:[#allocation2 + $0x60] sm:$0xff]
        %v2705 = vld [vmem:[#allocation2 + $0x68] sm:$0xff]
        %v2706 = vld [vmem:[#allocation2 + $0x70] sm:$0xff]
        %v2707 = vld [vmem:[#allocation2 + $0x78] sm:$0xff]
        %v2708 = vld [vmem:[#allocation2 + $0x80] sm:$0xff]
        %v2709 = vld [vmem:[#allocation2 + $0x88] sm:$0xff]
        %v2710 = vld [vmem:[#allocation2 + $0x90] sm:$0xff]
        %v2711 = vld [vmem:[#allocation2 + $0x98] sm:$0xff]
        %v2712 = vld [vmem:[#allocation2 + $0xa0] sm:$0xff]
        %v2713 = vld [vmem:[#allocation2 + $0xa8] sm:$0xff]
        %v2714 = vld [vmem:[#allocation2 + $0xb0] sm:$0xff]
        %v2715 = vld [vmem:[#allocation2 + $0xb8] sm:$0xff]
        %v2716 = vld [vmem:[#allocation2 + $0xc0] sm:$0xff]
        %v2717 = vld [vmem:[#allocation2 + $0xc8] sm:$0xff]
        %v2718 = vld [vmem:[#allocation2 + $0xd0] sm:$0xff]
        %v2719 = vld [vmem:[#allocation2 + $0xd8] sm:$0xff]
        %v2720 = vld [vmem:[#allocation2 + $0xe0] sm:$0xff]
        %v2721 = vld [vmem:[#allocation2 + $0xe8] sm:$0xff]
        %v2722 = vld [vmem:[#allocation2 + $0xf0] sm:$0xff]
        %v2723 = vld [vmem:[#allocation2 + $0xf8] sm:$0xff]
        %v2724 = vld [vmem:[#allocation2 + $0x100] sm:$0xff]
        %v2725 = vld [vmem:[#allocation2 + $0x108] sm:$0xff]
        %v2726 = vld [vmem:[#allocation2 + $0x110] sm:$0xff]
        %v2727 = vld [vmem:[#allocation2 + $0x118] sm:$0xff]
        %v2728 = vld [vmem:[#allocation2 + $0x120] sm:$0xff]
        %v2729 = vld [vmem:[#allocation2 + $0x128] sm:$0xff]
        %v2730 = vld [vmem:[#allocation2 + $0x130] sm:$0xff]
        %v2731 = vld [vmem:[#allocation2 + $0x138] sm:$0xff]
        %v2732 = vld [vmem:[#allocation2 + $0x140] sm:$0xff]
        %v2733 = vld [vmem:[#allocation2 + $0x148] sm:$0xff]
        %v2734 = vld [vmem:[#allocation2 + $0x150] sm:$0xff]
        %v2735 = vld [vmem:[#allocation2 + $0x158] sm:$0xff]
        %v2736 = vld [vmem:[#allocation2 + $0x160] sm:$0xff]
        %v2737 = vld [vmem:[#allocation2 + $0x168] sm:$0xff]
        %v2738 = vld [vmem:[#allocation2 + $0x170] sm:$0xff]
        %v2739 = vld [vmem:[#allocation2 + $0x178] sm:$0xff]
        %v2740 = vld [vmem:[#allocation2 + $0x180] sm:$0xff]
        %v2741 = vld [vmem:[#allocation2 + $0x188] sm:$0xff]
        %v2742 = vld [vmem:[#allocation2 + $0x190] sm:$0xff]
        %v2743 = vld [vmem:[#allocation2 + $0x198] sm:$0xff]
        %v2744 = vld [vmem:[#allocation2 + $0x1a0] sm:$0xff]
        %v2745 = vld [vmem:[#allocation2 + $0x1a8] sm:$0xff]
        %v2746 = vld [vmem:[#allocation2 + $0x1b0] sm:$0xff]
        %v2747 = vld [vmem:[#allocation2 + $0x1b8] sm:$0xff]
        %v2748 = vld [vmem:[#allocation2 + $0x1c0] sm:$0xff]
        %v2749 = vld [vmem:[#allocation2 + $0x1c8] sm:$0xff]
        %v2750 = vld [vmem:[#allocation2 + $0x1d0] sm:$0xff]
        %v2751 = vld [vmem:[#allocation2 + $0x1d8] sm:$0xff]
        %v2752 = vld [vmem:[#allocation2 + $0x1e0] sm:$0xff]
        %v2753 = vld [vmem:[#allocation2 + $0x1e8] sm:$0xff]
        %v2754 = vld [vmem:[#allocation2 + $0x1f0] sm:$0xff]
        %v2755 = vld [vmem:[#allocation2 + $0x1f8] sm:$0xff]
        %2757 = vset.pattern.permute.xlu0 0
        %2758 = vperm.xlu0 %2757, %v2628
        %v2759 = vpop.permute.xlu0 %2758
        %2762 = vset.pattern.permute.xlu0 0
        %2763 = vperm.xlu0 %2762, %v2629
        %v2764 = vpop.permute.xlu0 %2763
        %2767 = vset.pattern.permute.xlu0 0
        %2768 = vperm.xlu0 %2767, %v2630
        %v2769 = vpop.permute.xlu0 %2768
        %2772 = vset.pattern.permute.xlu0 0
        %2773 = vperm.xlu0 %2772, %v2631
        %v2774 = vpop.permute.xlu0 %2773
        %2777 = vset.pattern.permute.xlu0 0
        %2778 = vperm.xlu0 %2777, %v2632
        %v2779 = vpop.permute.xlu0 %2778
        %2782 = vset.pattern.permute.xlu0 0
        %2783 = vperm.xlu0 %2782, %v2633
        %v2784 = vpop.permute.xlu0 %2783
        %2787 = vset.pattern.permute.xlu0 0
        %2788 = vperm.xlu0 %2787, %v2634
        %v2789 = vpop.permute.xlu0 %2788
        %2792 = vset.pattern.permute.xlu0 0
        %2793 = vperm.xlu0 %2792, %v2635
        %v2794 = vpop.permute.xlu0 %2793
        %2797 = vset.pattern.permute.xlu0 0
        %2798 = vperm.xlu0 %2797, %v2636
        %v2799 = vpop.permute.xlu0 %2798
        %2802 = vset.pattern.permute.xlu0 0
        %2803 = vperm.xlu0 %2802, %v2637
        %v2804 = vpop.permute.xlu0 %2803
        %2807 = vset.pattern.permute.xlu0 0
        %2808 = vperm.xlu0 %2807, %v2638
        %v2809 = vpop.permute.xlu0 %2808
        %2812 = vset.pattern.permute.xlu0 0
        %2813 = vperm.xlu0 %2812, %v2639
        %v2814 = vpop.permute.xlu0 %2813
        %2817 = vset.pattern.permute.xlu0 0
        %2818 = vperm.xlu0 %2817, %v2640
        %v2819 = vpop.permute.xlu0 %2818
        %2822 = vset.pattern.permute.xlu0 0
        %2823 = vperm.xlu0 %2822, %v2641
        %v2824 = vpop.permute.xlu0 %2823
        %2827 = vset.pattern.permute.xlu0 0
        %2828 = vperm.xlu0 %2827, %v2642
        %v2829 = vpop.permute.xlu0 %2828
        %2832 = vset.pattern.permute.xlu0 0
        %2833 = vperm.xlu0 %2832, %v2643
        %v2834 = vpop.permute.xlu0 %2833
        %2837 = vset.pattern.permute.xlu0 0
        %2838 = vperm.xlu0 %2837, %v2644
        %v2839 = vpop.permute.xlu0 %2838
        %2842 = vset.pattern.permute.xlu0 0
        %2843 = vperm.xlu0 %2842, %v2645
        %v2844 = vpop.permute.xlu0 %2843
        %2847 = vset.pattern.permute.xlu0 0
        %2848 = vperm.xlu0 %2847, %v2646
        %v2849 = vpop.permute.xlu0 %2848
        %2852 = vset.pattern.permute.xlu0 0
        %2853 = vperm.xlu0 %2852, %v2647
        %v2854 = vpop.permute.xlu0 %2853
        %2857 = vset.pattern.permute.xlu0 0
        %2858 = vperm.xlu0 %2857, %v2648
        %v2859 = vpop.permute.xlu0 %2858
        %2862 = vset.pattern.permute.xlu0 0
        %2863 = vperm.xlu0 %2862, %v2649
        %v2864 = vpop.permute.xlu0 %2863
        %2867 = vset.pattern.permute.xlu0 0
        %2868 = vperm.xlu0 %2867, %v2650
        %v2869 = vpop.permute.xlu0 %2868
        %2872 = vset.pattern.permute.xlu0 0
        %2873 = vperm.xlu0 %2872, %v2651
        %v2874 = vpop.permute.xlu0 %2873
        %2877 = vset.pattern.permute.xlu0 0
        %2878 = vperm.xlu0 %2877, %v2652
        %v2879 = vpop.permute.xlu0 %2878
        %2882 = vset.pattern.permute.xlu0 0
        %2883 = vperm.xlu0 %2882, %v2653
        %v2884 = vpop.permute.xlu0 %2883
        %2887 = vset.pattern.permute.xlu0 0
        %2888 = vperm.xlu0 %2887, %v2654
        %v2889 = vpop.permute.xlu0 %2888
        %2892 = vset.pattern.permute.xlu0 0
        %2893 = vperm.xlu0 %2892, %v2655
        %v2894 = vpop.permute.xlu0 %2893
        %2897 = vset.pattern.permute.xlu0 0
        %2898 = vperm.xlu0 %2897, %v2656
        %v2899 = vpop.permute.xlu0 %2898
        %2902 = vset.pattern.permute.xlu0 0
        %2903 = vperm.xlu0 %2902, %v2657
        %v2904 = vpop.permute.xlu0 %2903
        %2907 = vset.pattern.permute.xlu0 0
        %2908 = vperm.xlu0 %2907, %v2658
        %v2909 = vpop.permute.xlu0 %2908
        %2912 = vset.pattern.permute.xlu0 0
        %2913 = vperm.xlu0 %2912, %v2659
        %v2914 = vpop.permute.xlu0 %2913
        %2917 = vset.pattern.permute.xlu0 0
        %2918 = vperm.xlu0 %2917, %v2660
        %v2919 = vpop.permute.xlu0 %2918
        %2922 = vset.pattern.permute.xlu0 0
        %2923 = vperm.xlu0 %2922, %v2661
        %v2924 = vpop.permute.xlu0 %2923
        %2927 = vset.pattern.permute.xlu0 0
        %2928 = vperm.xlu0 %2927, %v2662
        %v2929 = vpop.permute.xlu0 %2928
        %2932 = vset.pattern.permute.xlu0 0
        %2933 = vperm.xlu0 %2932, %v2663
        %v2934 = vpop.permute.xlu0 %2933
        %2937 = vset.pattern.permute.xlu0 0
        %2938 = vperm.xlu0 %2937, %v2664
        %v2939 = vpop.permute.xlu0 %2938
        %2942 = vset.pattern.permute.xlu0 0
        %2943 = vperm.xlu0 %2942, %v2665
        %v2944 = vpop.permute.xlu0 %2943
        %2947 = vset.pattern.permute.xlu0 0
        %2948 = vperm.xlu0 %2947, %v2666
        %v2949 = vpop.permute.xlu0 %2948
        %2952 = vset.pattern.permute.xlu0 0
        %2953 = vperm.xlu0 %2952, %v2667
        %v2954 = vpop.permute.xlu0 %2953
        %2957 = vset.pattern.permute.xlu0 0
        %2958 = vperm.xlu0 %2957, %v2668
        %v2959 = vpop.permute.xlu0 %2958
        %2962 = vset.pattern.permute.xlu0 0
        %2963 = vperm.xlu0 %2962, %v2669
        %v2964 = vpop.permute.xlu0 %2963
        %2967 = vset.pattern.permute.xlu0 0
        %2968 = vperm.xlu0 %2967, %v2670
        %v2969 = vpop.permute.xlu0 %2968
        %2972 = vset.pattern.permute.xlu0 0
        %2973 = vperm.xlu0 %2972, %v2671
        %v2974 = vpop.permute.xlu0 %2973
        %2977 = vset.pattern.permute.xlu0 0
        %2978 = vperm.xlu0 %2977, %v2672
        %v2979 = vpop.permute.xlu0 %2978
        %2982 = vset.pattern.permute.xlu0 0
        %2983 = vperm.xlu0 %2982, %v2673
        %v2984 = vpop.permute.xlu0 %2983
        %2987 = vset.pattern.permute.xlu0 0
        %2988 = vperm.xlu0 %2987, %v2674
        %v2989 = vpop.permute.xlu0 %2988
        %2992 = vset.pattern.permute.xlu0 0
        %2993 = vperm.xlu0 %2992, %v2675
        %v2994 = vpop.permute.xlu0 %2993
        %2997 = vset.pattern.permute.xlu0 0
        %2998 = vperm.xlu0 %2997, %v2676
        %v2999 = vpop.permute.xlu0 %2998
        %3002 = vset.pattern.permute.xlu0 0
        %3003 = vperm.xlu0 %3002, %v2677
        %v3004 = vpop.permute.xlu0 %3003
        %3007 = vset.pattern.permute.xlu0 0
        %3008 = vperm.xlu0 %3007, %v2678
        %v3009 = vpop.permute.xlu0 %3008
        %3012 = vset.pattern.permute.xlu0 0
        %3013 = vperm.xlu0 %3012, %v2679
        %v3014 = vpop.permute.xlu0 %3013
        %3017 = vset.pattern.permute.xlu0 0
        %3018 = vperm.xlu0 %3017, %v2680
        %v3019 = vpop.permute.xlu0 %3018
        %3022 = vset.pattern.permute.xlu0 0
        %3023 = vperm.xlu0 %3022, %v2681
        %v3024 = vpop.permute.xlu0 %3023
        %3027 = vset.pattern.permute.xlu0 0
        %3028 = vperm.xlu0 %3027, %v2682
        %v3029 = vpop.permute.xlu0 %3028
        %3032 = vset.pattern.permute.xlu0 0
        %3033 = vperm.xlu0 %3032, %v2683
        %v3034 = vpop.permute.xlu0 %3033
        %3037 = vset.pattern.permute.xlu0 0
        %3038 = vperm.xlu0 %3037, %v2684
        %v3039 = vpop.permute.xlu0 %3038
        %3042 = vset.pattern.permute.xlu0 0
        %3043 = vperm.xlu0 %3042, %v2685
        %v3044 = vpop.permute.xlu0 %3043
        %3047 = vset.pattern.permute.xlu0 0
        %3048 = vperm.xlu0 %3047, %v2686
        %v3049 = vpop.permute.xlu0 %3048
        %3052 = vset.pattern.permute.xlu0 0
        %3053 = vperm.xlu0 %3052, %v2687
        %v3054 = vpop.permute.xlu0 %3053
        %3057 = vset.pattern.permute.xlu0 0
        %3058 = vperm.xlu0 %3057, %v2688
        %v3059 = vpop.permute.xlu0 %3058
        %3062 = vset.pattern.permute.xlu0 0
        %3063 = vperm.xlu0 %3062, %v2689
        %v3064 = vpop.permute.xlu0 %3063
        %3067 = vset.pattern.permute.xlu0 0
        %3068 = vperm.xlu0 %3067, %v2690
        %v3069 = vpop.permute.xlu0 %3068
        %3072 = vset.pattern.permute.xlu0 0
        %3073 = vperm.xlu0 %3072, %v2691
        %v3074 = vpop.permute.xlu0 %3073
        %v3076 = vmul.f32 %v2759, %v2692
        %v3077 = vmul.f32 %v2764, %v2693
        %v3078 = vmul.f32 %v2769, %v2694
        %v3079 = vmul.f32 %v2774, %v2695
        %v3080 = vmul.f32 %v2779, %v2696
        %v3081 = vmul.f32 %v2784, %v2697
        %v3082 = vmul.f32 %v2789, %v2698
        %v3083 = vmul.f32 %v2794, %v2699
        %v3084 = vmul.f32 %v2799, %v2700
        %v3085 = vmul.f32 %v2804, %v2701
        %v3086 = vmul.f32 %v2809, %v2702
        %v3087 = vmul.f32 %v2814, %v2703
        %v3088 = vmul.f32 %v2819, %v2704
        %v3089 = vmul.f32 %v2824, %v2705
        %v3090 = vmul.f32 %v2829, %v2706
        %v3091 = vmul.f32 %v2834, %v2707
        %v3092 = vmul.f32 %v2839, %v2708
        %v3093 = vmul.f32 %v2844, %v2709
        %v3094 = vmul.f32 %v2849, %v2710
        %v3095 = vmul.f32 %v2854, %v2711
        %v3096 = vmul.f32 %v2859, %v2712
        %v3097 = vmul.f32 %v2864, %v2713
        %v3098 = vmul.f32 %v2869, %v2714
        %v3099 = vmul.f32 %v2874, %v2715
        %v3100 = vmul.f32 %v2879, %v2716
        %v3101 = vmul.f32 %v2884, %v2717
        %v3102 = vmul.f32 %v2889, %v2718
        %v3103 = vmul.f32 %v2894, %v2719
        %v3104 = vmul.f32 %v2899, %v2720
        %v3105 = vmul.f32 %v2904, %v2721
        %v3106 = vmul.f32 %v2909, %v2722
        %v3107 = vmul.f32 %v2914, %v2723
        %v3108 = vmul.f32 %v2919, %v2724
        %v3109 = vmul.f32 %v2924, %v2725
        %v3110 = vmul.f32 %v2929, %v2726
        %v3111 = vmul.f32 %v2934, %v2727
        %v3112 = vmul.f32 %v2939, %v2728
        %v3113 = vmul.f32 %v2944, %v2729
        %v3114 = vmul.f32 %v2949, %v2730
        %v3115 = vmul.f32 %v2954, %v2731
        %v3116 = vmul.f32 %v2959, %v2732
        %v3117 = vmul.f32 %v2964, %v2733
        %v3118 = vmul.f32 %v2969, %v2734
        %v3119 = vmul.f32 %v2974, %v2735
        %v3120 = vmul.f32 %v2979, %v2736
        %v3121 = vmul.f32 %v2984, %v2737
        %v3122 = vmul.f32 %v2989, %v2738
        %v3123 = vmul.f32 %v2994, %v2739
        %v3124 = vmul.f32 %v2999, %v2740
        %v3125 = vmul.f32 %v3004, %v2741
        %v3126 = vmul.f32 %v3009, %v2742
        %v3127 = vmul.f32 %v3014, %v2743
        %v3128 = vmul.f32 %v3019, %v2744
        %v3129 = vmul.f32 %v3024, %v2745
        %v3130 = vmul.f32 %v3029, %v2746
        %v3131 = vmul.f32 %v3034, %v2747
        %v3132 = vmul.f32 %v3039, %v2748
        %v3133 = vmul.f32 %v3044, %v2749
        %v3134 = vmul.f32 %v3049, %v2750
        %v3135 = vmul.f32 %v3054, %v2751
        %v3136 = vmul.f32 %v3059, %v2752
        %v3137 = vmul.f32 %v3064, %v2753
        %v3138 = vmul.f32 %v3069, %v2754
        %v3139 = vmul.f32 %v3074, %v2755
        %v3140 = vpack.c.bf16 %v3077, %v3076
        %v3141 = vpack.c.bf16 %v3079, %v3078
        %v3142 = vpack.c.bf16 %v3081, %v3080
        %v3143 = vpack.c.bf16 %v3083, %v3082
        %v3144 = vpack.c.bf16 %v3085, %v3084
        %v3145 = vpack.c.bf16 %v3087, %v3086
        %v3146 = vpack.c.bf16 %v3089, %v3088
        %v3147 = vpack.c.bf16 %v3091, %v3090
        %v3148 = vpack.c.bf16 %v3093, %v3092
        %v3149 = vpack.c.bf16 %v3095, %v3094
        %v3150 = vpack.c.bf16 %v3097, %v3096
        %v3151 = vpack.c.bf16 %v3099, %v3098
        %v3152 = vpack.c.bf16 %v3101, %v3100
        %v3153 = vpack.c.bf16 %v3103, %v3102
        %v3154 = vpack.c.bf16 %v3105, %v3104
        %v3155 = vpack.c.bf16 %v3107, %v3106
        %v3156 = vpack.c.bf16 %v3109, %v3108
        %v3157 = vpack.c.bf16 %v3111, %v3110
        %v3158 = vpack.c.bf16 %v3113, %v3112
        %v3159 = vpack.c.bf16 %v3115, %v3114
        %v3160 = vpack.c.bf16 %v3117, %v3116
        %v3161 = vpack.c.bf16 %v3119, %v3118
        %v3162 = vpack.c.bf16 %v3121, %v3120
        %v3163 = vpack.c.bf16 %v3123, %v3122
        %v3164 = vpack.c.bf16 %v3125, %v3124
        %v3165 = vpack.c.bf16 %v3127, %v3126
        %v3166 = vpack.c.bf16 %v3129, %v3128
        %v3167 = vpack.c.bf16 %v3131, %v3130
        %v3168 = vpack.c.bf16 %v3133, %v3132
        %v3169 = vpack.c.bf16 %v3135, %v3134
        %v3170 = vpack.c.bf16 %v3137, %v3136
        %v3171 = vpack.c.bf16 %v3139, %v3138
        %v3204 = vunpack.c.l.b16 %v3140
        %v3205 = vunpack.c.h.b16 %v3140
        %v3206 = vunpack.c.l.b16 %v3141
        %v3207 = vunpack.c.h.b16 %v3141
        %v3208 = vunpack.c.l.b16 %v3142
        %v3209 = vunpack.c.h.b16 %v3142
        %v3210 = vunpack.c.l.b16 %v3143
        %v3211 = vunpack.c.h.b16 %v3143
        %v3212 = vunpack.c.l.b16 %v3144
        %v3213 = vunpack.c.h.b16 %v3144
        %v3214 = vunpack.c.l.b16 %v3145
        %v3215 = vunpack.c.h.b16 %v3145
        %v3216 = vunpack.c.l.b16 %v3146
        %v3217 = vunpack.c.h.b16 %v3146
        %v3218 = vunpack.c.l.b16 %v3147
        %v3219 = vunpack.c.h.b16 %v3147
        %v3220 = vunpack.c.l.b16 %v3148
        %v3221 = vunpack.c.h.b16 %v3148
        %v3222 = vunpack.c.l.b16 %v3149
        %v3223 = vunpack.c.h.b16 %v3149
        %v3224 = vunpack.c.l.b16 %v3150
        %v3225 = vunpack.c.h.b16 %v3150
        %v3226 = vunpack.c.l.b16 %v3151
        %v3227 = vunpack.c.h.b16 %v3151
        %v3228 = vunpack.c.l.b16 %v3152
        %v3229 = vunpack.c.h.b16 %v3152
        %v3230 = vunpack.c.l.b16 %v3153
        %v3231 = vunpack.c.h.b16 %v3153
        %v3232 = vunpack.c.l.b16 %v3154
        %v3233 = vunpack.c.h.b16 %v3154
        %v3234 = vunpack.c.l.b16 %v3155
        %v3235 = vunpack.c.h.b16 %v3155
        %v3236 = vunpack.c.l.b16 %v3156
        %v3237 = vunpack.c.h.b16 %v3156
        %v3238 = vunpack.c.l.b16 %v3157
        %v3239 = vunpack.c.h.b16 %v3157
        %v3240 = vunpack.c.l.b16 %v3158
        %v3241 = vunpack.c.h.b16 %v3158
        %v3242 = vunpack.c.l.b16 %v3159
        %v3243 = vunpack.c.h.b16 %v3159
        %v3244 = vunpack.c.l.b16 %v3160
        %v3245 = vunpack.c.h.b16 %v3160
        %v3246 = vunpack.c.l.b16 %v3161
        %v3247 = vunpack.c.h.b16 %v3161
        %v3248 = vunpack.c.l.b16 %v3162
        %v3249 = vunpack.c.h.b16 %v3162
        %v3250 = vunpack.c.l.b16 %v3163
        %v3251 = vunpack.c.h.b16 %v3163
        %v3252 = vunpack.c.l.b16 %v3164
        %v3253 = vunpack.c.h.b16 %v3164
        %v3254 = vunpack.c.l.b16 %v3165
        %v3255 = vunpack.c.h.b16 %v3165
        %v3256 = vunpack.c.l.b16 %v3166
        %v3257 = vunpack.c.h.b16 %v3166
        %v3258 = vunpack.c.l.b16 %v3167
        %v3259 = vunpack.c.h.b16 %v3167
        %v3260 = vunpack.c.l.b16 %v3168
        %v3261 = vunpack.c.h.b16 %v3168
        %v3262 = vunpack.c.l.b16 %v3169
        %v3263 = vunpack.c.h.b16 %v3169
        %v3264 = vunpack.c.l.b16 %v3170
        %v3265 = vunpack.c.h.b16 %v3170
        %v3266 = vunpack.c.l.b16 %v3171
        %v3267 = vunpack.c.h.b16 %v3171
        %v3268 = vpack.c.b16 %v3204, %v3204
        %v3269 = vpack.c.b16 %v3205, %v3205
        %v3270 = vpack.c.b16 %v3206, %v3206
        %v3271 = vpack.c.b16 %v3207, %v3207
        %v3272 = vpack.c.b16 %v3208, %v3208
        %v3273 = vpack.c.b16 %v3209, %v3209
        %v3274 = vpack.c.b16 %v3210, %v3210
        %v3275 = vpack.c.b16 %v3211, %v3211
        %v3276 = vpack.c.b16 %v3212, %v3212
        %v3277 = vpack.c.b16 %v3213, %v3213
        %v3278 = vpack.c.b16 %v3214, %v3214
        %v3279 = vpack.c.b16 %v3215, %v3215
        %v3280 = vpack.c.b16 %v3216, %v3216
        %v3281 = vpack.c.b16 %v3217, %v3217
        %v3282 = vpack.c.b16 %v3218, %v3218
        %v3283 = vpack.c.b16 %v3219, %v3219
        %v3284 = vpack.c.b16 %v3220, %v3220
        %v3285 = vpack.c.b16 %v3221, %v3221
        %v3286 = vpack.c.b16 %v3222, %v3222
        %v3287 = vpack.c.b16 %v3223, %v3223
        %v3288 = vpack.c.b16 %v3224, %v3224
        %v3289 = vpack.c.b16 %v3225, %v3225
        %v3290 = vpack.c.b16 %v3226, %v3226
        %v3291 = vpack.c.b16 %v3227, %v3227
        %v3292 = vpack.c.b16 %v3228, %v3228
        %v3293 = vpack.c.b16 %v3229, %v3229
        %v3294 = vpack.c.b16 %v3230, %v3230
        %v3295 = vpack.c.b16 %v3231, %v3231
        %v3296 = vpack.c.b16 %v3232, %v3232
        %v3297 = vpack.c.b16 %v3233, %v3233
        %v3298 = vpack.c.b16 %v3234, %v3234
        %v3299 = vpack.c.b16 %v3235, %v3235
        %v3300 = vpack.c.b16 %v3236, %v3236
        %v3301 = vpack.c.b16 %v3237, %v3237
        %v3302 = vpack.c.b16 %v3238, %v3238
        %v3303 = vpack.c.b16 %v3239, %v3239
        %v3304 = vpack.c.b16 %v3240, %v3240
        %v3305 = vpack.c.b16 %v3241, %v3241
        %v3306 = vpack.c.b16 %v3242, %v3242
        %v3307 = vpack.c.b16 %v3243, %v3243
        %v3308 = vpack.c.b16 %v3244, %v3244
        %v3309 = vpack.c.b16 %v3245, %v3245
        %v3310 = vpack.c.b16 %v3246, %v3246
        %v3311 = vpack.c.b16 %v3247, %v3247
        %v3312 = vpack.c.b16 %v3248, %v3248
        %v3313 = vpack.c.b16 %v3249, %v3249
        %v3314 = vpack.c.b16 %v3250, %v3250
        %v3315 = vpack.c.b16 %v3251, %v3251
        %v3316 = vpack.c.b16 %v3252, %v3252
        %v3317 = vpack.c.b16 %v3253, %v3253
        %v3318 = vpack.c.b16 %v3254, %v3254
        %v3319 = vpack.c.b16 %v3255, %v3255
        %v3320 = vpack.c.b16 %v3256, %v3256
        %v3321 = vpack.c.b16 %v3257, %v3257
        %v3322 = vpack.c.b16 %v3258, %v3258
        %v3323 = vpack.c.b16 %v3259, %v3259
        %v3324 = vpack.c.b16 %v3260, %v3260
        %v3325 = vpack.c.b16 %v3261, %v3261
        %v3326 = vpack.c.b16 %v3262, %v3262
        %v3327 = vpack.c.b16 %v3263, %v3263
        %v3328 = vpack.c.b16 %v3264, %v3264
        %v3329 = vpack.c.b16 %v3265, %v3265
        %v3330 = vpack.c.b16 %v3266, %v3266
        %v3331 = vpack.c.b16 %v3267, %v3267
        %3396 = vst [vmem:[%s307] sm:$0xf] %v3268
        %3397 = vst [vmem:[%s307 + $0x4] sm:$0xf] %v3269
        %3398 = vst [vmem:[%s307 + $0x8] sm:$0xf] %v3270
        %3399 = vst [vmem:[%s307 + $0xc] sm:$0xf] %v3271
        %3400 = vst [vmem:[%s307 + $0x10] sm:$0xf] %v3272
        %3401 = vst [vmem:[%s307 + $0x14] sm:$0xf] %v3273
        %3402 = vst [vmem:[%s307 + $0x18] sm:$0xf] %v3274
        %3403 = vst [vmem:[%s307 + $0x1c] sm:$0xf] %v3275
        %3404 = vst [vmem:[%s307 + $0x20] sm:$0xf] %v3276
        %3405 = vst [vmem:[%s307 + $0x24] sm:$0xf] %v3277
        %3406 = vst [vmem:[%s307 + $0x28] sm:$0xf] %v3278
        %3407 = vst [vmem:[%s307 + $0x2c] sm:$0xf] %v3279
        %3408 = vst [vmem:[%s307 + $0x30] sm:$0xf] %v3280
        %3409 = vst [vmem:[%s307 + $0x34] sm:$0xf] %v3281
        %3410 = vst [vmem:[%s307 + $0x38] sm:$0xf] %v3282
        %3411 = vst [vmem:[%s307 + $0x3c] sm:$0xf] %v3283
        %3412 = vst [vmem:[%s307 + $0x40] sm:$0xf] %v3284
        %3413 = vst [vmem:[%s307 + $0x44] sm:$0xf] %v3285
        %3414 = vst [vmem:[%s307 + $0x48] sm:$0xf] %v3286
        %3415 = vst [vmem:[%s307 + $0x4c] sm:$0xf] %v3287
        %3416 = vst [vmem:[%s307 + $0x50] sm:$0xf] %v3288
        %3417 = vst [vmem:[%s307 + $0x54] sm:$0xf] %v3289
        %3418 = vst [vmem:[%s307 + $0x58] sm:$0xf] %v3290
        %3419 = vst [vmem:[%s307 + $0x5c] sm:$0xf] %v3291
        %3420 = vst [vmem:[%s307 + $0x60] sm:$0xf] %v3292
        %3421 = vst [vmem:[%s307 + $0x64] sm:$0xf] %v3293
        %3422 = vst [vmem:[%s307 + $0x68] sm:$0xf] %v3294
        %3423 = vst [vmem:[%s307 + $0x6c] sm:$0xf] %v3295
        %3424 = vst [vmem:[%s307 + $0x70] sm:$0xf] %v3296
        %3425 = vst [vmem:[%s307 + $0x74] sm:$0xf] %v3297
        %3426 = vst [vmem:[%s307 + $0x78] sm:$0xf] %v3298
        %3427 = vst [vmem:[%s307 + $0x7c] sm:$0xf] %v3299
        %3428 = vst [vmem:[%s307 + $0x80] sm:$0xf] %v3300
        %3429 = vst [vmem:[%s307 + $0x84] sm:$0xf] %v3301
        %3430 = vst [vmem:[%s307 + $0x88] sm:$0xf] %v3302
        %3431 = vst [vmem:[%s307 + $0x8c] sm:$0xf] %v3303
        %3432 = vst [vmem:[%s307 + $0x90] sm:$0xf] %v3304
        %3433 = vst [vmem:[%s307 + $0x94] sm:$0xf] %v3305
        %3434 = vst [vmem:[%s307 + $0x98] sm:$0xf] %v3306
        %3435 = vst [vmem:[%s307 + $0x9c] sm:$0xf] %v3307
        %3436 = vst [vmem:[%s307 + $0xa0] sm:$0xf] %v3308
        %3437 = vst [vmem:[%s307 + $0xa4] sm:$0xf] %v3309
        %3438 = vst [vmem:[%s307 + $0xa8] sm:$0xf] %v3310
        %3439 = vst [vmem:[%s307 + $0xac] sm:$0xf] %v3311
        %3440 = vst [vmem:[%s307 + $0xb0] sm:$0xf] %v3312
        %3441 = vst [vmem:[%s307 + $0xb4] sm:$0xf] %v3313
        %3442 = vst [vmem:[%s307 + $0xb8] sm:$0xf] %v3314
        %3443 = vst [vmem:[%s307 + $0xbc] sm:$0xf] %v3315
        %3444 = vst [vmem:[%s307 + $0xc0] sm:$0xf] %v3316
        %3445 = vst [vmem:[%s307 + $0xc4] sm:$0xf] %v3317
        %3446 = vst [vmem:[%s307 + $0xc8] sm:$0xf] %v3318
        %3447 = vst [vmem:[%s307 + $0xcc] sm:$0xf] %v3319
        %3448 = vst [vmem:[%s307 + $0xd0] sm:$0xf] %v3320
        %3449 = vst [vmem:[%s307 + $0xd4] sm:$0xf] %v3321
        %3450 = vst [vmem:[%s307 + $0xd8] sm:$0xf] %v3322
        %3451 = vst [vmem:[%s307 + $0xdc] sm:$0xf] %v3323
        %3452 = vst [vmem:[%s307 + $0xe0] sm:$0xf] %v3324
        %3453 = vst [vmem:[%s307 + $0xe4] sm:$0xf] %v3325
        %3454 = vst [vmem:[%s307 + $0xe8] sm:$0xf] %v3326
        %3455 = vst [vmem:[%s307 + $0xec] sm:$0xf] %v3327
        %3456 = vst [vmem:[%s307 + $0xf0] sm:$0xf] %v3328
        %3457 = vst [vmem:[%s307 + $0xf4] sm:$0xf] %v3329
        %3458 = vst [vmem:[%s307 + $0xf8] sm:$0xf] %v3330
        %3459 = vst [vmem:[%s307 + $0xfc] sm:$0xf] %v3331
        %v3460 = vld [vmem:[%s3] sm:$0x1]
        %v3462 = vlaneseq
        %v3463 = vshrl.u32 %v3462, 7
        %v3464 = vsub.s32 0, %v3463
        %v3465 = vrot.slane %v3460, %v3464
        %v3467 = vsub.f32 %v3076, %v3465
        %v3468 = vsub.f32 %v3077, %v3465
        %v3469 = vsub.f32 %v3078, %v3465
        %v3470 = vsub.f32 %v3079, %v3465
        %v3471 = vsub.f32 %v3080, %v3465
        %v3472 = vsub.f32 %v3081, %v3465
        %v3473 = vsub.f32 %v3082, %v3465
        %v3474 = vsub.f32 %v3083, %v3465
        %v3475 = vsub.f32 %v3084, %v3465
        %v3476 = vsub.f32 %v3085, %v3465
        %v3477 = vsub.f32 %v3086, %v3465
        %v3478 = vsub.f32 %v3087, %v3465
        %v3479 = vsub.f32 %v3088, %v3465
        %v3480 = vsub.f32 %v3089, %v3465
        %v3481 = vsub.f32 %v3090, %v3465
        %v3482 = vsub.f32 %v3091, %v3465
        %v3483 = vsub.f32 %v3092, %v3465
        %v3484 = vsub.f32 %v3093, %v3465
        %v3485 = vsub.f32 %v3094, %v3465
        %v3486 = vsub.f32 %v3095, %v3465
        %v3487 = vsub.f32 %v3096, %v3465
        %v3488 = vsub.f32 %v3097, %v3465
        %v3489 = vsub.f32 %v3098, %v3465
        %v3490 = vsub.f32 %v3099, %v3465
        %v3491 = vsub.f32 %v3100, %v3465
        %v3492 = vsub.f32 %v3101, %v3465
        %v3493 = vsub.f32 %v3102, %v3465
        %v3494 = vsub.f32 %v3103, %v3465
        %v3495 = vsub.f32 %v3104, %v3465
        %v3496 = vsub.f32 %v3105, %v3465
        %v3497 = vsub.f32 %v3106, %v3465
        %v3498 = vsub.f32 %v3107, %v3465
        %v3499 = vsub.f32 %v3108, %v3465
        %v3500 = vsub.f32 %v3109, %v3465
        %v3501 = vsub.f32 %v3110, %v3465
        %v3502 = vsub.f32 %v3111, %v3465
        %v3503 = vsub.f32 %v3112, %v3465
        %v3504 = vsub.f32 %v3113, %v3465
        %v3505 = vsub.f32 %v3114, %v3465
        %v3506 = vsub.f32 %v3115, %v3465
        %v3507 = vsub.f32 %v3116, %v3465
        %v3508 = vsub.f32 %v3117, %v3465
        %v3509 = vsub.f32 %v3118, %v3465
        %v3510 = vsub.f32 %v3119, %v3465
        %v3511 = vsub.f32 %v3120, %v3465
        %v3512 = vsub.f32 %v3121, %v3465
        %v3513 = vsub.f32 %v3122, %v3465
        %v3514 = vsub.f32 %v3123, %v3465
        %v3515 = vsub.f32 %v3124, %v3465
        %v3516 = vsub.f32 %v3125, %v3465
        %v3517 = vsub.f32 %v3126, %v3465
        %v3518 = vsub.f32 %v3127, %v3465
        %v3519 = vsub.f32 %v3128, %v3465
        %v3520 = vsub.f32 %v3129, %v3465
        %v3521 = vsub.f32 %v3130, %v3465
        %v3522 = vsub.f32 %v3131, %v3465
        %v3523 = vsub.f32 %v3132, %v3465
        %v3524 = vsub.f32 %v3133, %v3465
        %v3525 = vsub.f32 %v3134, %v3465
        %v3526 = vsub.f32 %v3135, %v3465
        %v3527 = vsub.f32 %v3136, %v3465
        %v3528 = vsub.f32 %v3137, %v3465
        %v3529 = vsub.f32 %v3138, %v3465
        %v3530 = vsub.f32 %v3139, %v3465
        %v3531 = vmul.f32 %v3467, %v3467
        %v3532 = vmul.f32 %v3468, %v3468
        %v3533 = vmul.f32 %v3469, %v3469
        %v3534 = vmul.f32 %v3470, %v3470
        %v3535 = vmul.f32 %v3471, %v3471
        %v3536 = vmul.f32 %v3472, %v3472
        %v3537 = vmul.f32 %v3473, %v3473
        %v3538 = vmul.f32 %v3474, %v3474
        %v3539 = vmul.f32 %v3475, %v3475
        %v3540 = vmul.f32 %v3476, %v3476
        %v3541 = vmul.f32 %v3477, %v3477
        %v3542 = vmul.f32 %v3478, %v3478
        %v3543 = vmul.f32 %v3479, %v3479
        %v3544 = vmul.f32 %v3480, %v3480
        %v3545 = vmul.f32 %v3481, %v3481
        %v3546 = vmul.f32 %v3482, %v3482
        %v3547 = vmul.f32 %v3483, %v3483
        %v3548 = vmul.f32 %v3484, %v3484
        %v3549 = vmul.f32 %v3485, %v3485
        %v3550 = vmul.f32 %v3486, %v3486
        %v3551 = vmul.f32 %v3487, %v3487
        %v3552 = vmul.f32 %v3488, %v3488
        %v3553 = vmul.f32 %v3489, %v3489
        %v3554 = vmul.f32 %v3490, %v3490
        %v3555 = vmul.f32 %v3491, %v3491
        %v3556 = vmul.f32 %v3492, %v3492
        %v3557 = vmul.f32 %v3493, %v3493
        %v3558 = vmul.f32 %v3494, %v3494
        %v3559 = vmul.f32 %v3495, %v3495
        %v3560 = vmul.f32 %v3496, %v3496
        %v3561 = vmul.f32 %v3497, %v3497
        %v3562 = vmul.f32 %v3498, %v3498
        %v3563 = vmul.f32 %v3499, %v3499
        %v3564 = vmul.f32 %v3500, %v3500
        %v3565 = vmul.f32 %v3501, %v3501
        %v3566 = vmul.f32 %v3502, %v3502
        %v3567 = vmul.f32 %v3503, %v3503
        %v3568 = vmul.f32 %v3504, %v3504
        %v3569 = vmul.f32 %v3505, %v3505
        %v3570 = vmul.f32 %v3506, %v3506
        %v3571 = vmul.f32 %v3507, %v3507
        %v3572 = vmul.f32 %v3508, %v3508
        %v3573 = vmul.f32 %v3509, %v3509
        %v3574 = vmul.f32 %v3510, %v3510
        %v3575 = vmul.f32 %v3511, %v3511
        %v3576 = vmul.f32 %v3512, %v3512
        %v3577 = vmul.f32 %v3513, %v3513
        %v3578 = vmul.f32 %v3514, %v3514
        %v3579 = vmul.f32 %v3515, %v3515
        %v3580 = vmul.f32 %v3516, %v3516
        %v3581 = vmul.f32 %v3517, %v3517
        %v3582 = vmul.f32 %v3518, %v3518
        %v3583 = vmul.f32 %v3519, %v3519
        %v3584 = vmul.f32 %v3520, %v3520
        %v3585 = vmul.f32 %v3521, %v3521
        %v3586 = vmul.f32 %v3522, %v3522
        %v3587 = vmul.f32 %v3523, %v3523
        %v3588 = vmul.f32 %v3524, %v3524
        %v3589 = vmul.f32 %v3525, %v3525
        %v3590 = vmul.f32 %v3526, %v3526
        %v3591 = vmul.f32 %v3527, %v3527
        %v3592 = vmul.f32 %v3528, %v3528
        %v3593 = vmul.f32 %v3529, %v3529
        %v3594 = vmul.f32 %v3530, %v3530
        %v3595 = vadd.f32 %v3531, %v3532
        %v3596 = vadd.f32 %v3595, %v3533
        %v3597 = vadd.f32 %v3596, %v3534
        %v3598 = vadd.f32 %v3597, %v3535
        %v3599 = vadd.f32 %v3598, %v3536
        %v3600 = vadd.f32 %v3599, %v3537
        %v3601 = vadd.f32 %v3600, %v3538
        %v3602 = vadd.f32 %v3601, %v3539
        %v3603 = vadd.f32 %v3602, %v3540
        %v3604 = vadd.f32 %v3603, %v3541
        %v3605 = vadd.f32 %v3604, %v3542
        %v3606 = vadd.f32 %v3605, %v3543
        %v3607 = vadd.f32 %v3606, %v3544
        %v3608 = vadd.f32 %v3607, %v3545
        %v3609 = vadd.f32 %v3608, %v3546
        %v3610 = vadd.f32 %v3609, %v3547
        %v3611 = vadd.f32 %v3610, %v3548
        %v3612 = vadd.f32 %v3611, %v3549
        %v3613 = vadd.f32 %v3612, %v3550
        %v3614 = vadd.f32 %v3613, %v3551
        %v3615 = vadd.f32 %v3614, %v3552
        %v3616 = vadd.f32 %v3615, %v3553
        %v3617 = vadd.f32 %v3616, %v3554
        %v3618 = vadd.f32 %v3617, %v3555
        %v3619 = vadd.f32 %v3618, %v3556
        %v3620 = vadd.f32 %v3619, %v3557
        %v3621 = vadd.f32 %v3620, %v3558
        %v3622 = vadd.f32 %v3621, %v3559
        %v3623 = vadd.f32 %v3622, %v3560
        %v3624 = vadd.f32 %v3623, %v3561
        %v3625 = vadd.f32 %v3624, %v3562
        %v3626 = vadd.f32 %v3625, %v3563
        %v3627 = vadd.f32 %v3626, %v3564
        %v3628 = vadd.f32 %v3627, %v3565
        %v3629 = vadd.f32 %v3628, %v3566
        %v3630 = vadd.f32 %v3629, %v3567
        %v3631 = vadd.f32 %v3630, %v3568
        %v3632 = vadd.f32 %v3631, %v3569
        %v3633 = vadd.f32 %v3632, %v3570
        %v3634 = vadd.f32 %v3633, %v3571
        %v3635 = vadd.f32 %v3634, %v3572
        %v3636 = vadd.f32 %v3635, %v3573
        %v3637 = vadd.f32 %v3636, %v3574
        %v3638 = vadd.f32 %v3637, %v3575
        %v3639 = vadd.f32 %v3638, %v3576
        %v3640 = vadd.f32 %v3639, %v3577
        %v3641 = vadd.f32 %v3640, %v3578
        %v3642 = vadd.f32 %v3641, %v3579
        %v3643 = vadd.f32 %v3642, %v3580
        %v3644 = vadd.f32 %v3643, %v3581
        %v3645 = vadd.f32 %v3644, %v3582
        %v3646 = vadd.f32 %v3645, %v3583
        %v3647 = vadd.f32 %v3646, %v3584
        %v3648 = vadd.f32 %v3647, %v3585
        %v3649 = vadd.f32 %v3648, %v3586
        %v3650 = vadd.f32 %v3649, %v3587
        %v3651 = vadd.f32 %v3650, %v3588
        %v3652 = vadd.f32 %v3651, %v3589
        %v3653 = vadd.f32 %v3652, %v3590
        %v3654 = vadd.f32 %v3653, %v3591
        %v3655 = vadd.f32 %v3654, %v3592
        %v3656 = vadd.f32 %v3655, %v3593
        %v3657 = vadd.f32 %v3656, %v3594
        %v3658 = vrot.slane %v3657, 4
        %v3659 = vadd.f32 %v3657, %v3658
        %v3660 = vrot.slane %v3659, 2
        %v3661 = vadd.f32 %v3659, %v3660
        %v3662 = vrot.slane %v3661, 1
        %v3663 = vadd.f32 %v3661, %v3662
        %3664 = vst [vmem:[%s311] sm:$0x1] %v3663
      $region44: #{gcn_layer_forward.4} parent=35 // pred_fallthru
        _
      %s3665 = smul.u32 64, %s21
      %p3666 = scmp.lt.s32.totalorder %s3665, 127
      %s3667 = scalar_select %p3666, %s3665, 127
      %s3668 = smul.addr %s3667, 4
      %s3669 = scalar_lea.vmem %s4, %s3668
      %p3670 = scmp.lt.s32.totalorder %s21, 1
      %s3671 = scalar_select %p3670, %s21, 1
      %s3672 = scalar_lea.vmem %s5, %s3671
      // Predicated region
      $region45: #{gcn_layer_forward.4} parent=35 // pred_check
        %p3673 = pneg %p148
      $region46: #{gcn_layer_forward.4} parent=35 // pred_check_branch
        %3675 = sbr.rel (%p3673) target = $region48
      $region47: #{gcn_layer_forward.4} parent=35 // pred_region
        %s3676 = smul.u32 64, %s21
      $region48: #{gcn_layer_forward.4} parent=35 // pred_fallthru
        _
      // Predicated region
      $region49: #{gcn_layer_forward.4} parent=35 // pred_check
        %p3677 = pneg %p174
      $region50: #{gcn_layer_forward.4} parent=35 // pred_check_branch
        %3679 = sbr.rel (%p3677) target = $region52
      $region51: #{gcn_layer_forward.4} parent=35 // pred_region
        _
      $region52: #{gcn_layer_forward.4} parent=35 // pred_fallthru
        _
    $region36: #{gcn_layer_forward.4} parent=5 // pred_fallthru
      _
    %p3680 = scmp.le.s32.totalorder 2, %s12
    // Predicated region
    $region53: #{gcn_layer_forward.4} parent=5 // pred_check
      %p3681 = pneg %p3680
    $region54: #{gcn_layer_forward.4} parent=5 // pred_check_branch
      %3683 = sbr.rel (%p3681) target = $region56
    $region55: #{gcn_layer_forward.4} parent=5 // pred_region
      %s3684 = ssub.s32 %s12, 2
      // Predicated region
      $region57: #{gcn_layer_forward.4} parent=55 // pred_check
        %p3685 = pneg %p154
      $region58: #{gcn_layer_forward.4} parent=55 // pred_check_branch
        %3687 = sbr.rel (%p3685) target = $region60
      $region59: #{gcn_layer_forward.4} parent=55 // pred_region
        %s3688 = smul.u32 64, %s23
        %p3689 = scmp.lt.s32.totalorder %s3688, 127
        %s3690 = scalar_select %p3689, %s3688, 127
        %s3691 = smul.addr %s3690, 4
        %s3692 = scalar_lea.vmem %s4, %s3691
      $region60: #{gcn_layer_forward.4} parent=55 // pred_fallthru
        _
      // Predicated region
      $region61: #{gcn_layer_forward.4} parent=55 // pred_check
        %p3693 = pneg %p180
      $region62: #{gcn_layer_forward.4} parent=55 // pred_check_branch
        %3695 = sbr.rel (%p3693) target = $region64
      $region63: #{gcn_layer_forward.4} parent=55 // pred_region
        %p3696 = scmp.lt.s32.totalorder %s23, 1
        %s3697 = scalar_select %p3696, %s23, 1
        %s3698 = scalar_lea.vmem %s5, %s3697
      $region64: #{gcn_layer_forward.4} parent=55 // pred_fallthru
        _
    $region56: #{gcn_layer_forward.4} parent=5 // pred_fallthru
      _
  $region6: #{gcn_layer_forward.4} parent=0 // loop_footer
    %s16 = sadd.s32 1, %s12
  $region7: #{gcn_layer_forward.4} parent=0 // loop_footer_branch
    %11 = sbr.rel target = $region3
  $region8: #{gcn_layer_forward.4} parent=0 // loop_exit
    _

</llo_original>
